<compile_context>
chip_gen: v7x
topology: tpu7x:2x2x1
jax: 0.10.0
libtpu: 0.0.40
codegen_flags: <defaults>
</compile_context>

<pallas_src>
import functools

import jax
import jax.numpy as jnp
import numpy as np
from jax import lax
from jax.experimental import pallas as pl
from jax.experimental.pallas import tpu as pltpu


def _imagegs_kernel(k, chunk_p, coords_ref, params_ref, ct_ref, o_ref, w_ref):
    """coords_ref: (tile_p, 2)   scaled pixel coords
       params_ref: (8, G)        rows: r11, r12, bx, r21, r22, by, 0, 0 (folded affine)
       ct_ref:     (8, G)        rows 0..C-1: colors^T, row C: ones, rest zeros
       o_ref:      (C, tile_p)   transposed, lane-dense output block
       w_ref:      (tile_p, G)   VMEM scratch: per-pixel top-k weights (prob at selected, 0 else)
    """
    tile_p = coords_ref.shape[0]
    g = params_ref.shape[1]
    c_dim = o_ref.shape[0]
    n_chunks = tile_p // chunk_p

    # Low mantissa bits used to pack the lane index into the sort key.
    idx_bits = max(1, (g - 1).bit_length())
    idx_mask = (1 << idx_bits) - 1
    hi_mask = np.int32(~idx_mask)
    q_clamp = jnp.float32(1e30)  # exponent < 0xFF, so OR-ing index bits can never create inf/NaN

    # Folded per-gaussian affine coefficients (gaussian axis on the 128-wide lanes), hoisted.
    r11 = params_ref[0:1, :]
    r12 = params_ref[1:2, :]
    bx = params_ref[2:3, :]
    r21 = params_ref[3:4, :]
    r22 = params_ref[4:5, :]
    by = params_ref[5:6, :]

    # Hoisted: depends only on (chunk_p, g); JAX does not CSE broadcasted_iota.
    iota = lax.broadcasted_iota(jnp.int32, (chunk_p, g), 1)

    def chunk_body(ci, carry):
        off = pl.multiple_of(ci * chunk_p, chunk_p)
        coords = coords_ref[pl.ds(off, chunk_p), :]                     # (cp, 2)
        px = jnp.broadcast_to(coords[:, 0:1], (chunk_p, g))             # materialize once
        py = jnp.broadcast_to(coords[:, 1:2], (chunk_p, g))

        axx = r11 * px + r12 * py - bx                                  # rotated/scaled frame
        ayy = r21 * px + r22 * py - by
        q = jnp.minimum(axx * axx + ayy * ayy, q_clamp)                 # prob = exp(-0.5*q)

        # Pack lane index into low mantissa bits: one float min per top-k round yields both
        # the min-q and its argmin (smallest index wins exact ties, matching lax.top_k).
        qb = lax.bitcast_convert_type(q, jnp.int32)
        key = lax.bitcast_convert_type((qb & hi_mask) | iota, jnp.float32)

        w = jnp.zeros((chunk_p, g), jnp.float32)
        for _ in range(k):                                              # k is small & static
            mkey = jnp.min(key, axis=1, keepdims=True)                  # single lane reduction
            mbits = lax.bitcast_convert_type(mkey, jnp.int32)           # (cp, 1)
            idx = mbits & idx_mask
            q_sel = lax.bitcast_convert_type(mbits & hi_mask, jnp.float32)
            p = jnp.exp(-0.5 * q_sel)                                   # exp only on the k minima
            onehot = iota == idx                                        # (cp, G)
            w = jnp.where(onehot, p, w)                                 # disjoint lanes per round
            key = jnp.where(onehot, jnp.inf, key)
        w_ref[pl.ds(off, chunk_p), :] = w
        return carry

    lax.fori_loop(0, n_chunks, chunk_body, 0, unroll=8)

    # Single fused NT matmul per grid step: (8, G) x (tile_p, G)^T -> (8, tile_p).
    # Row c_dim of ct is ones, so that row of the result is the denominator.
    res = lax.dot_general(
        ct_ref[...], w_ref[...],
        dimension_numbers=(((1,), (1,)), ((), ())),
        preferred_element_type=jnp.float32)
    num_t = res[:c_dim, :]                                              # (C, tile_p)
    den_t = res[c_dim:c_dim + 1, :]                                     # (1, tile_p)
    # Exact divide: the approximate reciprocal (~2^-8 rel. error) broke the rtol=2e-3 check.
    o_ref[...] = num_t / (den_t + 1e-8)                                 # lane-dense store


def image_gs_forward(x, u, t, s, c, *, k, img_size, tile_p=2048, chunk_p=64):
    """x: (B, N, 2) pixel coords. Params: u (G, 2), t (G,), s (G, 2), c (G, C)."""
    B, N, _ = x.shape
    P = B * N
    G, C = c.shape
    assert k <= G
    assert C <= 7, "color table packs C channels plus a ones row into 8 sublanes"
    assert chunk_p % 8 == 0

    # Tile must be lane-dense (multiple of 128) and a whole number of chunks.
    unit = int(np.lcm(128, chunk_p))
    P_unit = ((P + unit - 1) // unit) * unit
    half = (P_unit // 2) // unit * unit
    tile_p = max(tile_p // unit, 1) * unit
    cap = half if half >= unit else P_unit     # keep >= 2 grid steps when possible (v7x: 2 TCs)
    tile_p = min(tile_p, cap)
    assert tile_p % chunk_p == 0 and tile_p % 128 == 0
    # TODO(synk): for very large G (thousands) re-derive tile_p against v7x's 64 MiB VMEM
    # (only the (tile_p, G) w scratch scales with both dims).

    scale = float(max(img_size))
    coords = (x.reshape(P, 2) / scale).astype(jnp.float32)    # scaled_coords

    # Pad the pixel axis to a multiple of tile_p (sliced off after the kernel).
    P_pad = ((P + tile_p - 1) // tile_p) * tile_p
    if P_pad != P:
        coords = jnp.pad(coords, ((0, P_pad - P), (0, 0)))

    # Fold rotation / scale / mean into 6 per-gaussian affine coefficients; pack into one
    # (8, G) block (single aligned DMA).
    u = u.astype(jnp.float32)
    t = t.astype(jnp.float32)
    s = s.astype(jnp.float32)
    cos_t = jnp.cos(t)
    sin_t = jnp.sin(t)
    isx = 1.0 / s[:, 0]
    isy = 1.0 / s[:, 1]
    zeros = jnp.zeros((G,), jnp.float32)
    params = jnp.stack([
        cos_t * isx,                                   # r11
        sin_t * isx,                                   # r12
        (cos_t * u[:, 0] + sin_t * u[:, 1]) * isx,     # bx
        -sin_t * isy,                                  # r21
        cos_t * isy,                                   # r22
        (cos_t * u[:, 1] - sin_t * u[:, 0]) * isy,     # by
        zeros, zeros], axis=0)                         # (8, G)

    # Color table transposed with an appended ones-row (denominator), padded to 8 sublanes.
    ct = jnp.zeros((8, G), jnp.float32)
    ct = ct.at[0:C].set(c.T.astype(jnp.float32))
    ct = ct.at[C].set(jnp.ones((G,), jnp.float32))

    kernel = functools.partial(_imagegs_kernel, k, chunk_p)
    out_t = pl.pallas_call(
        kernel,
        out_shape=jax.ShapeDtypeStruct((C, P_pad), jnp.float32),
        grid_spec=pltpu.PrefetchScalarGridSpec(
            num_scalar_prefetch=0,
            grid=(P_pad // tile_p,),
            in_specs=[
                pl.BlockSpec((tile_p, 2), lambda i: (i, 0)),   # pixel coords tile
                pl.BlockSpec((8, G), lambda i: (0, 0)),        # folded gaussian params
                pl.BlockSpec((8, G), lambda i: (0, 0)),        # colors^T + ones row
            ],
            out_specs=pl.BlockSpec((C, tile_p), lambda i: (0, i)),
            scratch_shapes=[pltpu.VMEM((tile_p, G), jnp.float32)],
        ),
        compiler_params=pltpu.CompilerParams(
            dimension_semantics=("parallel",)),
    )(coords, params, ct)

    return out_t[:, :P].T.reshape(B, N, C)


def image_gs_reference(x, u, t, s, c, *, k, img_size):
    """Pure-JAX reference mirroring the PyTorch forward (lax.top_k + gather)."""
    B, N, _ = x.shape
    coords = x.reshape(-1, 2) / float(max(img_size))
    dx = coords[:, None, 0] - u[None, :, 0]
    dy = coords[:, None, 1] - u[None, :, 1]
    cos = jnp.cos(t)[None, :]
    sin = jnp.sin(t)[None, :]
    drx = cos * dx + sin * dy
    dry = cos * dy - sin * dx
    inv_s = 1.0 / s
    probs = jnp.exp(-0.5 * ((drx * inv_s[None, :, 0]) ** 2 + (dry * inv_s[None, :, 1]) ** 2))
    topk_probs, topk_idx = jax.lax.top_k(probs, k)
    topk_colors = c[topk_idx]                                  # (P, k, C)
    colors = (jnp.sum(topk_colors * topk_probs[..., None], axis=1)
              / (jnp.sum(topk_probs, axis=1, keepdims=True) + 1e-8))
    return colors.reshape(B, N, -1)


if __name__ == "__main__":
    key = jax.random.PRNGKey(0)
    kB, kU, kT, kC = jax.random.split(key, 4)

    # Synthetic "image" / module config.
    H, W = 32, 32                     # img_size
    img_size = (H, W)
    C = 3                             # image channels
    G = 128                           # num gaussians ("num" in __init__)
    K = 4                             # top-k
    B, N = 2, 512                     # query batch: x is (B, N, 2) -> P = 1024 (grid of 2)

    # Deterministic synthetic parameters (the module samples these from the image/gradients).
    u = jax.random.uniform(kU, (G, 2), jnp.float32)                       # already-scaled means
    t = jax.random.uniform(kT, (G,), jnp.float32, minval=-0.5, maxval=0.5)
    s = jnp.ones((G, 2), jnp.float32) * 2.0 / max(img_size)               # per __init__
    c = jax.random.uniform(kC, (G, C), jnp.float32)                       # image-sampled colors

    # Input pixel coordinates.
    x = jax.random.uniform(kB, (B, N, 2), jnp.float32, minval=0.0, maxval=float(H))

    out = image_gs_forward(x, u, t, s, c, k=K, img_size=img_size)
    out = jax.block_until_ready(out)

    ref = image_gs_reference(x, u, t, s, c, k=K, img_size=img_size)
    np.testing.assert_allclose(np.asarray(out), np.asarray(ref), rtol=2e-3, atol=2e-4)

    print("KERNEL_OK")
</pallas_src>

<mosaic_0001>
module attributes {stable_mosaic.version = 11 : i64} {
  func.func @_imagegs_kernel(%arg0: i32, %arg1: memref<512x2xf32, #tpu.memory_space<vmem>>, %arg2: memref<8x128xf32, #tpu.memory_space<vmem>>, %arg3: memref<8x128xf32, #tpu.memory_space<vmem>>, %arg4: memref<3x512xf32, #tpu.memory_space<vmem>>, %arg5: memref<512x128xf32, #tpu.memory_space<vmem>>) attributes {dimension_semantics = [#tpu.dimension_semantics<parallel>], iteration_bounds = array<i64: 2>, scalar_prefetch = 0 : i64, scratch_operands = 1 : i64, tpu.core_type = #tpu.core_type<tc>, window_params = [{transform_indices = @transform_0, window_bounds = array<i64: 512, 2>}, {pipeline_mode = #tpu.pipeline_mode<synchronous>, transform_indices = @transform_1, window_bounds = array<i64: 8, 128>}, {pipeline_mode = #tpu.pipeline_mode<synchronous>, transform_indices = @transform_2, window_bounds = array<i64: 8, 128>}, {transform_indices = @transform_3, window_bounds = array<i64: 3, 512>}]} {
    %c0 = arith.constant 0 : index
    %c0_0 = arith.constant 0 : index
    %0 = vector.load %arg2[%c0, %c0_0] : memref<8x128xf32, #tpu.memory_space<vmem>>, vector<1x128xf32>
    %c1 = arith.constant 1 : index
    %c0_1 = arith.constant 0 : index
    %1 = vector.load %arg2[%c1, %c0_1] : memref<8x128xf32, #tpu.memory_space<vmem>>, vector<1x128xf32>
    %c2 = arith.constant 2 : index
    %c0_2 = arith.constant 0 : index
    %2 = vector.load %arg2[%c2, %c0_2] : memref<8x128xf32, #tpu.memory_space<vmem>>, vector<1x128xf32>
    %c3 = arith.constant 3 : index
    %c0_3 = arith.constant 0 : index
    %3 = vector.load %arg2[%c3, %c0_3] : memref<8x128xf32, #tpu.memory_space<vmem>>, vector<1x128xf32>
    %c4 = arith.constant 4 : index
    %c0_4 = arith.constant 0 : index
    %4 = vector.load %arg2[%c4, %c0_4] : memref<8x128xf32, #tpu.memory_space<vmem>>, vector<1x128xf32>
    %c5 = arith.constant 5 : index
    %c0_5 = arith.constant 0 : index
    %5 = vector.load %arg2[%c5, %c0_5] : memref<8x128xf32, #tpu.memory_space<vmem>>, vector<1x128xf32>
    %6 = tpu.iota {dimensions = array<i32: 1>} : vector<64x128xi32>
    %cst = arith.constant 1.000000e+30 : f32
    %c0_i32 = arith.constant 0 : i32
    %c64_i32 = arith.constant 64 : i32
    %7 = arith.muli %c0_i32, %c64_i32 : i32
    %8 = tpu.assume_multiple %7, 64 : i32
    %9 = arith.index_cast %8 : i32 to index
    %c0_6 = arith.constant 0 : index
    %10 = vector.load %arg1[%9, %c0_6] : memref<512x2xf32, #tpu.memory_space<vmem>>, vector<64x2xf32>
    %11 = vector.extract_strided_slice %10 {offsets = [0, 0], sizes = [64, 1], strides = [1, 1]} : vector<64x2xf32> to vector<64x1xf32>
    %12 = vector.shape_cast %11 : vector<64x1xf32> to vector<64x1xf32>
    %13 = vector.broadcast %12 : vector<64x1xf32> to vector<64x128xf32>
    %14 = vector.extract_strided_slice %10 {offsets = [0, 1], sizes = [64, 1], strides = [1, 1]} : vector<64x2xf32> to vector<64x1xf32>
    %15 = vector.shape_cast %14 : vector<64x1xf32> to vector<64x1xf32>
    %16 = vector.broadcast %15 : vector<64x1xf32> to vector<64x128xf32>
    %17 = vector.broadcast %0 : vector<1x128xf32> to vector<64x128xf32>
    %18 = arith.mulf %17, %13 : vector<64x128xf32>
    %19 = vector.broadcast %1 : vector<1x128xf32> to vector<64x128xf32>
    %20 = arith.mulf %19, %16 : vector<64x128xf32>
    %21 = arith.addf %18, %20 : vector<64x128xf32>
    %22 = vector.broadcast %2 : vector<1x128xf32> to vector<64x128xf32>
    %23 = arith.subf %21, %22 : vector<64x128xf32>
    %24 = vector.broadcast %3 : vector<1x128xf32> to vector<64x128xf32>
    %25 = arith.mulf %24, %13 : vector<64x128xf32>
    %26 = vector.broadcast %4 : vector<1x128xf32> to vector<64x128xf32>
    %27 = arith.mulf %26, %16 : vector<64x128xf32>
    %28 = arith.addf %25, %27 : vector<64x128xf32>
    %29 = vector.broadcast %5 : vector<1x128xf32> to vector<64x128xf32>
    %30 = arith.subf %28, %29 : vector<64x128xf32>
    %31 = arith.mulf %23, %23 : vector<64x128xf32>
    %32 = arith.mulf %30, %30 : vector<64x128xf32>
    %33 = arith.addf %31, %32 : vector<64x128xf32>
    %34 = vector.broadcast %cst : f32 to vector<64x128xf32>
    %35 = arith.minimumf %33, %34 : vector<64x128xf32>
    %36 = tpu.bitcast %35 : vector<64x128xf32> -> vector<64x128xi32>
    %c-128_i32 = arith.constant -128 : i32
    %37 = vector.broadcast %c-128_i32 : i32 to vector<64x128xi32>
    %38 = arith.andi %36, %37 : vector<64x128xi32>
    %39 = arith.ori %38, %6 : vector<64x128xi32>
    %40 = tpu.bitcast %39 : vector<64x128xi32> -> vector<64x128xf32>
    %cst_7 = arith.constant 0.000000e+00 : f32
    %41 = vector.broadcast %cst_7 : f32 to vector<64x128xf32>
    %cst_8 = arith.constant dense<0x7F800000> : vector<64xf32>
    %42 = vector.multi_reduction <minimumf>, %40, %cst_8 [1] : vector<64x128xf32> to vector<64xf32>
    %43 = vector.shape_cast %42 : vector<64xf32> to vector<64x1xf32>
    %44 = tpu.bitcast %43 : vector<64x1xf32> -> vector<64x1xi32>
    %c127_i32 = arith.constant 127 : i32
    %45 = vector.broadcast %c127_i32 : i32 to vector<64x1xi32>
    %46 = arith.andi %44, %45 : vector<64x1xi32>
    %c-128_i32_9 = arith.constant -128 : i32
    %47 = vector.broadcast %c-128_i32_9 : i32 to vector<64x1xi32>
    %48 = arith.andi %44, %47 : vector<64x1xi32>
    %49 = tpu.bitcast %48 : vector<64x1xi32> -> vector<64x1xf32>
    %cst_10 = arith.constant -5.000000e-01 : f32
    %50 = vector.broadcast %cst_10 : f32 to vector<64x1xf32>
    %51 = arith.mulf %50, %49 : vector<64x1xf32>
    %52 = math.exp %51 : vector<64x1xf32>
    %53 = vector.broadcast %46 : vector<64x1xi32> to vector<64x128xi32>
    %54 = arith.cmpi eq, %6, %53 : vector<64x128xi32>
    %55 = vector.shape_cast %52 : vector<64x1xf32> to vector<64x1xf32>
    %56 = vector.broadcast %55 : vector<64x1xf32> to vector<64x128xf32>
    %57 = arith.select %54, %56, %41 : vector<64x128xi1>, vector<64x128xf32>
    %cst_11 = arith.constant 0x7F800000 : f32
    %58 = vector.broadcast %cst_11 : f32 to vector<64x128xf32>
    %59 = arith.select %54, %58, %40 : vector<64x128xi1>, vector<64x128xf32>
    %cst_12 = arith.constant dense<0x7F800000> : vector<64xf32>
    %60 = vector.multi_reduction <minimumf>, %59, %cst_12 [1] : vector<64x128xf32> to vector<64xf32>
    %61 = vector.shape_cast %60 : vector<64xf32> to vector<64x1xf32>
    %62 = tpu.bitcast %61 : vector<64x1xf32> -> vector<64x1xi32>
    %c127_i32_13 = arith.constant 127 : i32
    %63 = vector.broadcast %c127_i32_13 : i32 to vector<64x1xi32>
    %64 = arith.andi %62, %63 : vector<64x1xi32>
    %c-128_i32_14 = arith.constant -128 : i32
    %65 = vector.broadcast %c-128_i32_14 : i32 to vector<64x1xi32>
    %66 = arith.andi %62, %65 : vector<64x1xi32>
    %67 = tpu.bitcast %66 : vector<64x1xi32> -> vector<64x1xf32>
    %cst_15 = arith.constant -5.000000e-01 : f32
    %68 = vector.broadcast %cst_15 : f32 to vector<64x1xf32>
    %69 = arith.mulf %68, %67 : vector<64x1xf32>
    %70 = math.exp %69 : vector<64x1xf32>
    %71 = vector.broadcast %64 : vector<64x1xi32> to vector<64x128xi32>
    %72 = arith.cmpi eq, %6, %71 : vector<64x128xi32>
    %73 = vector.shape_cast %70 : vector<64x1xf32> to vector<64x1xf32>
    %74 = vector.broadcast %73 : vector<64x1xf32> to vector<64x128xf32>
    %75 = arith.select %72, %74, %57 : vector<64x128xi1>, vector<64x128xf32>
    %cst_16 = arith.constant 0x7F800000 : f32
    %76 = vector.broadcast %cst_16 : f32 to vector<64x128xf32>
    %77 = arith.select %72, %76, %59 : vector<64x128xi1>, vector<64x128xf32>
    %cst_17 = arith.constant dense<0x7F800000> : vector<64xf32>
    %78 = vector.multi_reduction <minimumf>, %77, %cst_17 [1] : vector<64x128xf32> to vector<64xf32>
    %79 = vector.shape_cast %78 : vector<64xf32> to vector<64x1xf32>
    %80 = tpu.bitcast %79 : vector<64x1xf32> -> vector<64x1xi32>
    %c127_i32_18 = arith.constant 127 : i32
    %81 = vector.broadcast %c127_i32_18 : i32 to vector<64x1xi32>
    %82 = arith.andi %80, %81 : vector<64x1xi32>
    %c-128_i32_19 = arith.constant -128 : i32
    %83 = vector.broadcast %c-128_i32_19 : i32 to vector<64x1xi32>
    %84 = arith.andi %80, %83 : vector<64x1xi32>
    %85 = tpu.bitcast %84 : vector<64x1xi32> -> vector<64x1xf32>
    %cst_20 = arith.constant -5.000000e-01 : f32
    %86 = vector.broadcast %cst_20 : f32 to vector<64x1xf32>
    %87 = arith.mulf %86, %85 : vector<64x1xf32>
    %88 = math.exp %87 : vector<64x1xf32>
    %89 = vector.broadcast %82 : vector<64x1xi32> to vector<64x128xi32>
    %90 = arith.cmpi eq, %6, %89 : vector<64x128xi32>
    %91 = vector.shape_cast %88 : vector<64x1xf32> to vector<64x1xf32>
    %92 = vector.broadcast %91 : vector<64x1xf32> to vector<64x128xf32>
    %93 = arith.select %90, %92, %75 : vector<64x128xi1>, vector<64x128xf32>
    %cst_21 = arith.constant 0x7F800000 : f32
    %94 = vector.broadcast %cst_21 : f32 to vector<64x128xf32>
    %95 = arith.select %90, %94, %77 : vector<64x128xi1>, vector<64x128xf32>
    %cst_22 = arith.constant dense<0x7F800000> : vector<64xf32>
    %96 = vector.multi_reduction <minimumf>, %95, %cst_22 [1] : vector<64x128xf32> to vector<64xf32>
    %97 = vector.shape_cast %96 : vector<64xf32> to vector<64x1xf32>
    %98 = tpu.bitcast %97 : vector<64x1xf32> -> vector<64x1xi32>
    %c127_i32_23 = arith.constant 127 : i32
    %99 = vector.broadcast %c127_i32_23 : i32 to vector<64x1xi32>
    %100 = arith.andi %98, %99 : vector<64x1xi32>
    %c-128_i32_24 = arith.constant -128 : i32
    %101 = vector.broadcast %c-128_i32_24 : i32 to vector<64x1xi32>
    %102 = arith.andi %98, %101 : vector<64x1xi32>
    %103 = tpu.bitcast %102 : vector<64x1xi32> -> vector<64x1xf32>
    %cst_25 = arith.constant -5.000000e-01 : f32
    %104 = vector.broadcast %cst_25 : f32 to vector<64x1xf32>
    %105 = arith.mulf %104, %103 : vector<64x1xf32>
    %106 = math.exp %105 : vector<64x1xf32>
    %107 = vector.broadcast %100 : vector<64x1xi32> to vector<64x128xi32>
    %108 = arith.cmpi eq, %6, %107 : vector<64x128xi32>
    %109 = vector.shape_cast %106 : vector<64x1xf32> to vector<64x1xf32>
    %110 = vector.broadcast %109 : vector<64x1xf32> to vector<64x128xf32>
    %111 = arith.select %108, %110, %93 : vector<64x128xi1>, vector<64x128xf32>
    %112 = arith.index_cast %8 : i32 to index
    %c0_26 = arith.constant 0 : index
    %113 = vector.load %arg5[%112, %c0_26] : memref<512x128xf32, #tpu.memory_space<vmem>>, vector<64x128xf32>
    tpu.vector_store %arg5[%112, %c0_26], %111 {strides = array<i32>} : memref<512x128xf32, #tpu.memory_space<vmem>>, vector<64x128xf32>,
    %c1_i32 = arith.constant 1 : i32
    %c64_i32_27 = arith.constant 64 : i32
    %114 = arith.muli %c1_i32, %c64_i32_27 : i32
    %115 = tpu.assume_multiple %114, 64 : i32
    %116 = arith.index_cast %115 : i32 to index
    %c0_28 = arith.constant 0 : index
    %117 = vector.load %arg1[%116, %c0_28] : memref<512x2xf32, #tpu.memory_space<vmem>>, vector<64x2xf32>
    %118 = vector.extract_strided_slice %117 {offsets = [0, 0], sizes = [64, 1], strides = [1, 1]} : vector<64x2xf32> to vector<64x1xf32>
    %119 = vector.shape_cast %118 : vector<64x1xf32> to vector<64x1xf32>
    %120 = vector.broadcast %119 : vector<64x1xf32> to vector<64x128xf32>
    %121 = vector.extract_strided_slice %117 {offsets = [0, 1], sizes = [64, 1], strides = [1, 1]} : vector<64x2xf32> to vector<64x1xf32>
    %122 = vector.shape_cast %121 : vector<64x1xf32> to vector<64x1xf32>
    %123 = vector.broadcast %122 : vector<64x1xf32> to vector<64x128xf32>
    %124 = vector.broadcast %0 : vector<1x128xf32> to vector<64x128xf32>
    %125 = arith.mulf %124, %120 : vector<64x128xf32>
    %126 = vector.broadcast %1 : vector<1x128xf32> to vector<64x128xf32>
    %127 = arith.mulf %126, %123 : vector<64x128xf32>
    %128 = arith.addf %125, %127 : vector<64x128xf32>
    %129 = vector.broadcast %2 : vector<1x128xf32> to vector<64x128xf32>
    %130 = arith.subf %128, %129 : vector<64x128xf32>
    %131 = vector.broadcast %3 : vector<1x128xf32> to vector<64x128xf32>
    %132 = arith.mulf %131, %120 : vector<64x128xf32>
    %133 = vector.broadcast %4 : vector<1x128xf32> to vector<64x128xf32>
    %134 = arith.mulf %133, %123 : vector<64x128xf32>
    %135 = arith.addf %132, %134 : vector<64x128xf32>
    %136 = vector.broadcast %5 : vector<1x128xf32> to vector<64x128xf32>
    %137 = arith.subf %135, %136 : vector<64x128xf32>
    %138 = arith.mulf %130, %130 : vector<64x128xf32>
    %139 = arith.mulf %137, %137 : vector<64x128xf32>
    %140 = arith.addf %138, %139 : vector<64x128xf32>
    %141 = vector.broadcast %cst : f32 to vector<64x128xf32>
    %142 = arith.minimumf %140, %141 : vector<64x128xf32>
    %143 = tpu.bitcast %142 : vector<64x128xf32> -> vector<64x128xi32>
    %c-128_i32_29 = arith.constant -128 : i32
    %144 = vector.broadcast %c-128_i32_29 : i32 to vector<64x128xi32>
    %145 = arith.andi %143, %144 : vector<64x128xi32>
    %146 = arith.ori %145, %6 : vector<64x128xi32>
    %147 = tpu.bitcast %146 : vector<64x128xi32> -> vector<64x128xf32>
    %cst_30 = arith.constant 0.000000e+00 : f32
    %148 = vector.broadcast %cst_30 : f32 to vector<64x128xf32>
    %cst_31 = arith.constant dense<0x7F800000> : vector<64xf32>
    %149 = vector.multi_reduction <minimumf>, %147, %cst_31 [1] : vector<64x128xf32> to vector<64xf32>
    %150 = vector.shape_cast %149 : vector<64xf32> to vector<64x1xf32>
    %151 = tpu.bitcast %150 : vector<64x1xf32> -> vector<64x1xi32>
    %c127_i32_32 = arith.constant 127 : i32
    %152 = vector.broadcast %c127_i32_32 : i32 to vector<64x1xi32>
    %153 = arith.andi %151, %152 : vector<64x1xi32>
    %c-128_i32_33 = arith.constant -128 : i32
    %154 = vector.broadcast %c-128_i32_33 : i32 to vector<64x1xi32>
    %155 = arith.andi %151, %154 : vector<64x1xi32>
    %156 = tpu.bitcast %155 : vector<64x1xi32> -> vector<64x1xf32>
    %cst_34 = arith.constant -5.000000e-01 : f32
    %157 = vector.broadcast %cst_34 : f32 to vector<64x1xf32>
    %158 = arith.mulf %157, %156 : vector<64x1xf32>
    %159 = math.exp %158 : vector<64x1xf32>
    %160 = vector.broadcast %153 : vector<64x1xi32> to vector<64x128xi32>
    %161 = arith.cmpi eq, %6, %160 : vector<64x128xi32>
    %162 = vector.shape_cast %159 : vector<64x1xf32> to vector<64x1xf32>
    %163 = vector.broadcast %162 : vector<64x1xf32> to vector<64x128xf32>
    %164 = arith.select %161, %163, %148 : vector<64x128xi1>, vector<64x128xf32>
    %cst_35 = arith.constant 0x7F800000 : f32
    %165 = vector.broadcast %cst_35 : f32 to vector<64x128xf32>
    %166 = arith.select %161, %165, %147 : vector<64x128xi1>, vector<64x128xf32>
    %cst_36 = arith.constant dense<0x7F800000> : vector<64xf32>
    %167 = vector.multi_reduction <minimumf>, %166, %cst_36 [1] : vector<64x128xf32> to vector<64xf32>
    %168 = vector.shape_cast %167 : vector<64xf32> to vector<64x1xf32>
    %169 = tpu.bitcast %168 : vector<64x1xf32> -> vector<64x1xi32>
    %c127_i32_37 = arith.constant 127 : i32
    %170 = vector.broadcast %c127_i32_37 : i32 to vector<64x1xi32>
    %171 = arith.andi %169, %170 : vector<64x1xi32>
    %c-128_i32_38 = arith.constant -128 : i32
    %172 = vector.broadcast %c-128_i32_38 : i32 to vector<64x1xi32>
    %173 = arith.andi %169, %172 : vector<64x1xi32>
    %174 = tpu.bitcast %173 : vector<64x1xi32> -> vector<64x1xf32>
    %cst_39 = arith.constant -5.000000e-01 : f32
    %175 = vector.broadcast %cst_39 : f32 to vector<64x1xf32>
    %176 = arith.mulf %175, %174 : vector<64x1xf32>
    %177 = math.exp %176 : vector<64x1xf32>
    %178 = vector.broadcast %171 : vector<64x1xi32> to vector<64x128xi32>
    %179 = arith.cmpi eq, %6, %178 : vector<64x128xi32>
    %180 = vector.shape_cast %177 : vector<64x1xf32> to vector<64x1xf32>
    %181 = vector.broadcast %180 : vector<64x1xf32> to vector<64x128xf32>
    %182 = arith.select %179, %181, %164 : vector<64x128xi1>, vector<64x128xf32>
    %cst_40 = arith.constant 0x7F800000 : f32
    %183 = vector.broadcast %cst_40 : f32 to vector<64x128xf32>
    %184 = arith.select %179, %183, %166 : vector<64x128xi1>, vector<64x128xf32>
    %cst_41 = arith.constant dense<0x7F800000> : vector<64xf32>
    %185 = vector.multi_reduction <minimumf>, %184, %cst_41 [1] : vector<64x128xf32> to vector<64xf32>
    %186 = vector.shape_cast %185 : vector<64xf32> to vector<64x1xf32>
    %187 = tpu.bitcast %186 : vector<64x1xf32> -> vector<64x1xi32>
    %c127_i32_42 = arith.constant 127 : i32
    %188 = vector.broadcast %c127_i32_42 : i32 to vector<64x1xi32>
    %189 = arith.andi %187, %188 : vector<64x1xi32>
    %c-128_i32_43 = arith.constant -128 : i32
    %190 = vector.broadcast %c-128_i32_43 : i32 to vector<64x1xi32>
    %191 = arith.andi %187, %190 : vector<64x1xi32>
    %192 = tpu.bitcast %191 : vector<64x1xi32> -> vector<64x1xf32>
    %cst_44 = arith.constant -5.000000e-01 : f32
    %193 = vector.broadcast %cst_44 : f32 to vector<64x1xf32>
    %194 = arith.mulf %193, %192 : vector<64x1xf32>
    %195 = math.exp %194 : vector<64x1xf32>
    %196 = vector.broadcast %189 : vector<64x1xi32> to vector<64x128xi32>
    %197 = arith.cmpi eq, %6, %196 : vector<64x128xi32>
    %198 = vector.shape_cast %195 : vector<64x1xf32> to vector<64x1xf32>
    %199 = vector.broadcast %198 : vector<64x1xf32> to vector<64x128xf32>
    %200 = arith.select %197, %199, %182 : vector<64x128xi1>, vector<64x128xf32>
    %cst_45 = arith.constant 0x7F800000 : f32
    %201 = vector.broadcast %cst_45 : f32 to vector<64x128xf32>
    %202 = arith.select %197, %201, %184 : vector<64x128xi1>, vector<64x128xf32>
    %cst_46 = arith.constant dense<0x7F800000> : vector<64xf32>
    %203 = vector.multi_reduction <minimumf>, %202, %cst_46 [1] : vector<64x128xf32> to vector<64xf32>
    %204 = vector.shape_cast %203 : vector<64xf32> to vector<64x1xf32>
    %205 = tpu.bitcast %204 : vector<64x1xf32> -> vector<64x1xi32>
    %c127_i32_47 = arith.constant 127 : i32
    %206 = vector.broadcast %c127_i32_47 : i32 to vector<64x1xi32>
    %207 = arith.andi %205, %206 : vector<64x1xi32>
    %c-128_i32_48 = arith.constant -128 : i32
    %208 = vector.broadcast %c-128_i32_48 : i32 to vector<64x1xi32>
    %209 = arith.andi %205, %208 : vector<64x1xi32>
    %210 = tpu.bitcast %209 : vector<64x1xi32> -> vector<64x1xf32>
    %cst_49 = arith.constant -5.000000e-01 : f32
    %211 = vector.broadcast %cst_49 : f32 to vector<64x1xf32>
    %212 = arith.mulf %211, %210 : vector<64x1xf32>
    %213 = math.exp %212 : vector<64x1xf32>
    %214 = vector.broadcast %207 : vector<64x1xi32> to vector<64x128xi32>
    %215 = arith.cmpi eq, %6, %214 : vector<64x128xi32>
    %216 = vector.shape_cast %213 : vector<64x1xf32> to vector<64x1xf32>
    %217 = vector.broadcast %216 : vector<64x1xf32> to vector<64x128xf32>
    %218 = arith.select %215, %217, %200 : vector<64x128xi1>, vector<64x128xf32>
    %219 = arith.index_cast %115 : i32 to index
    %c0_50 = arith.constant 0 : index
    %220 = vector.load %arg5[%219, %c0_50] : memref<512x128xf32, #tpu.memory_space<vmem>>, vector<64x128xf32>
    tpu.vector_store %arg5[%219, %c0_50], %218 {strides = array<i32>} : memref<512x128xf32, #tpu.memory_space<vmem>>, vector<64x128xf32>,
    %c2_i32 = arith.constant 2 : i32
    %c64_i32_51 = arith.constant 64 : i32
    %221 = arith.muli %c2_i32, %c64_i32_51 : i32
    %222 = tpu.assume_multiple %221, 64 : i32
    %223 = arith.index_cast %222 : i32 to index
    %c0_52 = arith.constant 0 : index
    %224 = vector.load %arg1[%223, %c0_52] : memref<512x2xf32, #tpu.memory_space<vmem>>, vector<64x2xf32>
    %225 = vector.extract_strided_slice %224 {offsets = [0, 0], sizes = [64, 1], strides = [1, 1]} : vector<64x2xf32> to vector<64x1xf32>
    %226 = vector.shape_cast %225 : vector<64x1xf32> to vector<64x1xf32>
    %227 = vector.broadcast %226 : vector<64x1xf32> to vector<64x128xf32>
    %228 = vector.extract_strided_slice %224 {offsets = [0, 1], sizes = [64, 1], strides = [1, 1]} : vector<64x2xf32> to vector<64x1xf32>
    %229 = vector.shape_cast %228 : vector<64x1xf32> to vector<64x1xf32>
    %230 = vector.broadcast %229 : vector<64x1xf32> to vector<64x128xf32>
    %231 = vector.broadcast %0 : vector<1x128xf32> to vector<64x128xf32>
    %232 = arith.mulf %231, %227 : vector<64x128xf32>
    %233 = vector.broadcast %1 : vector<1x128xf32> to vector<64x128xf32>
    %234 = arith.mulf %233, %230 : vector<64x128xf32>
    %235 = arith.addf %232, %234 : vector<64x128xf32>
    %236 = vector.broadcast %2 : vector<1x128xf32> to vector<64x128xf32>
    %237 = arith.subf %235, %236 : vector<64x128xf32>
    %238 = vector.broadcast %3 : vector<1x128xf32> to vector<64x128xf32>
    %239 = arith.mulf %238, %227 : vector<64x128xf32>
    %240 = vector.broadcast %4 : vector<1x128xf32> to vector<64x128xf32>
    %241 = arith.mulf %240, %230 : vector<64x128xf32>
    %242 = arith.addf %239, %241 : vector<64x128xf32>
    %243 = vector.broadcast %5 : vector<1x128xf32> to vector<64x128xf32>
    %244 = arith.subf %242, %243 : vector<64x128xf32>
    %245 = arith.mulf %237, %237 : vector<64x128xf32>
    %246 = arith.mulf %244, %244 : vector<64x128xf32>
    %247 = arith.addf %245, %246 : vector<64x128xf32>
    %248 = vector.broadcast %cst : f32 to vector<64x128xf32>
    %249 = arith.minimumf %247, %248 : vector<64x128xf32>
    %250 = tpu.bitcast %249 : vector<64x128xf32> -> vector<64x128xi32>
    %c-128_i32_53 = arith.constant -128 : i32
    %251 = vector.broadcast %c-128_i32_53 : i32 to vector<64x128xi32>
    %252 = arith.andi %250, %251 : vector<64x128xi32>
    %253 = arith.ori %252, %6 : vector<64x128xi32>
    %254 = tpu.bitcast %253 : vector<64x128xi32> -> vector<64x128xf32>
    %cst_54 = arith.constant 0.000000e+00 : f32
    %255 = vector.broadcast %cst_54 : f32 to vector<64x128xf32>
    %cst_55 = arith.constant dense<0x7F800000> : vector<64xf32>
    %256 = vector.multi_reduction <minimumf>, %254, %cst_55 [1] : vector<64x128xf32> to vector<64xf32>
    %257 = vector.shape_cast %256 : vector<64xf32> to vector<64x1xf32>
    %258 = tpu.bitcast %257 : vector<64x1xf32> -> vector<64x1xi32>
    %c127_i32_56 = arith.constant 127 : i32
    %259 = vector.broadcast %c127_i32_56 : i32 to vector<64x1xi32>
    %260 = arith.andi %258, %259 : vector<64x1xi32>
    %c-128_i32_57 = arith.constant -128 : i32
    %261 = vector.broadcast %c-128_i32_57 : i32 to vector<64x1xi32>
    %262 = arith.andi %258, %261 : vector<64x1xi32>
    %263 = tpu.bitcast %262 : vector<64x1xi32> -> vector<64x1xf32>
    %cst_58 = arith.constant -5.000000e-01 : f32
    %264 = vector.broadcast %cst_58 : f32 to vector<64x1xf32>
    %265 = arith.mulf %264, %263 : vector<64x1xf32>
    %266 = math.exp %265 : vector<64x1xf32>
    %267 = vector.broadcast %260 : vector<64x1xi32> to vector<64x128xi32>
    %268 = arith.cmpi eq, %6, %267 : vector<64x128xi32>
    %269 = vector.shape_cast %266 : vector<64x1xf32> to vector<64x1xf32>
    %270 = vector.broadcast %269 : vector<64x1xf32> to vector<64x128xf32>
    %271 = arith.select %268, %270, %255 : vector<64x128xi1>, vector<64x128xf32>
    %cst_59 = arith.constant 0x7F800000 : f32
    %272 = vector.broadcast %cst_59 : f32 to vector<64x128xf32>
    %273 = arith.select %268, %272, %254 : vector<64x128xi1>, vector<64x128xf32>
    %cst_60 = arith.constant dense<0x7F800000> : vector<64xf32>
    %274 = vector.multi_reduction <minimumf>, %273, %cst_60 [1] : vector<64x128xf32> to vector<64xf32>
    %275 = vector.shape_cast %274 : vector<64xf32> to vector<64x1xf32>
    %276 = tpu.bitcast %275 : vector<64x1xf32> -> vector<64x1xi32>
    %c127_i32_61 = arith.constant 127 : i32
    %277 = vector.broadcast %c127_i32_61 : i32 to vector<64x1xi32>
    %278 = arith.andi %276, %277 : vector<64x1xi32>
    %c-128_i32_62 = arith.constant -128 : i32
    %279 = vector.broadcast %c-128_i32_62 : i32 to vector<64x1xi32>
    %280 = arith.andi %276, %279 : vector<64x1xi32>
    %281 = tpu.bitcast %280 : vector<64x1xi32> -> vector<64x1xf32>
    %cst_63 = arith.constant -5.000000e-01 : f32
    %282 = vector.broadcast %cst_63 : f32 to vector<64x1xf32>
    %283 = arith.mulf %282, %281 : vector<64x1xf32>
    %284 = math.exp %283 : vector<64x1xf32>
    %285 = vector.broadcast %278 : vector<64x1xi32> to vector<64x128xi32>
    %286 = arith.cmpi eq, %6, %285 : vector<64x128xi32>
    %287 = vector.shape_cast %284 : vector<64x1xf32> to vector<64x1xf32>
    %288 = vector.broadcast %287 : vector<64x1xf32> to vector<64x128xf32>
    %289 = arith.select %286, %288, %271 : vector<64x128xi1>, vector<64x128xf32>
    %cst_64 = arith.constant 0x7F800000 : f32
    %290 = vector.broadcast %cst_64 : f32 to vector<64x128xf32>
    %291 = arith.select %286, %290, %273 : vector<64x128xi1>, vector<64x128xf32>
    %cst_65 = arith.constant dense<0x7F800000> : vector<64xf32>
    %292 = vector.multi_reduction <minimumf>, %291, %cst_65 [1] : vector<64x128xf32> to vector<64xf32>
    %293 = vector.shape_cast %292 : vector<64xf32> to vector<64x1xf32>
    %294 = tpu.bitcast %293 : vector<64x1xf32> -> vector<64x1xi32>
    %c127_i32_66 = arith.constant 127 : i32
    %295 = vector.broadcast %c127_i32_66 : i32 to vector<64x1xi32>
    %296 = arith.andi %294, %295 : vector<64x1xi32>
    %c-128_i32_67 = arith.constant -128 : i32
    %297 = vector.broadcast %c-128_i32_67 : i32 to vector<64x1xi32>
    %298 = arith.andi %294, %297 : vector<64x1xi32>
    %299 = tpu.bitcast %298 : vector<64x1xi32> -> vector<64x1xf32>
    %cst_68 = arith.constant -5.000000e-01 : f32
    %300 = vector.broadcast %cst_68 : f32 to vector<64x1xf32>
    %301 = arith.mulf %300, %299 : vector<64x1xf32>
    %302 = math.exp %301 : vector<64x1xf32>
    %303 = vector.broadcast %296 : vector<64x1xi32> to vector<64x128xi32>
    %304 = arith.cmpi eq, %6, %303 : vector<64x128xi32>
    %305 = vector.shape_cast %302 : vector<64x1xf32> to vector<64x1xf32>
    %306 = vector.broadcast %305 : vector<64x1xf32> to vector<64x128xf32>
    %307 = arith.select %304, %306, %289 : vector<64x128xi1>, vector<64x128xf32>
    %cst_69 = arith.constant 0x7F800000 : f32
    %308 = vector.broadcast %cst_69 : f32 to vector<64x128xf32>
    %309 = arith.select %304, %308, %291 : vector<64x128xi1>, vector<64x128xf32>
    %cst_70 = arith.constant dense<0x7F800000> : vector<64xf32>
    %310 = vector.multi_reduction <minimumf>, %309, %cst_70 [1] : vector<64x128xf32> to vector<64xf32>
    %311 = vector.shape_cast %310 : vector<64xf32> to vector<64x1xf32>
    %312 = tpu.bitcast %311 : vector<64x1xf32> -> vector<64x1xi32>
    %c127_i32_71 = arith.constant 127 : i32
    %313 = vector.broadcast %c127_i32_71 : i32 to vector<64x1xi32>
    %314 = arith.andi %312, %313 : vector<64x1xi32>
    %c-128_i32_72 = arith.constant -128 : i32
    %315 = vector.broadcast %c-128_i32_72 : i32 to vector<64x1xi32>
    %316 = arith.andi %312, %315 : vector<64x1xi32>
    %317 = tpu.bitcast %316 : vector<64x1xi32> -> vector<64x1xf32>
    %cst_73 = arith.constant -5.000000e-01 : f32
    %318 = vector.broadcast %cst_73 : f32 to vector<64x1xf32>
    %319 = arith.mulf %318, %317 : vector<64x1xf32>
    %320 = math.exp %319 : vector<64x1xf32>
    %321 = vector.broadcast %314 : vector<64x1xi32> to vector<64x128xi32>
    %322 = arith.cmpi eq, %6, %321 : vector<64x128xi32>
    %323 = vector.shape_cast %320 : vector<64x1xf32> to vector<64x1xf32>
    %324 = vector.broadcast %323 : vector<64x1xf32> to vector<64x128xf32>
    %325 = arith.select %322, %324, %307 : vector<64x128xi1>, vector<64x128xf32>
    %326 = arith.index_cast %222 : i32 to index
    %c0_74 = arith.constant 0 : index
    %327 = vector.load %arg5[%326, %c0_74] : memref<512x128xf32, #tpu.memory_space<vmem>>, vector<64x128xf32>
    tpu.vector_store %arg5[%326, %c0_74], %325 {strides = array<i32>} : memref<512x128xf32, #tpu.memory_space<vmem>>, vector<64x128xf32>,
    %c3_i32 = arith.constant 3 : i32
    %c64_i32_75 = arith.constant 64 : i32
    %328 = arith.muli %c3_i32, %c64_i32_75 : i32
    %329 = tpu.assume_multiple %328, 64 : i32
    %330 = arith.index_cast %329 : i32 to index
    %c0_76 = arith.constant 0 : index
    %331 = vector.load %arg1[%330, %c0_76] : memref<512x2xf32, #tpu.memory_space<vmem>>, vector<64x2xf32>
    %332 = vector.extract_strided_slice %331 {offsets = [0, 0], sizes = [64, 1], strides = [1, 1]} : vector<64x2xf32> to vector<64x1xf32>
    %333 = vector.shape_cast %332 : vector<64x1xf32> to vector<64x1xf32>
    %334 = vector.broadcast %333 : vector<64x1xf32> to vector<64x128xf32>
    %335 = vector.extract_strided_slice %331 {offsets = [0, 1], sizes = [64, 1], strides = [1, 1]} : vector<64x2xf32> to vector<64x1xf32>
    %336 = vector.shape_cast %335 : vector<64x1xf32> to vector<64x1xf32>
    %337 = vector.broadcast %336 : vector<64x1xf32> to vector<64x128xf32>
    %338 = vector.broadcast %0 : vector<1x128xf32> to vector<64x128xf32>
    %339 = arith.mulf %338, %334 : vector<64x128xf32>
    %340 = vector.broadcast %1 : vector<1x128xf32> to vector<64x128xf32>
    %341 = arith.mulf %340, %337 : vector<64x128xf32>
    %342 = arith.addf %339, %341 : vector<64x128xf32>
    %343 = vector.broadcast %2 : vector<1x128xf32> to vector<64x128xf32>
    %344 = arith.subf %342, %343 : vector<64x128xf32>
    %345 = vector.broadcast %3 : vector<1x128xf32> to vector<64x128xf32>
    %346 = arith.mulf %345, %334 : vector<64x128xf32>
    %347 = vector.broadcast %4 : vector<1x128xf32> to vector<64x128xf32>
    %348 = arith.mulf %347, %337 : vector<64x128xf32>
    %349 = arith.addf %346, %348 : vector<64x128xf32>
    %350 = vector.broadcast %5 : vector<1x128xf32> to vector<64x128xf32>
    %351 = arith.subf %349, %350 : vector<64x128xf32>
    %352 = arith.mulf %344, %344 : vector<64x128xf32>
    %353 = arith.mulf %351, %351 : vector<64x128xf32>
    %354 = arith.addf %352, %353 : vector<64x128xf32>
    %355 = vector.broadcast %cst : f32 to vector<64x128xf32>
    %356 = arith.minimumf %354, %355 : vector<64x128xf32>
    %357 = tpu.bitcast %356 : vector<64x128xf32> -> vector<64x128xi32>
    %c-128_i32_77 = arith.constant -128 : i32
    %358 = vector.broadcast %c-128_i32_77 : i32 to vector<64x128xi32>
    %359 = arith.andi %357, %358 : vector<64x128xi32>
    %360 = arith.ori %359, %6 : vector<64x128xi32>
    %361 = tpu.bitcast %360 : vector<64x128xi32> -> vector<64x128xf32>
    %cst_78 = arith.constant 0.000000e+00 : f32
    %362 = vector.broadcast %cst_78 : f32 to vector<64x128xf32>
    %cst_79 = arith.constant dense<0x7F800000> : vector<64xf32>
    %363 = vector.multi_reduction <minimumf>, %361, %cst_79 [1] : vector<64x128xf32> to vector<64xf32>
    %364 = vector.shape_cast %363 : vector<64xf32> to vector<64x1xf32>
    %365 = tpu.bitcast %364 : vector<64x1xf32> -> vector<64x1xi32>
    %c127_i32_80 = arith.constant 127 : i32
    %366 = vector.broadcast %c127_i32_80 : i32 to vector<64x1xi32>
    %367 = arith.andi %365, %366 : vector<64x1xi32>
    %c-128_i32_81 = arith.constant -128 : i32
    %368 = vector.broadcast %c-128_i32_81 : i32 to vector<64x1xi32>
    %369 = arith.andi %365, %368 : vector<64x1xi32>
    %370 = tpu.bitcast %369 : vector<64x1xi32> -> vector<64x1xf32>
    %cst_82 = arith.constant -5.000000e-01 : f32
    %371 = vector.broadcast %cst_82 : f32 to vector<64x1xf32>
    %372 = arith.mulf %371, %370 : vector<64x1xf32>
    %373 = math.exp %372 : vector<64x1xf32>
    %374 = vector.broadcast %367 : vector<64x1xi32> to vector<64x128xi32>
    %375 = arith.cmpi eq, %6, %374 : vector<64x128xi32>
    %376 = vector.shape_cast %373 : vector<64x1xf32> to vector<64x1xf32>
    %377 = vector.broadcast %376 : vector<64x1xf32> to vector<64x128xf32>
    %378 = arith.select %375, %377, %362 : vector<64x128xi1>, vector<64x128xf32>
    %cst_83 = arith.constant 0x7F800000 : f32
    %379 = vector.broadcast %cst_83 : f32 to vector<64x128xf32>
    %380 = arith.select %375, %379, %361 : vector<64x128xi1>, vector<64x128xf32>
    %cst_84 = arith.constant dense<0x7F800000> : vector<64xf32>
    %381 = vector.multi_reduction <minimumf>, %380, %cst_84 [1] : vector<64x128xf32> to vector<64xf32>
    %382 = vector.shape_cast %381 : vector<64xf32> to vector<64x1xf32>
    %383 = tpu.bitcast %382 : vector<64x1xf32> -> vector<64x1xi32>
    %c127_i32_85 = arith.constant 127 : i32
    %384 = vector.broadcast %c127_i32_85 : i32 to vector<64x1xi32>
    %385 = arith.andi %383, %384 : vector<64x1xi32>
    %c-128_i32_86 = arith.constant -128 : i32
    %386 = vector.broadcast %c-128_i32_86 : i32 to vector<64x1xi32>
    %387 = arith.andi %383, %386 : vector<64x1xi32>
    %388 = tpu.bitcast %387 : vector<64x1xi32> -> vector<64x1xf32>
    %cst_87 = arith.constant -5.000000e-01 : f32
    %389 = vector.broadcast %cst_87 : f32 to vector<64x1xf32>
    %390 = arith.mulf %389, %388 : vector<64x1xf32>
    %391 = math.exp %390 : vector<64x1xf32>
    %392 = vector.broadcast %385 : vector<64x1xi32> to vector<64x128xi32>
    %393 = arith.cmpi eq, %6, %392 : vector<64x128xi32>
    %394 = vector.shape_cast %391 : vector<64x1xf32> to vector<64x1xf32>
    %395 = vector.broadcast %394 : vector<64x1xf32> to vector<64x128xf32>
    %396 = arith.select %393, %395, %378 : vector<64x128xi1>, vector<64x128xf32>
    %cst_88 = arith.constant 0x7F800000 : f32
    %397 = vector.broadcast %cst_88 : f32 to vector<64x128xf32>
    %398 = arith.select %393, %397, %380 : vector<64x128xi1>, vector<64x128xf32>
    %cst_89 = arith.constant dense<0x7F800000> : vector<64xf32>
    %399 = vector.multi_reduction <minimumf>, %398, %cst_89 [1] : vector<64x128xf32> to vector<64xf32>
    %400 = vector.shape_cast %399 : vector<64xf32> to vector<64x1xf32>
    %401 = tpu.bitcast %400 : vector<64x1xf32> -> vector<64x1xi32>
    %c127_i32_90 = arith.constant 127 : i32
    %402 = vector.broadcast %c127_i32_90 : i32 to vector<64x1xi32>
    %403 = arith.andi %401, %402 : vector<64x1xi32>
    %c-128_i32_91 = arith.constant -128 : i32
    %404 = vector.broadcast %c-128_i32_91 : i32 to vector<64x1xi32>
    %405 = arith.andi %401, %404 : vector<64x1xi32>
    %406 = tpu.bitcast %405 : vector<64x1xi32> -> vector<64x1xf32>
    %cst_92 = arith.constant -5.000000e-01 : f32
    %407 = vector.broadcast %cst_92 : f32 to vector<64x1xf32>
    %408 = arith.mulf %407, %406 : vector<64x1xf32>
    %409 = math.exp %408 : vector<64x1xf32>
    %410 = vector.broadcast %403 : vector<64x1xi32> to vector<64x128xi32>
    %411 = arith.cmpi eq, %6, %410 : vector<64x128xi32>
    %412 = vector.shape_cast %409 : vector<64x1xf32> to vector<64x1xf32>
    %413 = vector.broadcast %412 : vector<64x1xf32> to vector<64x128xf32>
    %414 = arith.select %411, %413, %396 : vector<64x128xi1>, vector<64x128xf32>
    %cst_93 = arith.constant 0x7F800000 : f32
    %415 = vector.broadcast %cst_93 : f32 to vector<64x128xf32>
    %416 = arith.select %411, %415, %398 : vector<64x128xi1>, vector<64x128xf32>
    %cst_94 = arith.constant dense<0x7F800000> : vector<64xf32>
    %417 = vector.multi_reduction <minimumf>, %416, %cst_94 [1] : vector<64x128xf32> to vector<64xf32>
    %418 = vector.shape_cast %417 : vector<64xf32> to vector<64x1xf32>
    %419 = tpu.bitcast %418 : vector<64x1xf32> -> vector<64x1xi32>
    %c127_i32_95 = arith.constant 127 : i32
    %420 = vector.broadcast %c127_i32_95 : i32 to vector<64x1xi32>
    %421 = arith.andi %419, %420 : vector<64x1xi32>
    %c-128_i32_96 = arith.constant -128 : i32
    %422 = vector.broadcast %c-128_i32_96 : i32 to vector<64x1xi32>
    %423 = arith.andi %419, %422 : vector<64x1xi32>
    %424 = tpu.bitcast %423 : vector<64x1xi32> -> vector<64x1xf32>
    %cst_97 = arith.constant -5.000000e-01 : f32
    %425 = vector.broadcast %cst_97 : f32 to vector<64x1xf32>
    %426 = arith.mulf %425, %424 : vector<64x1xf32>
    %427 = math.exp %426 : vector<64x1xf32>
    %428 = vector.broadcast %421 : vector<64x1xi32> to vector<64x128xi32>
    %429 = arith.cmpi eq, %6, %428 : vector<64x128xi32>
    %430 = vector.shape_cast %427 : vector<64x1xf32> to vector<64x1xf32>
    %431 = vector.broadcast %430 : vector<64x1xf32> to vector<64x128xf32>
    %432 = arith.select %429, %431, %414 : vector<64x128xi1>, vector<64x128xf32>
    %433 = arith.index_cast %329 : i32 to index
    %c0_98 = arith.constant 0 : index
    %434 = vector.load %arg5[%433, %c0_98] : memref<512x128xf32, #tpu.memory_space<vmem>>, vector<64x128xf32>
    tpu.vector_store %arg5[%433, %c0_98], %432 {strides = array<i32>} : memref<512x128xf32, #tpu.memory_space<vmem>>, vector<64x128xf32>,
    %c4_i32 = arith.constant 4 : i32
    %c64_i32_99 = arith.constant 64 : i32
    %435 = arith.muli %c4_i32, %c64_i32_99 : i32
    %436 = tpu.assume_multiple %435, 64 : i32
    %437 = arith.index_cast %436 : i32 to index
    %c0_100 = arith.constant 0 : index
    %438 = vector.load %arg1[%437, %c0_100] : memref<512x2xf32, #tpu.memory_space<vmem>>, vector<64x2xf32>
    %439 = vector.extract_strided_slice %438 {offsets = [0, 0], sizes = [64, 1], strides = [1, 1]} : vector<64x2xf32> to vector<64x1xf32>
    %440 = vector.shape_cast %439 : vector<64x1xf32> to vector<64x1xf32>
    %441 = vector.broadcast %440 : vector<64x1xf32> to vector<64x128xf32>
    %442 = vector.extract_strided_slice %438 {offsets = [0, 1], sizes = [64, 1], strides = [1, 1]} : vector<64x2xf32> to vector<64x1xf32>
    %443 = vector.shape_cast %442 : vector<64x1xf32> to vector<64x1xf32>
    %444 = vector.broadcast %443 : vector<64x1xf32> to vector<64x128xf32>
    %445 = vector.broadcast %0 : vector<1x128xf32> to vector<64x128xf32>
    %446 = arith.mulf %445, %441 : vector<64x128xf32>
    %447 = vector.broadcast %1 : vector<1x128xf32> to vector<64x128xf32>
    %448 = arith.mulf %447, %444 : vector<64x128xf32>
    %449 = arith.addf %446, %448 : vector<64x128xf32>
    %450 = vector.broadcast %2 : vector<1x128xf32> to vector<64x128xf32>
    %451 = arith.subf %449, %450 : vector<64x128xf32>
    %452 = vector.broadcast %3 : vector<1x128xf32> to vector<64x128xf32>
    %453 = arith.mulf %452, %441 : vector<64x128xf32>
    %454 = vector.broadcast %4 : vector<1x128xf32> to vector<64x128xf32>
    %455 = arith.mulf %454, %444 : vector<64x128xf32>
    %456 = arith.addf %453, %455 : vector<64x128xf32>
    %457 = vector.broadcast %5 : vector<1x128xf32> to vector<64x128xf32>
    %458 = arith.subf %456, %457 : vector<64x128xf32>
    %459 = arith.mulf %451, %451 : vector<64x128xf32>
    %460 = arith.mulf %458, %458 : vector<64x128xf32>
    %461 = arith.addf %459, %460 : vector<64x128xf32>
    %462 = vector.broadcast %cst : f32 to vector<64x128xf32>
    %463 = arith.minimumf %461, %462 : vector<64x128xf32>
    %464 = tpu.bitcast %463 : vector<64x128xf32> -> vector<64x128xi32>
    %c-128_i32_101 = arith.constant -128 : i32
    %465 = vector.broadcast %c-128_i32_101 : i32 to vector<64x128xi32>
    %466 = arith.andi %464, %465 : vector<64x128xi32>
    %467 = arith.ori %466, %6 : vector<64x128xi32>
    %468 = tpu.bitcast %467 : vector<64x128xi32> -> vector<64x128xf32>
    %cst_102 = arith.constant 0.000000e+00 : f32
    %469 = vector.broadcast %cst_102 : f32 to vector<64x128xf32>
    %cst_103 = arith.constant dense<0x7F800000> : vector<64xf32>
    %470 = vector.multi_reduction <minimumf>, %468, %cst_103 [1] : vector<64x128xf32> to vector<64xf32>
    %471 = vector.shape_cast %470 : vector<64xf32> to vector<64x1xf32>
    %472 = tpu.bitcast %471 : vector<64x1xf32> -> vector<64x1xi32>
    %c127_i32_104 = arith.constant 127 : i32
    %473 = vector.broadcast %c127_i32_104 : i32 to vector<64x1xi32>
    %474 = arith.andi %472, %473 : vector<64x1xi32>
    %c-128_i32_105 = arith.constant -128 : i32
    %475 = vector.broadcast %c-128_i32_105 : i32 to vector<64x1xi32>
    %476 = arith.andi %472, %475 : vector<64x1xi32>
    %477 = tpu.bitcast %476 : vector<64x1xi32> -> vector<64x1xf32>
    %cst_106 = arith.constant -5.000000e-01 : f32
    %478 = vector.broadcast %cst_106 : f32 to vector<64x1xf32>
    %479 = arith.mulf %478, %477 : vector<64x1xf32>
    %480 = math.exp %479 : vector<64x1xf32>
    %481 = vector.broadcast %474 : vector<64x1xi32> to vector<64x128xi32>
    %482 = arith.cmpi eq, %6, %481 : vector<64x128xi32>
    %483 = vector.shape_cast %480 : vector<64x1xf32> to vector<64x1xf32>
    %484 = vector.broadcast %483 : vector<64x1xf32> to vector<64x128xf32>
    %485 = arith.select %482, %484, %469 : vector<64x128xi1>, vector<64x128xf32>
    %cst_107 = arith.constant 0x7F800000 : f32
    %486 = vector.broadcast %cst_107 : f32 to vector<64x128xf32>
    %487 = arith.select %482, %486, %468 : vector<64x128xi1>, vector<64x128xf32>
    %cst_108 = arith.constant dense<0x7F800000> : vector<64xf32>
    %488 = vector.multi_reduction <minimumf>, %487, %cst_108 [1] : vector<64x128xf32> to vector<64xf32>
    %489 = vector.shape_cast %488 : vector<64xf32> to vector<64x1xf32>
    %490 = tpu.bitcast %489 : vector<64x1xf32> -> vector<64x1xi32>
    %c127_i32_109 = arith.constant 127 : i32
    %491 = vector.broadcast %c127_i32_109 : i32 to vector<64x1xi32>
    %492 = arith.andi %490, %491 : vector<64x1xi32>
    %c-128_i32_110 = arith.constant -128 : i32
    %493 = vector.broadcast %c-128_i32_110 : i32 to vector<64x1xi32>
    %494 = arith.andi %490, %493 : vector<64x1xi32>
    %495 = tpu.bitcast %494 : vector<64x1xi32> -> vector<64x1xf32>
    %cst_111 = arith.constant -5.000000e-01 : f32
    %496 = vector.broadcast %cst_111 : f32 to vector<64x1xf32>
    %497 = arith.mulf %496, %495 : vector<64x1xf32>
    %498 = math.exp %497 : vector<64x1xf32>
    %499 = vector.broadcast %492 : vector<64x1xi32> to vector<64x128xi32>
    %500 = arith.cmpi eq, %6, %499 : vector<64x128xi32>
    %501 = vector.shape_cast %498 : vector<64x1xf32> to vector<64x1xf32>
    %502 = vector.broadcast %501 : vector<64x1xf32> to vector<64x128xf32>
    %503 = arith.select %500, %502, %485 : vector<64x128xi1>, vector<64x128xf32>
    %cst_112 = arith.constant 0x7F800000 : f32
    %504 = vector.broadcast %cst_112 : f32 to vector<64x128xf32>
    %505 = arith.select %500, %504, %487 : vector<64x128xi1>, vector<64x128xf32>
    %cst_113 = arith.constant dense<0x7F800000> : vector<64xf32>
    %506 = vector.multi_reduction <minimumf>, %505, %cst_113 [1] : vector<64x128xf32> to vector<64xf32>
    %507 = vector.shape_cast %506 : vector<64xf32> to vector<64x1xf32>
    %508 = tpu.bitcast %507 : vector<64x1xf32> -> vector<64x1xi32>
    %c127_i32_114 = arith.constant 127 : i32
    %509 = vector.broadcast %c127_i32_114 : i32 to vector<64x1xi32>
    %510 = arith.andi %508, %509 : vector<64x1xi32>
    %c-128_i32_115 = arith.constant -128 : i32
    %511 = vector.broadcast %c-128_i32_115 : i32 to vector<64x1xi32>
    %512 = arith.andi %508, %511 : vector<64x1xi32>
    %513 = tpu.bitcast %512 : vector<64x1xi32> -> vector<64x1xf32>
    %cst_116 = arith.constant -5.000000e-01 : f32
    %514 = vector.broadcast %cst_116 : f32 to vector<64x1xf32>
    %515 = arith.mulf %514, %513 : vector<64x1xf32>
    %516 = math.exp %515 : vector<64x1xf32>
    %517 = vector.broadcast %510 : vector<64x1xi32> to vector<64x128xi32>
    %518 = arith.cmpi eq, %6, %517 : vector<64x128xi32>
    %519 = vector.shape_cast %516 : vector<64x1xf32> to vector<64x1xf32>
    %520 = vector.broadcast %519 : vector<64x1xf32> to vector<64x128xf32>
    %521 = arith.select %518, %520, %503 : vector<64x128xi1>, vector<64x128xf32>
    %cst_117 = arith.constant 0x7F800000 : f32
    %522 = vector.broadcast %cst_117 : f32 to vector<64x128xf32>
    %523 = arith.select %518, %522, %505 : vector<64x128xi1>, vector<64x128xf32>
    %cst_118 = arith.constant dense<0x7F800000> : vector<64xf32>
    %524 = vector.multi_reduction <minimumf>, %523, %cst_118 [1] : vector<64x128xf32> to vector<64xf32>
    %525 = vector.shape_cast %524 : vector<64xf32> to vector<64x1xf32>
    %526 = tpu.bitcast %525 : vector<64x1xf32> -> vector<64x1xi32>
    %c127_i32_119 = arith.constant 127 : i32
    %527 = vector.broadcast %c127_i32_119 : i32 to vector<64x1xi32>
    %528 = arith.andi %526, %527 : vector<64x1xi32>
    %c-128_i32_120 = arith.constant -128 : i32
    %529 = vector.broadcast %c-128_i32_120 : i32 to vector<64x1xi32>
    %530 = arith.andi %526, %529 : vector<64x1xi32>
    %531 = tpu.bitcast %530 : vector<64x1xi32> -> vector<64x1xf32>
    %cst_121 = arith.constant -5.000000e-01 : f32
    %532 = vector.broadcast %cst_121 : f32 to vector<64x1xf32>
    %533 = arith.mulf %532, %531 : vector<64x1xf32>
    %534 = math.exp %533 : vector<64x1xf32>
    %535 = vector.broadcast %528 : vector<64x1xi32> to vector<64x128xi32>
    %536 = arith.cmpi eq, %6, %535 : vector<64x128xi32>
    %537 = vector.shape_cast %534 : vector<64x1xf32> to vector<64x1xf32>
    %538 = vector.broadcast %537 : vector<64x1xf32> to vector<64x128xf32>
    %539 = arith.select %536, %538, %521 : vector<64x128xi1>, vector<64x128xf32>
    %540 = arith.index_cast %436 : i32 to index
    %c0_122 = arith.constant 0 : index
    %541 = vector.load %arg5[%540, %c0_122] : memref<512x128xf32, #tpu.memory_space<vmem>>, vector<64x128xf32>
    tpu.vector_store %arg5[%540, %c0_122], %539 {strides = array<i32>} : memref<512x128xf32, #tpu.memory_space<vmem>>, vector<64x128xf32>,
    %c5_i32 = arith.constant 5 : i32
    %c64_i32_123 = arith.constant 64 : i32
    %542 = arith.muli %c5_i32, %c64_i32_123 : i32
    %543 = tpu.assume_multiple %542, 64 : i32
    %544 = arith.index_cast %543 : i32 to index
    %c0_124 = arith.constant 0 : index
    %545 = vector.load %arg1[%544, %c0_124] : memref<512x2xf32, #tpu.memory_space<vmem>>, vector<64x2xf32>
    %546 = vector.extract_strided_slice %545 {offsets = [0, 0], sizes = [64, 1], strides = [1, 1]} : vector<64x2xf32> to vector<64x1xf32>
    %547 = vector.shape_cast %546 : vector<64x1xf32> to vector<64x1xf32>
    %548 = vector.broadcast %547 : vector<64x1xf32> to vector<64x128xf32>
    %549 = vector.extract_strided_slice %545 {offsets = [0, 1], sizes = [64, 1], strides = [1, 1]} : vector<64x2xf32> to vector<64x1xf32>
    %550 = vector.shape_cast %549 : vector<64x1xf32> to vector<64x1xf32>
    %551 = vector.broadcast %550 : vector<64x1xf32> to vector<64x128xf32>
    %552 = vector.broadcast %0 : vector<1x128xf32> to vector<64x128xf32>
    %553 = arith.mulf %552, %548 : vector<64x128xf32>
    %554 = vector.broadcast %1 : vector<1x128xf32> to vector<64x128xf32>
    %555 = arith.mulf %554, %551 : vector<64x128xf32>
    %556 = arith.addf %553, %555 : vector<64x128xf32>
    %557 = vector.broadcast %2 : vector<1x128xf32> to vector<64x128xf32>
    %558 = arith.subf %556, %557 : vector<64x128xf32>
    %559 = vector.broadcast %3 : vector<1x128xf32> to vector<64x128xf32>
    %560 = arith.mulf %559, %548 : vector<64x128xf32>
    %561 = vector.broadcast %4 : vector<1x128xf32> to vector<64x128xf32>
    %562 = arith.mulf %561, %551 : vector<64x128xf32>
    %563 = arith.addf %560, %562 : vector<64x128xf32>
    %564 = vector.broadcast %5 : vector<1x128xf32> to vector<64x128xf32>
    %565 = arith.subf %563, %564 : vector<64x128xf32>
    %566 = arith.mulf %558, %558 : vector<64x128xf32>
    %567 = arith.mulf %565, %565 : vector<64x128xf32>
    %568 = arith.addf %566, %567 : vector<64x128xf32>
    %569 = vector.broadcast %cst : f32 to vector<64x128xf32>
    %570 = arith.minimumf %568, %569 : vector<64x128xf32>
    %571 = tpu.bitcast %570 : vector<64x128xf32> -> vector<64x128xi32>
    %c-128_i32_125 = arith.constant -128 : i32
    %572 = vector.broadcast %c-128_i32_125 : i32 to vector<64x128xi32>
    %573 = arith.andi %571, %572 : vector<64x128xi32>
    %574 = arith.ori %573, %6 : vector<64x128xi32>
    %575 = tpu.bitcast %574 : vector<64x128xi32> -> vector<64x128xf32>
    %cst_126 = arith.constant 0.000000e+00 : f32
    %576 = vector.broadcast %cst_126 : f32 to vector<64x128xf32>
    %cst_127 = arith.constant dense<0x7F800000> : vector<64xf32>
    %577 = vector.multi_reduction <minimumf>, %575, %cst_127 [1] : vector<64x128xf32> to vector<64xf32>
    %578 = vector.shape_cast %577 : vector<64xf32> to vector<64x1xf32>
    %579 = tpu.bitcast %578 : vector<64x1xf32> -> vector<64x1xi32>
    %c127_i32_128 = arith.constant 127 : i32
    %580 = vector.broadcast %c127_i32_128 : i32 to vector<64x1xi32>
    %581 = arith.andi %579, %580 : vector<64x1xi32>
    %c-128_i32_129 = arith.constant -128 : i32
    %582 = vector.broadcast %c-128_i32_129 : i32 to vector<64x1xi32>
    %583 = arith.andi %579, %582 : vector<64x1xi32>
    %584 = tpu.bitcast %583 : vector<64x1xi32> -> vector<64x1xf32>
    %cst_130 = arith.constant -5.000000e-01 : f32
    %585 = vector.broadcast %cst_130 : f32 to vector<64x1xf32>
    %586 = arith.mulf %585, %584 : vector<64x1xf32>
    %587 = math.exp %586 : vector<64x1xf32>
    %588 = vector.broadcast %581 : vector<64x1xi32> to vector<64x128xi32>
    %589 = arith.cmpi eq, %6, %588 : vector<64x128xi32>
    %590 = vector.shape_cast %587 : vector<64x1xf32> to vector<64x1xf32>
    %591 = vector.broadcast %590 : vector<64x1xf32> to vector<64x128xf32>
    %592 = arith.select %589, %591, %576 : vector<64x128xi1>, vector<64x128xf32>
    %cst_131 = arith.constant 0x7F800000 : f32
    %593 = vector.broadcast %cst_131 : f32 to vector<64x128xf32>
    %594 = arith.select %589, %593, %575 : vector<64x128xi1>, vector<64x128xf32>
    %cst_132 = arith.constant dense<0x7F800000> : vector<64xf32>
    %595 = vector.multi_reduction <minimumf>, %594, %cst_132 [1] : vector<64x128xf32> to vector<64xf32>
    %596 = vector.shape_cast %595 : vector<64xf32> to vector<64x1xf32>
    %597 = tpu.bitcast %596 : vector<64x1xf32> -> vector<64x1xi32>
    %c127_i32_133 = arith.constant 127 : i32
    %598 = vector.broadcast %c127_i32_133 : i32 to vector<64x1xi32>
    %599 = arith.andi %597, %598 : vector<64x1xi32>
    %c-128_i32_134 = arith.constant -128 : i32
    %600 = vector.broadcast %c-128_i32_134 : i32 to vector<64x1xi32>
    %601 = arith.andi %597, %600 : vector<64x1xi32>
    %602 = tpu.bitcast %601 : vector<64x1xi32> -> vector<64x1xf32>
    %cst_135 = arith.constant -5.000000e-01 : f32
    %603 = vector.broadcast %cst_135 : f32 to vector<64x1xf32>
    %604 = arith.mulf %603, %602 : vector<64x1xf32>
    %605 = math.exp %604 : vector<64x1xf32>
    %606 = vector.broadcast %599 : vector<64x1xi32> to vector<64x128xi32>
    %607 = arith.cmpi eq, %6, %606 : vector<64x128xi32>
    %608 = vector.shape_cast %605 : vector<64x1xf32> to vector<64x1xf32>
    %609 = vector.broadcast %608 : vector<64x1xf32> to vector<64x128xf32>
    %610 = arith.select %607, %609, %592 : vector<64x128xi1>, vector<64x128xf32>
    %cst_136 = arith.constant 0x7F800000 : f32
    %611 = vector.broadcast %cst_136 : f32 to vector<64x128xf32>
    %612 = arith.select %607, %611, %594 : vector<64x128xi1>, vector<64x128xf32>
    %cst_137 = arith.constant dense<0x7F800000> : vector<64xf32>
    %613 = vector.multi_reduction <minimumf>, %612, %cst_137 [1] : vector<64x128xf32> to vector<64xf32>
    %614 = vector.shape_cast %613 : vector<64xf32> to vector<64x1xf32>
    %615 = tpu.bitcast %614 : vector<64x1xf32> -> vector<64x1xi32>
    %c127_i32_138 = arith.constant 127 : i32
    %616 = vector.broadcast %c127_i32_138 : i32 to vector<64x1xi32>
    %617 = arith.andi %615, %616 : vector<64x1xi32>
    %c-128_i32_139 = arith.constant -128 : i32
    %618 = vector.broadcast %c-128_i32_139 : i32 to vector<64x1xi32>
    %619 = arith.andi %615, %618 : vector<64x1xi32>
    %620 = tpu.bitcast %619 : vector<64x1xi32> -> vector<64x1xf32>
    %cst_140 = arith.constant -5.000000e-01 : f32
    %621 = vector.broadcast %cst_140 : f32 to vector<64x1xf32>
    %622 = arith.mulf %621, %620 : vector<64x1xf32>
    %623 = math.exp %622 : vector<64x1xf32>
    %624 = vector.broadcast %617 : vector<64x1xi32> to vector<64x128xi32>
    %625 = arith.cmpi eq, %6, %624 : vector<64x128xi32>
    %626 = vector.shape_cast %623 : vector<64x1xf32> to vector<64x1xf32>
    %627 = vector.broadcast %626 : vector<64x1xf32> to vector<64x128xf32>
    %628 = arith.select %625, %627, %610 : vector<64x128xi1>, vector<64x128xf32>
    %cst_141 = arith.constant 0x7F800000 : f32
    %629 = vector.broadcast %cst_141 : f32 to vector<64x128xf32>
    %630 = arith.select %625, %629, %612 : vector<64x128xi1>, vector<64x128xf32>
    %cst_142 = arith.constant dense<0x7F800000> : vector<64xf32>
    %631 = vector.multi_reduction <minimumf>, %630, %cst_142 [1] : vector<64x128xf32> to vector<64xf32>
    %632 = vector.shape_cast %631 : vector<64xf32> to vector<64x1xf32>
    %633 = tpu.bitcast %632 : vector<64x1xf32> -> vector<64x1xi32>
    %c127_i32_143 = arith.constant 127 : i32
    %634 = vector.broadcast %c127_i32_143 : i32 to vector<64x1xi32>
    %635 = arith.andi %633, %634 : vector<64x1xi32>
    %c-128_i32_144 = arith.constant -128 : i32
    %636 = vector.broadcast %c-128_i32_144 : i32 to vector<64x1xi32>
    %637 = arith.andi %633, %636 : vector<64x1xi32>
    %638 = tpu.bitcast %637 : vector<64x1xi32> -> vector<64x1xf32>
    %cst_145 = arith.constant -5.000000e-01 : f32
    %639 = vector.broadcast %cst_145 : f32 to vector<64x1xf32>
    %640 = arith.mulf %639, %638 : vector<64x1xf32>
    %641 = math.exp %640 : vector<64x1xf32>
    %642 = vector.broadcast %635 : vector<64x1xi32> to vector<64x128xi32>
    %643 = arith.cmpi eq, %6, %642 : vector<64x128xi32>
    %644 = vector.shape_cast %641 : vector<64x1xf32> to vector<64x1xf32>
    %645 = vector.broadcast %644 : vector<64x1xf32> to vector<64x128xf32>
    %646 = arith.select %643, %645, %628 : vector<64x128xi1>, vector<64x128xf32>
    %647 = arith.index_cast %543 : i32 to index
    %c0_146 = arith.constant 0 : index
    %648 = vector.load %arg5[%647, %c0_146] : memref<512x128xf32, #tpu.memory_space<vmem>>, vector<64x128xf32>
    tpu.vector_store %arg5[%647, %c0_146], %646 {strides = array<i32>} : memref<512x128xf32, #tpu.memory_space<vmem>>, vector<64x128xf32>,
    %c6_i32 = arith.constant 6 : i32
    %c64_i32_147 = arith.constant 64 : i32
    %649 = arith.muli %c6_i32, %c64_i32_147 : i32
    %650 = tpu.assume_multiple %649, 64 : i32
    %651 = arith.index_cast %650 : i32 to index
    %c0_148 = arith.constant 0 : index
    %652 = vector.load %arg1[%651, %c0_148] : memref<512x2xf32, #tpu.memory_space<vmem>>, vector<64x2xf32>
    %653 = vector.extract_strided_slice %652 {offsets = [0, 0], sizes = [64, 1], strides = [1, 1]} : vector<64x2xf32> to vector<64x1xf32>
    %654 = vector.shape_cast %653 : vector<64x1xf32> to vector<64x1xf32>
    %655 = vector.broadcast %654 : vector<64x1xf32> to vector<64x128xf32>
    %656 = vector.extract_strided_slice %652 {offsets = [0, 1], sizes = [64, 1], strides = [1, 1]} : vector<64x2xf32> to vector<64x1xf32>
    %657 = vector.shape_cast %656 : vector<64x1xf32> to vector<64x1xf32>
    %658 = vector.broadcast %657 : vector<64x1xf32> to vector<64x128xf32>
    %659 = vector.broadcast %0 : vector<1x128xf32> to vector<64x128xf32>
    %660 = arith.mulf %659, %655 : vector<64x128xf32>
    %661 = vector.broadcast %1 : vector<1x128xf32> to vector<64x128xf32>
    %662 = arith.mulf %661, %658 : vector<64x128xf32>
    %663 = arith.addf %660, %662 : vector<64x128xf32>
    %664 = vector.broadcast %2 : vector<1x128xf32> to vector<64x128xf32>
    %665 = arith.subf %663, %664 : vector<64x128xf32>
    %666 = vector.broadcast %3 : vector<1x128xf32> to vector<64x128xf32>
    %667 = arith.mulf %666, %655 : vector<64x128xf32>
    %668 = vector.broadcast %4 : vector<1x128xf32> to vector<64x128xf32>
    %669 = arith.mulf %668, %658 : vector<64x128xf32>
    %670 = arith.addf %667, %669 : vector<64x128xf32>
    %671 = vector.broadcast %5 : vector<1x128xf32> to vector<64x128xf32>
    %672 = arith.subf %670, %671 : vector<64x128xf32>
    %673 = arith.mulf %665, %665 : vector<64x128xf32>
    %674 = arith.mulf %672, %672 : vector<64x128xf32>
    %675 = arith.addf %673, %674 : vector<64x128xf32>
    %676 = vector.broadcast %cst : f32 to vector<64x128xf32>
    %677 = arith.minimumf %675, %676 : vector<64x128xf32>
    %678 = tpu.bitcast %677 : vector<64x128xf32> -> vector<64x128xi32>
    %c-128_i32_149 = arith.constant -128 : i32
    %679 = vector.broadcast %c-128_i32_149 : i32 to vector<64x128xi32>
    %680 = arith.andi %678, %679 : vector<64x128xi32>
    %681 = arith.ori %680, %6 : vector<64x128xi32>
    %682 = tpu.bitcast %681 : vector<64x128xi32> -> vector<64x128xf32>
    %cst_150 = arith.constant 0.000000e+00 : f32
    %683 = vector.broadcast %cst_150 : f32 to vector<64x128xf32>
    %cst_151 = arith.constant dense<0x7F800000> : vector<64xf32>
    %684 = vector.multi_reduction <minimumf>, %682, %cst_151 [1] : vector<64x128xf32> to vector<64xf32>
    %685 = vector.shape_cast %684 : vector<64xf32> to vector<64x1xf32>
    %686 = tpu.bitcast %685 : vector<64x1xf32> -> vector<64x1xi32>
    %c127_i32_152 = arith.constant 127 : i32
    %687 = vector.broadcast %c127_i32_152 : i32 to vector<64x1xi32>
    %688 = arith.andi %686, %687 : vector<64x1xi32>
    %c-128_i32_153 = arith.constant -128 : i32
    %689 = vector.broadcast %c-128_i32_153 : i32 to vector<64x1xi32>
    %690 = arith.andi %686, %689 : vector<64x1xi32>
    %691 = tpu.bitcast %690 : vector<64x1xi32> -> vector<64x1xf32>
    %cst_154 = arith.constant -5.000000e-01 : f32
    %692 = vector.broadcast %cst_154 : f32 to vector<64x1xf32>
    %693 = arith.mulf %692, %691 : vector<64x1xf32>
    %694 = math.exp %693 : vector<64x1xf32>
    %695 = vector.broadcast %688 : vector<64x1xi32> to vector<64x128xi32>
    %696 = arith.cmpi eq, %6, %695 : vector<64x128xi32>
    %697 = vector.shape_cast %694 : vector<64x1xf32> to vector<64x1xf32>
    %698 = vector.broadcast %697 : vector<64x1xf32> to vector<64x128xf32>
    %699 = arith.select %696, %698, %683 : vector<64x128xi1>, vector<64x128xf32>
    %cst_155 = arith.constant 0x7F800000 : f32
    %700 = vector.broadcast %cst_155 : f32 to vector<64x128xf32>
    %701 = arith.select %696, %700, %682 : vector<64x128xi1>, vector<64x128xf32>
    %cst_156 = arith.constant dense<0x7F800000> : vector<64xf32>
    %702 = vector.multi_reduction <minimumf>, %701, %cst_156 [1] : vector<64x128xf32> to vector<64xf32>
    %703 = vector.shape_cast %702 : vector<64xf32> to vector<64x1xf32>
    %704 = tpu.bitcast %703 : vector<64x1xf32> -> vector<64x1xi32>
    %c127_i32_157 = arith.constant 127 : i32
    %705 = vector.broadcast %c127_i32_157 : i32 to vector<64x1xi32>
    %706 = arith.andi %704, %705 : vector<64x1xi32>
    %c-128_i32_158 = arith.constant -128 : i32
    %707 = vector.broadcast %c-128_i32_158 : i32 to vector<64x1xi32>
    %708 = arith.andi %704, %707 : vector<64x1xi32>
    %709 = tpu.bitcast %708 : vector<64x1xi32> -> vector<64x1xf32>
    %cst_159 = arith.constant -5.000000e-01 : f32
    %710 = vector.broadcast %cst_159 : f32 to vector<64x1xf32>
    %711 = arith.mulf %710, %709 : vector<64x1xf32>
    %712 = math.exp %711 : vector<64x1xf32>
    %713 = vector.broadcast %706 : vector<64x1xi32> to vector<64x128xi32>
    %714 = arith.cmpi eq, %6, %713 : vector<64x128xi32>
    %715 = vector.shape_cast %712 : vector<64x1xf32> to vector<64x1xf32>
    %716 = vector.broadcast %715 : vector<64x1xf32> to vector<64x128xf32>
    %717 = arith.select %714, %716, %699 : vector<64x128xi1>, vector<64x128xf32>
    %cst_160 = arith.constant 0x7F800000 : f32
    %718 = vector.broadcast %cst_160 : f32 to vector<64x128xf32>
    %719 = arith.select %714, %718, %701 : vector<64x128xi1>, vector<64x128xf32>
    %cst_161 = arith.constant dense<0x7F800000> : vector<64xf32>
    %720 = vector.multi_reduction <minimumf>, %719, %cst_161 [1] : vector<64x128xf32> to vector<64xf32>
    %721 = vector.shape_cast %720 : vector<64xf32> to vector<64x1xf32>
    %722 = tpu.bitcast %721 : vector<64x1xf32> -> vector<64x1xi32>
    %c127_i32_162 = arith.constant 127 : i32
    %723 = vector.broadcast %c127_i32_162 : i32 to vector<64x1xi32>
    %724 = arith.andi %722, %723 : vector<64x1xi32>
    %c-128_i32_163 = arith.constant -128 : i32
    %725 = vector.broadcast %c-128_i32_163 : i32 to vector<64x1xi32>
    %726 = arith.andi %722, %725 : vector<64x1xi32>
    %727 = tpu.bitcast %726 : vector<64x1xi32> -> vector<64x1xf32>
    %cst_164 = arith.constant -5.000000e-01 : f32
    %728 = vector.broadcast %cst_164 : f32 to vector<64x1xf32>
    %729 = arith.mulf %728, %727 : vector<64x1xf32>
    %730 = math.exp %729 : vector<64x1xf32>
    %731 = vector.broadcast %724 : vector<64x1xi32> to vector<64x128xi32>
    %732 = arith.cmpi eq, %6, %731 : vector<64x128xi32>
    %733 = vector.shape_cast %730 : vector<64x1xf32> to vector<64x1xf32>
    %734 = vector.broadcast %733 : vector<64x1xf32> to vector<64x128xf32>
    %735 = arith.select %732, %734, %717 : vector<64x128xi1>, vector<64x128xf32>
    %cst_165 = arith.constant 0x7F800000 : f32
    %736 = vector.broadcast %cst_165 : f32 to vector<64x128xf32>
    %737 = arith.select %732, %736, %719 : vector<64x128xi1>, vector<64x128xf32>
    %cst_166 = arith.constant dense<0x7F800000> : vector<64xf32>
    %738 = vector.multi_reduction <minimumf>, %737, %cst_166 [1] : vector<64x128xf32> to vector<64xf32>
    %739 = vector.shape_cast %738 : vector<64xf32> to vector<64x1xf32>
    %740 = tpu.bitcast %739 : vector<64x1xf32> -> vector<64x1xi32>
    %c127_i32_167 = arith.constant 127 : i32
    %741 = vector.broadcast %c127_i32_167 : i32 to vector<64x1xi32>
    %742 = arith.andi %740, %741 : vector<64x1xi32>
    %c-128_i32_168 = arith.constant -128 : i32
    %743 = vector.broadcast %c-128_i32_168 : i32 to vector<64x1xi32>
    %744 = arith.andi %740, %743 : vector<64x1xi32>
    %745 = tpu.bitcast %744 : vector<64x1xi32> -> vector<64x1xf32>
    %cst_169 = arith.constant -5.000000e-01 : f32
    %746 = vector.broadcast %cst_169 : f32 to vector<64x1xf32>
    %747 = arith.mulf %746, %745 : vector<64x1xf32>
    %748 = math.exp %747 : vector<64x1xf32>
    %749 = vector.broadcast %742 : vector<64x1xi32> to vector<64x128xi32>
    %750 = arith.cmpi eq, %6, %749 : vector<64x128xi32>
    %751 = vector.shape_cast %748 : vector<64x1xf32> to vector<64x1xf32>
    %752 = vector.broadcast %751 : vector<64x1xf32> to vector<64x128xf32>
    %753 = arith.select %750, %752, %735 : vector<64x128xi1>, vector<64x128xf32>
    %754 = arith.index_cast %650 : i32 to index
    %c0_170 = arith.constant 0 : index
    %755 = vector.load %arg5[%754, %c0_170] : memref<512x128xf32, #tpu.memory_space<vmem>>, vector<64x128xf32>
    tpu.vector_store %arg5[%754, %c0_170], %753 {strides = array<i32>} : memref<512x128xf32, #tpu.memory_space<vmem>>, vector<64x128xf32>,
    %c7_i32 = arith.constant 7 : i32
    %c64_i32_171 = arith.constant 64 : i32
    %756 = arith.muli %c7_i32, %c64_i32_171 : i32
    %757 = tpu.assume_multiple %756, 64 : i32
    %758 = arith.index_cast %757 : i32 to index
    %c0_172 = arith.constant 0 : index
    %759 = vector.load %arg1[%758, %c0_172] : memref<512x2xf32, #tpu.memory_space<vmem>>, vector<64x2xf32>
    %760 = vector.extract_strided_slice %759 {offsets = [0, 0], sizes = [64, 1], strides = [1, 1]} : vector<64x2xf32> to vector<64x1xf32>
    %761 = vector.shape_cast %760 : vector<64x1xf32> to vector<64x1xf32>
    %762 = vector.broadcast %761 : vector<64x1xf32> to vector<64x128xf32>
    %763 = vector.extract_strided_slice %759 {offsets = [0, 1], sizes = [64, 1], strides = [1, 1]} : vector<64x2xf32> to vector<64x1xf32>
    %764 = vector.shape_cast %763 : vector<64x1xf32> to vector<64x1xf32>
    %765 = vector.broadcast %764 : vector<64x1xf32> to vector<64x128xf32>
    %766 = vector.broadcast %0 : vector<1x128xf32> to vector<64x128xf32>
    %767 = arith.mulf %766, %762 : vector<64x128xf32>
    %768 = vector.broadcast %1 : vector<1x128xf32> to vector<64x128xf32>
    %769 = arith.mulf %768, %765 : vector<64x128xf32>
    %770 = arith.addf %767, %769 : vector<64x128xf32>
    %771 = vector.broadcast %2 : vector<1x128xf32> to vector<64x128xf32>
    %772 = arith.subf %770, %771 : vector<64x128xf32>
    %773 = vector.broadcast %3 : vector<1x128xf32> to vector<64x128xf32>
    %774 = arith.mulf %773, %762 : vector<64x128xf32>
    %775 = vector.broadcast %4 : vector<1x128xf32> to vector<64x128xf32>
    %776 = arith.mulf %775, %765 : vector<64x128xf32>
    %777 = arith.addf %774, %776 : vector<64x128xf32>
    %778 = vector.broadcast %5 : vector<1x128xf32> to vector<64x128xf32>
    %779 = arith.subf %777, %778 : vector<64x128xf32>
    %780 = arith.mulf %772, %772 : vector<64x128xf32>
    %781 = arith.mulf %779, %779 : vector<64x128xf32>
    %782 = arith.addf %780, %781 : vector<64x128xf32>
    %783 = vector.broadcast %cst : f32 to vector<64x128xf32>
    %784 = arith.minimumf %782, %783 : vector<64x128xf32>
    %785 = tpu.bitcast %784 : vector<64x128xf32> -> vector<64x128xi32>
    %c-128_i32_173 = arith.constant -128 : i32
    %786 = vector.broadcast %c-128_i32_173 : i32 to vector<64x128xi32>
    %787 = arith.andi %785, %786 : vector<64x128xi32>
    %788 = arith.ori %787, %6 : vector<64x128xi32>
    %789 = tpu.bitcast %788 : vector<64x128xi32> -> vector<64x128xf32>
    %cst_174 = arith.constant 0.000000e+00 : f32
    %790 = vector.broadcast %cst_174 : f32 to vector<64x128xf32>
    %cst_175 = arith.constant dense<0x7F800000> : vector<64xf32>
    %791 = vector.multi_reduction <minimumf>, %789, %cst_175 [1] : vector<64x128xf32> to vector<64xf32>
    %792 = vector.shape_cast %791 : vector<64xf32> to vector<64x1xf32>
    %793 = tpu.bitcast %792 : vector<64x1xf32> -> vector<64x1xi32>
    %c127_i32_176 = arith.constant 127 : i32
    %794 = vector.broadcast %c127_i32_176 : i32 to vector<64x1xi32>
    %795 = arith.andi %793, %794 : vector<64x1xi32>
    %c-128_i32_177 = arith.constant -128 : i32
    %796 = vector.broadcast %c-128_i32_177 : i32 to vector<64x1xi32>
    %797 = arith.andi %793, %796 : vector<64x1xi32>
    %798 = tpu.bitcast %797 : vector<64x1xi32> -> vector<64x1xf32>
    %cst_178 = arith.constant -5.000000e-01 : f32
    %799 = vector.broadcast %cst_178 : f32 to vector<64x1xf32>
    %800 = arith.mulf %799, %798 : vector<64x1xf32>
    %801 = math.exp %800 : vector<64x1xf32>
    %802 = vector.broadcast %795 : vector<64x1xi32> to vector<64x128xi32>
    %803 = arith.cmpi eq, %6, %802 : vector<64x128xi32>
    %804 = vector.shape_cast %801 : vector<64x1xf32> to vector<64x1xf32>
    %805 = vector.broadcast %804 : vector<64x1xf32> to vector<64x128xf32>
    %806 = arith.select %803, %805, %790 : vector<64x128xi1>, vector<64x128xf32>
    %cst_179 = arith.constant 0x7F800000 : f32
    %807 = vector.broadcast %cst_179 : f32 to vector<64x128xf32>
    %808 = arith.select %803, %807, %789 : vector<64x128xi1>, vector<64x128xf32>
    %cst_180 = arith.constant dense<0x7F800000> : vector<64xf32>
    %809 = vector.multi_reduction <minimumf>, %808, %cst_180 [1] : vector<64x128xf32> to vector<64xf32>
    %810 = vector.shape_cast %809 : vector<64xf32> to vector<64x1xf32>
    %811 = tpu.bitcast %810 : vector<64x1xf32> -> vector<64x1xi32>
    %c127_i32_181 = arith.constant 127 : i32
    %812 = vector.broadcast %c127_i32_181 : i32 to vector<64x1xi32>
    %813 = arith.andi %811, %812 : vector<64x1xi32>
    %c-128_i32_182 = arith.constant -128 : i32
    %814 = vector.broadcast %c-128_i32_182 : i32 to vector<64x1xi32>
    %815 = arith.andi %811, %814 : vector<64x1xi32>
    %816 = tpu.bitcast %815 : vector<64x1xi32> -> vector<64x1xf32>
    %cst_183 = arith.constant -5.000000e-01 : f32
    %817 = vector.broadcast %cst_183 : f32 to vector<64x1xf32>
    %818 = arith.mulf %817, %816 : vector<64x1xf32>
    %819 = math.exp %818 : vector<64x1xf32>
    %820 = vector.broadcast %813 : vector<64x1xi32> to vector<64x128xi32>
    %821 = arith.cmpi eq, %6, %820 : vector<64x128xi32>
    %822 = vector.shape_cast %819 : vector<64x1xf32> to vector<64x1xf32>
    %823 = vector.broadcast %822 : vector<64x1xf32> to vector<64x128xf32>
    %824 = arith.select %821, %823, %806 : vector<64x128xi1>, vector<64x128xf32>
    %cst_184 = arith.constant 0x7F800000 : f32
    %825 = vector.broadcast %cst_184 : f32 to vector<64x128xf32>
    %826 = arith.select %821, %825, %808 : vector<64x128xi1>, vector<64x128xf32>
    %cst_185 = arith.constant dense<0x7F800000> : vector<64xf32>
    %827 = vector.multi_reduction <minimumf>, %826, %cst_185 [1] : vector<64x128xf32> to vector<64xf32>
    %828 = vector.shape_cast %827 : vector<64xf32> to vector<64x1xf32>
    %829 = tpu.bitcast %828 : vector<64x1xf32> -> vector<64x1xi32>
    %c127_i32_186 = arith.constant 127 : i32
    %830 = vector.broadcast %c127_i32_186 : i32 to vector<64x1xi32>
    %831 = arith.andi %829, %830 : vector<64x1xi32>
    %c-128_i32_187 = arith.constant -128 : i32
    %832 = vector.broadcast %c-128_i32_187 : i32 to vector<64x1xi32>
    %833 = arith.andi %829, %832 : vector<64x1xi32>
    %834 = tpu.bitcast %833 : vector<64x1xi32> -> vector<64x1xf32>
    %cst_188 = arith.constant -5.000000e-01 : f32
    %835 = vector.broadcast %cst_188 : f32 to vector<64x1xf32>
    %836 = arith.mulf %835, %834 : vector<64x1xf32>
    %837 = math.exp %836 : vector<64x1xf32>
    %838 = vector.broadcast %831 : vector<64x1xi32> to vector<64x128xi32>
    %839 = arith.cmpi eq, %6, %838 : vector<64x128xi32>
    %840 = vector.shape_cast %837 : vector<64x1xf32> to vector<64x1xf32>
    %841 = vector.broadcast %840 : vector<64x1xf32> to vector<64x128xf32>
    %842 = arith.select %839, %841, %824 : vector<64x128xi1>, vector<64x128xf32>
    %cst_189 = arith.constant 0x7F800000 : f32
    %843 = vector.broadcast %cst_189 : f32 to vector<64x128xf32>
    %844 = arith.select %839, %843, %826 : vector<64x128xi1>, vector<64x128xf32>
    %cst_190 = arith.constant dense<0x7F800000> : vector<64xf32>
    %845 = vector.multi_reduction <minimumf>, %844, %cst_190 [1] : vector<64x128xf32> to vector<64xf32>
    %846 = vector.shape_cast %845 : vector<64xf32> to vector<64x1xf32>
    %847 = tpu.bitcast %846 : vector<64x1xf32> -> vector<64x1xi32>
    %c127_i32_191 = arith.constant 127 : i32
    %848 = vector.broadcast %c127_i32_191 : i32 to vector<64x1xi32>
    %849 = arith.andi %847, %848 : vector<64x1xi32>
    %c-128_i32_192 = arith.constant -128 : i32
    %850 = vector.broadcast %c-128_i32_192 : i32 to vector<64x1xi32>
    %851 = arith.andi %847, %850 : vector<64x1xi32>
    %852 = tpu.bitcast %851 : vector<64x1xi32> -> vector<64x1xf32>
    %cst_193 = arith.constant -5.000000e-01 : f32
    %853 = vector.broadcast %cst_193 : f32 to vector<64x1xf32>
    %854 = arith.mulf %853, %852 : vector<64x1xf32>
    %855 = math.exp %854 : vector<64x1xf32>
    %856 = vector.broadcast %849 : vector<64x1xi32> to vector<64x128xi32>
    %857 = arith.cmpi eq, %6, %856 : vector<64x128xi32>
    %858 = vector.shape_cast %855 : vector<64x1xf32> to vector<64x1xf32>
    %859 = vector.broadcast %858 : vector<64x1xf32> to vector<64x128xf32>
    %860 = arith.select %857, %859, %842 : vector<64x128xi1>, vector<64x128xf32>
    %861 = arith.index_cast %757 : i32 to index
    %c0_194 = arith.constant 0 : index
    %862 = vector.load %arg5[%861, %c0_194] : memref<512x128xf32, #tpu.memory_space<vmem>>, vector<64x128xf32>
    tpu.vector_store %arg5[%861, %c0_194], %860 {strides = array<i32>} : memref<512x128xf32, #tpu.memory_space<vmem>>, vector<64x128xf32>,
    %c8_i32 = arith.constant 8 : i32
    %c0_195 = arith.constant 0 : index
    %c0_196 = arith.constant 0 : index
    %863 = vector.load %arg3[%c0_195, %c0_196] : memref<8x128xf32, #tpu.memory_space<vmem>>, vector<8x128xf32>
    %c0_197 = arith.constant 0 : index
    %c0_198 = arith.constant 0 : index
    %864 = vector.load %arg5[%c0_197, %c0_198] : memref<512x128xf32, #tpu.memory_space<vmem>>, vector<512x128xf32>
    %cst_199 = arith.constant dense<0.000000e+00> : vector<8x512xf32>
    %865 = tpu.matmul %863, %864, %cst_199 {dimension_numbers = #tpu.dot_dimension_numbers<[1], [1], [0], [0], [0, 0, 1, 0], [], []>} : vector<8x128xf32>, vector<512x128xf32>, vector<8x512xf32> -> vector<8x512xf32>
    %866 = vector.extract_strided_slice %865 {offsets = [0, 0], sizes = [3, 512], strides = [1, 1]} : vector<8x512xf32> to vector<3x512xf32>
    %867 = vector.extract_strided_slice %865 {offsets = [3, 0], sizes = [1, 512], strides = [1, 1]} : vector<8x512xf32> to vector<1x512xf32>
    %cst_200 = arith.constant 9.99999993E-9 : f32
    %868 = vector.broadcast %cst_200 : f32 to vector<1x512xf32>
    %869 = arith.addf %867, %868 : vector<1x512xf32>
    %870 = vector.broadcast %869 : vector<1x512xf32> to vector<3x512xf32>
    %871 = arith.divf %866, %870 : vector<3x512xf32>
    %c0_201 = arith.constant 0 : index
    %c0_202 = arith.constant 0 : index
    %872 = vector.load %arg4[%c0_201, %c0_202] : memref<3x512xf32, #tpu.memory_space<vmem>>, vector<3x512xf32>
    tpu.vector_store %arg4[%c0_201, %c0_202], %871 {strides = array<i32>} : memref<3x512xf32, #tpu.memory_space<vmem>>, vector<3x512xf32>,
    return
  }
  func.func @transform_0(%arg0: i32) -> (i32, i32) {
    %c0_i32 = arith.constant 0 : i32
    %c0_i32_0 = arith.constant 0 : i32
    return %arg0, %c0_i32 : i32, i32
  }
  func.func @transform_1(%arg0: i32) -> (i32, i32) {
    %c0_i32 = arith.constant 0 : i32
    %c0_i32_0 = arith.constant 0 : i32
    %c0_i32_1 = arith.constant 0 : i32
    return %c0_i32, %c0_i32_0 : i32, i32
  }
  func.func @transform_2(%arg0: i32) -> (i32, i32) {
    %c0_i32 = arith.constant 0 : i32
    %c0_i32_0 = arith.constant 0 : i32
    %c0_i32_1 = arith.constant 0 : i32
    return %c0_i32, %c0_i32_0 : i32, i32
  }
  func.func @transform_3(%arg0: i32) -> (i32, i32) {
    %c0_i32 = arith.constant 0 : i32
    %c0_i32_0 = arith.constant 0 : i32
    return %c0_i32, %arg0 : i32, i32
  }
}

</mosaic_0001>

<llo_original>
// kernel: tpu_custom_call.1
$region0: #{tpu_custom_call.1}
  #allocation0 [shape = 'u32[]', space=smem, size = 0x4, offset = 0x4, fixed_abs, tag = 'smem constant byte address 0x4 - core index']
  #allocation1 [shape = 'u32[144,128]{1,0:T(1,128)}', space=vmem, size = 0x12000, scoped, tag = 'internal scratch']
  #allocation2 [shape = 'f32[512,128]{1,0:T(8,128)}', space=vmem, size = 0x40000, scoped, tag = 'scratch operand']
  %s0 = inlined_call_operand.vmem [shape: f32[1024,2], index: 0, kind: input, shape index: {}]
  %s1 = inlined_call_operand.vmem [shape: f32[8,128], index: 1, kind: input, shape index: {}]
  %s2 = inlined_call_operand.vmem [shape: f32[8,128], index: 2, kind: input, shape index: {}]
  %s3 = inlined_call_operand.hbm [shape: f32[3,1024], index: 3, kind: output, shape index: {}]
  %s4 = sld [smem:[#allocation0]]
  $region45: #{tpu_custom_call.1} parent=0
    _
  %s6 = ssub.s32 1, %s4
  %s7 = scalar_select 0, %s6, %s4
  $region1: #{tpu_custom_call.1} parent=0
    #allocation3 [shape = 'u8[16384]{0}', space=vmem, size = 0x4000, scoped, tag = 'output window, operand 0']
    #allocation4 [shape = 's32[2]{0}', space=sflag, size = 0x8, scoped, tag = 'scoped memory for tpu_custom_call.1']
    %8 = vsyncpa [#allocation4], 0
    %s9 = scalar_lea.sflag [#allocation4], 1
    %10 = vsyncpa %s9, 0
    loop: start=0, step=1, limit=4
    $region2: #{tpu_custom_call.1} parent=1 // loop_pre_header
      _
    $region3: #{tpu_custom_call.1} parent=1 // loop_header
      %s12 = sphi 0, %s16
      %p13 = scmp.ge.s32.totalorder %s12, 4
      %s22 = sphi 0, %s24
      %s25 = sphi 0, %s22
      %s26 = sphi 0, %s25
      %s42 = sphi 0, %s26
      %s46 = sphi 0, %s46
      %s48 = sphi 0, %s46
      %s49 = sphi 0, %s48
      %s63 = sphi 0, %s49
      %s67 = sphi 0, %s67
      %s69 = sphi 0, %s67
      %s70 = sphi 0, %s69
      %s84 = sphi 0, %s70
      %s90 = sphi 0, %s92
      %s93 = sphi 0, %s90
      %s94 = sphi 0, %s93
      %s110 = sphi 0, %s94
    $region4: #{tpu_custom_call.1} parent=1 // loop_header_branch
      %15 = sbr.rel (%p13) target = $region8
    $region5: #{tpu_custom_call.1} parent=1 // loop_body
      %s17 = ssub.s32 %s12, 1
      %s18 = ssub.s32 %s12, 2
      %s19 = sadd.s32 %s12, 1
      %s20 = ssub.s32 %s12, %s19
      %p21 = scmp.eq.s32.totalorder %s20, 0
      %s23 = sadd.s32 %s22, 1
      %s24 = scalar_select %p21, %s22, %s23
      %p27 = pneg %p21
      %p28 = scmp.eq.s32.totalorder %s12, 1
      %p29 = por %p27, %p28
      %p30 = scmp.ne.s32.totalorder %s22, %s25
      %p31 = scmp.eq.s32.totalorder %s12, 0
      %p32 = por %p30, %p31
      %p33 = scmp.ne.s32.totalorder %s22, %s25
      %p34 = scmp.eq.s32.totalorder %s17, 1
      %p35 = por %p33, %p34
      %p36 = scmp.ne.s32.totalorder %s25, %s26
      %p37 = scmp.eq.s32.totalorder %s17, 0
      %p38 = por %p36, %p37
      %p39 = scmp.ne.s32.totalorder %s25, %s26
      %p40 = scmp.eq.s32.totalorder %s18, 1
      %p41 = por %p39, %p40
      %p43 = scmp.ne.s32.totalorder %s26, %s42
      %p44 = scmp.eq.s32.totalorder %s18, 0
      %p45 = por %p43, %p44
      %s47 = sadd.s32 %s46, 1
      %p50 = scmp.eq.s32.totalorder %s12, 1
      %p51 = scmp.ne.s32.totalorder %s46, %s48
      %p52 = scmp.eq.s32.totalorder %s12, 0
      %p53 = por %p51, %p52
      %p54 = scmp.ne.s32.totalorder %s46, %s48
      %p55 = scmp.eq.s32.totalorder %s17, 1
      %p56 = por %p54, %p55
      %p57 = scmp.ne.s32.totalorder %s48, %s49
      %p58 = scmp.eq.s32.totalorder %s17, 0
      %p59 = por %p57, %p58
      %p60 = scmp.ne.s32.totalorder %s48, %s49
      %p61 = scmp.eq.s32.totalorder %s18, 1
      %p62 = por %p60, %p61
      %p64 = scmp.ne.s32.totalorder %s49, %s63
      %p65 = scmp.eq.s32.totalorder %s18, 0
      %p66 = por %p64, %p65
      %s68 = sadd.s32 %s67, 1
      %p71 = scmp.eq.s32.totalorder %s12, 1
      %p72 = scmp.ne.s32.totalorder %s67, %s69
      %p73 = scmp.eq.s32.totalorder %s12, 0
      %p74 = por %p72, %p73
      %p75 = scmp.ne.s32.totalorder %s67, %s69
      %p76 = scmp.eq.s32.totalorder %s17, 1
      %p77 = por %p75, %p76
      %p78 = scmp.ne.s32.totalorder %s69, %s70
      %p79 = scmp.eq.s32.totalorder %s17, 0
      %p80 = por %p78, %p79
      %p81 = scmp.ne.s32.totalorder %s69, %s70
      %p82 = scmp.eq.s32.totalorder %s18, 1
      %p83 = por %p81, %p82
      %p85 = scmp.ne.s32.totalorder %s70, %s84
      %p86 = scmp.eq.s32.totalorder %s18, 0
      %p87 = por %p85, %p86
      %s88 = ssub.s32 %s12, %s19
      %p89 = scmp.eq.s32.totalorder %s88, 0
      %s91 = sadd.s32 %s90, 1
      %s92 = scalar_select %p89, %s90, %s91
      %p95 = pneg %p89
      %p96 = scmp.eq.s32.totalorder %s12, 1
      %p97 = por %p95, %p96
      %p98 = scmp.ne.s32.totalorder %s90, %s93
      %p99 = scmp.eq.s32.totalorder %s12, 0
      %p100 = por %p98, %p99
      %p101 = scmp.ne.s32.totalorder %s90, %s93
      %p102 = scmp.eq.s32.totalorder %s17, 1
      %p103 = por %p101, %p102
      %p104 = scmp.ne.s32.totalorder %s93, %s94
      %p105 = scmp.eq.s32.totalorder %s17, 0
      %p106 = por %p104, %p105
      %p107 = scmp.ne.s32.totalorder %s93, %s94
      %p108 = scmp.eq.s32.totalorder %s18, 1
      %p109 = por %p107, %p108
      %p111 = scmp.ne.s32.totalorder %s94, %s110
      %p112 = scmp.eq.s32.totalorder %s18, 0
      %p113 = por %p111, %p112
      %p114 = scmp.le.s32.totalorder 1, %s12
      %p115 = scmp.lt.s32.totalorder %s12, 3
      %p116 = pnand %p114, %p115
      %p117 = pneg %p116
      // Predicated region
      $region9: #{tpu_custom_call.1} parent=5 // pred_check
        _
      $region10: #{tpu_custom_call.1} parent=5 // pred_check_branch
        %119 = sbr.rel (%p116) target = $region12
      $region11: #{tpu_custom_call.1} parent=5 // pred_region
        %s120 = ssub.s32 %s12, 1
        // Predicated region
        $region13: #{tpu_custom_call.1} parent=11 // pred_check
          %p121 = pneg %p59
        $region14: #{tpu_custom_call.1} parent=11 // pred_check_branch
          %123 = sbr.rel (%p121) target = $region16
        $region15: #{tpu_custom_call.1} parent=11 // pred_region
          _
        $region16: #{tpu_custom_call.1} parent=11 // pred_fallthru
          _
        // Predicated region
        $region17: #{tpu_custom_call.1} parent=11 // pred_check
          %p124 = pneg %p80
        $region18: #{tpu_custom_call.1} parent=11 // pred_check_branch
          %126 = sbr.rel (%p124) target = $region20
        $region19: #{tpu_custom_call.1} parent=11 // pred_region
          _
        $region20: #{tpu_custom_call.1} parent=11 // pred_fallthru
          _
      $region12: #{tpu_custom_call.1} parent=5 // pred_fallthru
        _
      %p127 = scmp.lt.s32.totalorder %s12, 2
      // Predicated region
      $region21: #{tpu_custom_call.1} parent=5 // pred_check
        %p128 = pneg %p127
      $region22: #{tpu_custom_call.1} parent=5 // pred_check_branch
        %130 = sbr.rel (%p128) target = $region24
      $region23: #{tpu_custom_call.1} parent=5 // pred_region
        // Predicated region
        $region25: #{tpu_custom_call.1} parent=23 // pred_check
          %p131 = pneg %p32
        $region26: #{tpu_custom_call.1} parent=23 // pred_check_branch
          %133 = sbr.rel (%p131) target = $region28
        $region27: #{tpu_custom_call.1} parent=23 // pred_region
          %s134 = smul.u32 64, %s12
          %p135 = scmp.lt.s32.totalorder %s134, 127
          %s136 = scalar_select %p135, %s134, 127
          %s137 = smul.addr %s136, 8
          %s138 = scalar_lea.vmem %s0, %s137
          %s139 = smul.u32 64, %s12
        $region28: #{tpu_custom_call.1} parent=23 // pred_fallthru
          _
      $region24: #{tpu_custom_call.1} parent=5 // pred_fallthru
        _
      %p140 = scmp.le.s32.totalorder 1, %s12
      %p141 = scmp.lt.s32.totalorder %s12, 3
      %p142 = pnand %p140, %p141
      %p143 = pneg %p142
      // Predicated region
      $region29: #{tpu_custom_call.1} parent=5 // pred_check
        _
      $region30: #{tpu_custom_call.1} parent=5 // pred_check_branch
        %145 = sbr.rel (%p142) target = $region32
      $region31: #{tpu_custom_call.1} parent=5 // pred_region
        %s146 = ssub.s32 %s12, 1
        %s147 = smul.u32 64, %s17
        %p148 = scmp.lt.s32.totalorder %s147, 127
        %s149 = scalar_select %p148, %s147, 127
        %s150 = smul.addr %s149, 8
        %s151 = scalar_lea.vmem %s0, %s150
        %p152 = pneg %p38
        %p153 = pneg %p35
        %p154 = pneg %p59
        %p155 = pneg %p56
        %p156 = pneg %p80
        %p157 = pneg %p77
        %p158 = pneg %p106
        %p159 = pneg %p103
        %s160 = sand.u32 %s93, 1
        %s161 = scalar_lea.sflag [#allocation4], %s160
        %s162 = sand.u32 %s93, 1
        %s163 = smul.addr %s162, 16
        %s164 = scalar_lea.vmem [#allocation3], %s163
        %s165 = smul.u32 64, %s17
        %p166 = scmp.lt.s32.totalorder %s165, 127
        %s167 = scalar_select %p166, %s165, 127
        %s168 = smul.addr %s167, 8
        %s169 = scalar_lea.vmem %s0, %s168
        %s170 = smul.u32 64, %s17
        %s171 = smul.u32 4, %s17
        %v172 = vld [vmem:[%s1] sm:$0x1]
        %v173 = vld [vmem:[%s1 + $0x1] sm:$0x1]
        %v174 = vld [vmem:[%s1 + $0x2] sm:$0x1]
        %v175 = vld [vmem:[%s1 + $0x3] sm:$0x1]
        %v176 = vld [vmem:[%s1 + $0x4] sm:$0x1]
        %v177 = vld [vmem:[%s1 + $0x5] sm:$0x1]
        %v178 = vlaneseq
        %v179 = vand.u32 %v178, 127
        %v180 = vld [vmem:[%s169] sm:$0xff]
        %v181 = vld [vmem:[%s169 + $0x8] sm:$0xff]
        %v182 = vld [vmem:[%s169 + $0x10] sm:$0xff]
        %v183 = vld [vmem:[%s169 + $0x18] sm:$0xff]
        %v184 = vld [vmem:[%s169 + $0x20] sm:$0xff]
        %v185 = vld [vmem:[%s169 + $0x28] sm:$0xff]
        %v186 = vld [vmem:[%s169 + $0x30] sm:$0xff]
        %v187 = vld [vmem:[%s169 + $0x38] sm:$0xff]
        %189 = vset.pattern.permute.xlu0 0
        %190 = vperm.xlu0 %189, %v180
        %v191 = vpop.permute.xlu0 %190
        %194 = vset.pattern.permute.xlu0 0
        %195 = vperm.xlu0 %194, %v181
        %v196 = vpop.permute.xlu0 %195
        %199 = vset.pattern.permute.xlu0 0
        %200 = vperm.xlu0 %199, %v182
        %v201 = vpop.permute.xlu0 %200
        %204 = vset.pattern.permute.xlu0 0
        %205 = vperm.xlu0 %204, %v183
        %v206 = vpop.permute.xlu0 %205
        %209 = vset.pattern.permute.xlu0 0
        %210 = vperm.xlu0 %209, %v184
        %v211 = vpop.permute.xlu0 %210
        %214 = vset.pattern.permute.xlu0 0
        %215 = vperm.xlu0 %214, %v185
        %v216 = vpop.permute.xlu0 %215
        %219 = vset.pattern.permute.xlu0 0
        %220 = vperm.xlu0 %219, %v186
        %v221 = vpop.permute.xlu0 %220
        %224 = vset.pattern.permute.xlu0 0
        %225 = vperm.xlu0 %224, %v187
        %v226 = vpop.permute.xlu0 %225
        %228 = vset.pattern.permute.xlu0 1
        %229 = vperm.xlu0 %228, %v180
        %v230 = vpop.permute.xlu0 %229
        %232 = vset.pattern.permute.xlu0 1
        %233 = vperm.xlu0 %232, %v181
        %v234 = vpop.permute.xlu0 %233
        %236 = vset.pattern.permute.xlu0 1
        %237 = vperm.xlu0 %236, %v182
        %v238 = vpop.permute.xlu0 %237
        %240 = vset.pattern.permute.xlu0 1
        %241 = vperm.xlu0 %240, %v183
        %v242 = vpop.permute.xlu0 %241
        %244 = vset.pattern.permute.xlu0 1
        %245 = vperm.xlu0 %244, %v184
        %v246 = vpop.permute.xlu0 %245
        %248 = vset.pattern.permute.xlu0 1
        %249 = vperm.xlu0 %248, %v185
        %v250 = vpop.permute.xlu0 %249
        %252 = vset.pattern.permute.xlu0 1
        %253 = vperm.xlu0 %252, %v186
        %v254 = vpop.permute.xlu0 %253
        %256 = vset.pattern.permute.xlu0 1
        %257 = vperm.xlu0 %256, %v187
        %v258 = vpop.permute.xlu0 %257
        %v260 = vlaneseq
        %v261 = vshrl.u32 %v260, 7
        %v262 = vsub.s32 0, %v261
        %v263 = vrot.slane %v172, %v262
        %v264 = vmul.f32 %v263, %v191
        %v265 = vmul.f32 %v263, %v196
        %v266 = vmul.f32 %v263, %v201
        %v267 = vmul.f32 %v263, %v206
        %v268 = vmul.f32 %v263, %v211
        %v269 = vmul.f32 %v263, %v216
        %v270 = vmul.f32 %v263, %v221
        %v271 = vmul.f32 %v263, %v226
        %v272 = vlaneseq
        %v273 = vshrl.u32 %v272, 7
        %v274 = vsub.s32 0, %v273
        %v275 = vrot.slane %v173, %v274
        %v276 = vmul.f32 %v275, %v230
        %v277 = vmul.f32 %v275, %v234
        %v278 = vmul.f32 %v275, %v238
        %v279 = vmul.f32 %v275, %v242
        %v280 = vmul.f32 %v275, %v246
        %v281 = vmul.f32 %v275, %v250
        %v282 = vmul.f32 %v275, %v254
        %v283 = vmul.f32 %v275, %v258
        %v284 = vadd.f32 %v264, %v276
        %v285 = vadd.f32 %v265, %v277
        %v286 = vadd.f32 %v266, %v278
        %v287 = vadd.f32 %v267, %v279
        %v288 = vadd.f32 %v268, %v280
        %v289 = vadd.f32 %v269, %v281
        %v290 = vadd.f32 %v270, %v282
        %v291 = vadd.f32 %v271, %v283
        %v292 = vlaneseq
        %v293 = vshrl.u32 %v292, 7
        %v294 = vsub.s32 0, %v293
        %v295 = vrot.slane %v174, %v294
        %v296 = vsub.f32 %v284, %v295
        %v297 = vsub.f32 %v285, %v295
        %v298 = vsub.f32 %v286, %v295
        %v299 = vsub.f32 %v287, %v295
        %v300 = vsub.f32 %v288, %v295
        %v301 = vsub.f32 %v289, %v295
        %v302 = vsub.f32 %v290, %v295
        %v303 = vsub.f32 %v291, %v295
        %v304 = vlaneseq
        %v305 = vshrl.u32 %v304, 7
        %v306 = vsub.s32 0, %v305
        %v307 = vrot.slane %v175, %v306
        %v308 = vmul.f32 %v307, %v191
        %v309 = vmul.f32 %v307, %v196
        %v310 = vmul.f32 %v307, %v201
        %v311 = vmul.f32 %v307, %v206
        %v312 = vmul.f32 %v307, %v211
        %v313 = vmul.f32 %v307, %v216
        %v314 = vmul.f32 %v307, %v221
        %v315 = vmul.f32 %v307, %v226
        %v316 = vlaneseq
        %v317 = vshrl.u32 %v316, 7
        %v318 = vsub.s32 0, %v317
        %v319 = vrot.slane %v176, %v318
        %v320 = vmul.f32 %v319, %v230
        %v321 = vmul.f32 %v319, %v234
        %v322 = vmul.f32 %v319, %v238
        %v323 = vmul.f32 %v319, %v242
        %v324 = vmul.f32 %v319, %v246
        %v325 = vmul.f32 %v319, %v250
        %v326 = vmul.f32 %v319, %v254
        %v327 = vmul.f32 %v319, %v258
        %v328 = vadd.f32 %v308, %v320
        %v329 = vadd.f32 %v309, %v321
        %v330 = vadd.f32 %v310, %v322
        %v331 = vadd.f32 %v311, %v323
        %v332 = vadd.f32 %v312, %v324
        %v333 = vadd.f32 %v313, %v325
        %v334 = vadd.f32 %v314, %v326
        %v335 = vadd.f32 %v315, %v327
        %v336 = vlaneseq
        %v337 = vshrl.u32 %v336, 7
        %v338 = vsub.s32 0, %v337
        %v339 = vrot.slane %v177, %v338
        %v340 = vsub.f32 %v328, %v339
        %v341 = vsub.f32 %v329, %v339
        %v342 = vsub.f32 %v330, %v339
        %v343 = vsub.f32 %v331, %v339
        %v344 = vsub.f32 %v332, %v339
        %v345 = vsub.f32 %v333, %v339
        %v346 = vsub.f32 %v334, %v339
        %v347 = vsub.f32 %v335, %v339
        %v348 = vmul.f32 %v296, %v296
        %v349 = vmul.f32 %v297, %v297
        %v350 = vmul.f32 %v298, %v298
        %v351 = vmul.f32 %v299, %v299
        %v352 = vmul.f32 %v300, %v300
        %v353 = vmul.f32 %v301, %v301
        %v354 = vmul.f32 %v302, %v302
        %v355 = vmul.f32 %v303, %v303
        %v356 = vmul.f32 %v340, %v340
        %v357 = vmul.f32 %v341, %v341
        %v358 = vmul.f32 %v342, %v342
        %v359 = vmul.f32 %v343, %v343
        %v360 = vmul.f32 %v344, %v344
        %v361 = vmul.f32 %v345, %v345
        %v362 = vmul.f32 %v346, %v346
        %v363 = vmul.f32 %v347, %v347
        %v364 = vadd.f32 %v348, %v356
        %v365 = vadd.f32 %v349, %v357
        %v366 = vadd.f32 %v350, %v358
        %v367 = vadd.f32 %v351, %v359
        %v368 = vadd.f32 %v352, %v360
        %v369 = vadd.f32 %v353, %v361
        %v370 = vadd.f32 %v354, %v362
        %v371 = vadd.f32 %v355, %v363
        %v372 = vmin.f32 %v364, 1e+30
        %v373 = vmin.f32 %v365, 1e+30
        %v374 = vmin.f32 %v366, 1e+30
        %v375 = vmin.f32 %v367, 1e+30
        %v376 = vmin.f32 %v368, 1e+30
        %v377 = vmin.f32 %v369, 1e+30
        %v378 = vmin.f32 %v370, 1e+30
        %v379 = vmin.f32 %v371, 1e+30
        %v388 = vand.u32 %v372, 4294967168
        %v389 = vand.u32 %v373, 4294967168
        %v390 = vand.u32 %v374, 4294967168
        %v391 = vand.u32 %v375, 4294967168
        %v392 = vand.u32 %v376, 4294967168
        %v393 = vand.u32 %v377, 4294967168
        %v394 = vand.u32 %v378, 4294967168
        %v395 = vand.u32 %v379, 4294967168
        %v396 = vor.u32 %v388, %v179
        %v397 = vor.u32 %v389, %v179
        %v398 = vor.u32 %v390, %v179
        %v399 = vor.u32 %v391, %v179
        %v400 = vor.u32 %v392, %v179
        %v401 = vor.u32 %v393, %v179
        %v402 = vor.u32 %v394, %v179
        %v403 = vor.u32 %v395, %v179
        %412 = vmin.xlane.f32.xlu0 %v396
        %v413 = vpop.xlane.xlu0 %412
        %414 = vmin.xlane.f32.xlu0 %v397
        %v415 = vpop.xlane.xlu0 %414
        %416 = vmin.xlane.f32.xlu0 %v398
        %v417 = vpop.xlane.xlu0 %416
        %418 = vmin.xlane.f32.xlu0 %v399
        %v419 = vpop.xlane.xlu0 %418
        %420 = vmin.xlane.f32.xlu0 %v400
        %v421 = vpop.xlane.xlu0 %420
        %422 = vmin.xlane.f32.xlu0 %v401
        %v423 = vpop.xlane.xlu0 %422
        %424 = vmin.xlane.f32.xlu0 %v402
        %v425 = vpop.xlane.xlu0 %424
        %426 = vmin.xlane.f32.xlu0 %v403
        %v427 = vpop.xlane.xlu0 %426
        %v436 = vand.u32 %v413, 127
        %v437 = vand.u32 %v415, 127
        %v438 = vand.u32 %v417, 127
        %v439 = vand.u32 %v419, 127
        %v440 = vand.u32 %v421, 127
        %v441 = vand.u32 %v423, 127
        %v442 = vand.u32 %v425, 127
        %v443 = vand.u32 %v427, 127
        %v444 = vand.u32 %v413, 4294967168
        %v445 = vand.u32 %v415, 4294967168
        %v446 = vand.u32 %v417, 4294967168
        %v447 = vand.u32 %v419, 4294967168
        %v448 = vand.u32 %v421, 4294967168
        %v449 = vand.u32 %v423, 4294967168
        %v450 = vand.u32 %v425, 4294967168
        %v451 = vand.u32 %v427, 4294967168
        %v460 = vmul.f32 %v444, -0.5
        %v461 = vmul.f32 %v445, -0.5
        %v462 = vmul.f32 %v446, -0.5
        %v463 = vmul.f32 %v447, -0.5
        %v464 = vmul.f32 %v448, -0.5
        %v465 = vmul.f32 %v449, -0.5
        %v466 = vmul.f32 %v450, -0.5
        %v467 = vmul.f32 %v451, -0.5
        %v468 = vmul.f32 %v460, 1.442695
        %v469 = vpow.pop %v468
        %v470 = vmul.f32 %v461, 1.442695
        %v471 = vpow.pop %v470
        %v472 = vmul.f32 %v462, 1.442695
        %v473 = vpow.pop %v472
        %v474 = vmul.f32 %v463, 1.442695
        %v475 = vpow.pop %v474
        %v476 = vmul.f32 %v464, 1.442695
        %v477 = vpow.pop %v476
        %v478 = vmul.f32 %v465, 1.442695
        %v479 = vpow.pop %v478
        %v480 = vmul.f32 %v466, 1.442695
        %v481 = vpow.pop %v480
        %v482 = vmul.f32 %v467, 1.442695
        %v483 = vpow.pop %v482
        %vm484 = vcmp.eq.s32.totalorder %v179, %v436
        %vm485 = vcmp.eq.s32.totalorder %v179, %v437
        %vm486 = vcmp.eq.s32.totalorder %v179, %v438
        %vm487 = vcmp.eq.s32.totalorder %v179, %v439
        %vm488 = vcmp.eq.s32.totalorder %v179, %v440
        %vm489 = vcmp.eq.s32.totalorder %v179, %v441
        %vm490 = vcmp.eq.s32.totalorder %v179, %v442
        %vm491 = vcmp.eq.s32.totalorder %v179, %v443
        %v492 = vsel %vm484, %v469, 0.0
        %v493 = vsel %vm485, %v471, 0.0
        %v494 = vsel %vm486, %v473, 0.0
        %v495 = vsel %vm487, %v475, 0.0
        %v496 = vsel %vm488, %v477, 0.0
        %v497 = vsel %vm489, %v479, 0.0
        %v498 = vsel %vm490, %v481, 0.0
        %v499 = vsel %vm491, %v483, 0.0
        %v500 = vsel %vm484, inf, %v396
        %v501 = vsel %vm485, inf, %v397
        %v502 = vsel %vm486, inf, %v398
        %v503 = vsel %vm487, inf, %v399
        %v504 = vsel %vm488, inf, %v400
        %v505 = vsel %vm489, inf, %v401
        %v506 = vsel %vm490, inf, %v402
        %v507 = vsel %vm491, inf, %v403
        %508 = vmin.xlane.f32.xlu0 %v500
        %v509 = vpop.xlane.xlu0 %508
        %510 = vmin.xlane.f32.xlu0 %v501
        %v511 = vpop.xlane.xlu0 %510
        %512 = vmin.xlane.f32.xlu0 %v502
        %v513 = vpop.xlane.xlu0 %512
        %514 = vmin.xlane.f32.xlu0 %v503
        %v515 = vpop.xlane.xlu0 %514
        %516 = vmin.xlane.f32.xlu0 %v504
        %v517 = vpop.xlane.xlu0 %516
        %518 = vmin.xlane.f32.xlu0 %v505
        %v519 = vpop.xlane.xlu0 %518
        %520 = vmin.xlane.f32.xlu0 %v506
        %v521 = vpop.xlane.xlu0 %520
        %522 = vmin.xlane.f32.xlu0 %v507
        %v523 = vpop.xlane.xlu0 %522
        %v532 = vand.u32 %v509, 127
        %v533 = vand.u32 %v511, 127
        %v534 = vand.u32 %v513, 127
        %v535 = vand.u32 %v515, 127
        %v536 = vand.u32 %v517, 127
        %v537 = vand.u32 %v519, 127
        %v538 = vand.u32 %v521, 127
        %v539 = vand.u32 %v523, 127
        %v540 = vand.u32 %v509, 4294967168
        %v541 = vand.u32 %v511, 4294967168
        %v542 = vand.u32 %v513, 4294967168
        %v543 = vand.u32 %v515, 4294967168
        %v544 = vand.u32 %v517, 4294967168
        %v545 = vand.u32 %v519, 4294967168
        %v546 = vand.u32 %v521, 4294967168
        %v547 = vand.u32 %v523, 4294967168
        %v556 = vmul.f32 %v540, -0.5
        %v557 = vmul.f32 %v541, -0.5
        %v558 = vmul.f32 %v542, -0.5
        %v559 = vmul.f32 %v543, -0.5
        %v560 = vmul.f32 %v544, -0.5
        %v561 = vmul.f32 %v545, -0.5
        %v562 = vmul.f32 %v546, -0.5
        %v563 = vmul.f32 %v547, -0.5
        %v564 = vmul.f32 %v556, 1.442695
        %v565 = vpow.pop %v564
        %v566 = vmul.f32 %v557, 1.442695
        %v567 = vpow.pop %v566
        %v568 = vmul.f32 %v558, 1.442695
        %v569 = vpow.pop %v568
        %v570 = vmul.f32 %v559, 1.442695
        %v571 = vpow.pop %v570
        %v572 = vmul.f32 %v560, 1.442695
        %v573 = vpow.pop %v572
        %v574 = vmul.f32 %v561, 1.442695
        %v575 = vpow.pop %v574
        %v576 = vmul.f32 %v562, 1.442695
        %v577 = vpow.pop %v576
        %v578 = vmul.f32 %v563, 1.442695
        %v579 = vpow.pop %v578
        %vm580 = vcmp.eq.s32.totalorder %v179, %v532
        %vm581 = vcmp.eq.s32.totalorder %v179, %v533
        %vm582 = vcmp.eq.s32.totalorder %v179, %v534
        %vm583 = vcmp.eq.s32.totalorder %v179, %v535
        %vm584 = vcmp.eq.s32.totalorder %v179, %v536
        %vm585 = vcmp.eq.s32.totalorder %v179, %v537
        %vm586 = vcmp.eq.s32.totalorder %v179, %v538
        %vm587 = vcmp.eq.s32.totalorder %v179, %v539
        %v588 = vsel %vm580, %v565, %v492
        %v589 = vsel %vm581, %v567, %v493
        %v590 = vsel %vm582, %v569, %v494
        %v591 = vsel %vm583, %v571, %v495
        %v592 = vsel %vm584, %v573, %v496
        %v593 = vsel %vm585, %v575, %v497
        %v594 = vsel %vm586, %v577, %v498
        %v595 = vsel %vm587, %v579, %v499
        %v596 = vsel %vm580, inf, %v500
        %v597 = vsel %vm581, inf, %v501
        %v598 = vsel %vm582, inf, %v502
        %v599 = vsel %vm583, inf, %v503
        %v600 = vsel %vm584, inf, %v504
        %v601 = vsel %vm585, inf, %v505
        %v602 = vsel %vm586, inf, %v506
        %v603 = vsel %vm587, inf, %v507
        %604 = vmin.xlane.f32.xlu0 %v596
        %v605 = vpop.xlane.xlu0 %604
        %606 = vmin.xlane.f32.xlu0 %v597
        %v607 = vpop.xlane.xlu0 %606
        %608 = vmin.xlane.f32.xlu0 %v598
        %v609 = vpop.xlane.xlu0 %608
        %610 = vmin.xlane.f32.xlu0 %v599
        %v611 = vpop.xlane.xlu0 %610
        %612 = vmin.xlane.f32.xlu0 %v600
        %v613 = vpop.xlane.xlu0 %612
        %614 = vmin.xlane.f32.xlu0 %v601
        %v615 = vpop.xlane.xlu0 %614
        %616 = vmin.xlane.f32.xlu0 %v602
        %v617 = vpop.xlane.xlu0 %616
        %618 = vmin.xlane.f32.xlu0 %v603
        %v619 = vpop.xlane.xlu0 %618
        %v628 = vand.u32 %v605, 127
        %v629 = vand.u32 %v607, 127
        %v630 = vand.u32 %v609, 127
        %v631 = vand.u32 %v611, 127
        %v632 = vand.u32 %v613, 127
        %v633 = vand.u32 %v615, 127
        %v634 = vand.u32 %v617, 127
        %v635 = vand.u32 %v619, 127
        %v636 = vand.u32 %v605, 4294967168
        %v637 = vand.u32 %v607, 4294967168
        %v638 = vand.u32 %v609, 4294967168
        %v639 = vand.u32 %v611, 4294967168
        %v640 = vand.u32 %v613, 4294967168
        %v641 = vand.u32 %v615, 4294967168
        %v642 = vand.u32 %v617, 4294967168
        %v643 = vand.u32 %v619, 4294967168
        %v652 = vmul.f32 %v636, -0.5
        %v653 = vmul.f32 %v637, -0.5
        %v654 = vmul.f32 %v638, -0.5
        %v655 = vmul.f32 %v639, -0.5
        %v656 = vmul.f32 %v640, -0.5
        %v657 = vmul.f32 %v641, -0.5
        %v658 = vmul.f32 %v642, -0.5
        %v659 = vmul.f32 %v643, -0.5
        %v660 = vmul.f32 %v652, 1.442695
        %v661 = vpow.pop %v660
        %v662 = vmul.f32 %v653, 1.442695
        %v663 = vpow.pop %v662
        %v664 = vmul.f32 %v654, 1.442695
        %v665 = vpow.pop %v664
        %v666 = vmul.f32 %v655, 1.442695
        %v667 = vpow.pop %v666
        %v668 = vmul.f32 %v656, 1.442695
        %v669 = vpow.pop %v668
        %v670 = vmul.f32 %v657, 1.442695
        %v671 = vpow.pop %v670
        %v672 = vmul.f32 %v658, 1.442695
        %v673 = vpow.pop %v672
        %v674 = vmul.f32 %v659, 1.442695
        %v675 = vpow.pop %v674
        %vm676 = vcmp.eq.s32.totalorder %v179, %v628
        %vm677 = vcmp.eq.s32.totalorder %v179, %v629
        %vm678 = vcmp.eq.s32.totalorder %v179, %v630
        %vm679 = vcmp.eq.s32.totalorder %v179, %v631
        %vm680 = vcmp.eq.s32.totalorder %v179, %v632
        %vm681 = vcmp.eq.s32.totalorder %v179, %v633
        %vm682 = vcmp.eq.s32.totalorder %v179, %v634
        %vm683 = vcmp.eq.s32.totalorder %v179, %v635
        %v684 = vsel %vm676, %v661, %v588
        %v685 = vsel %vm677, %v663, %v589
        %v686 = vsel %vm678, %v665, %v590
        %v687 = vsel %vm679, %v667, %v591
        %v688 = vsel %vm680, %v669, %v592
        %v689 = vsel %vm681, %v671, %v593
        %v690 = vsel %vm682, %v673, %v594
        %v691 = vsel %vm683, %v675, %v595
        %v692 = vsel %vm676, inf, %v596
        %v693 = vsel %vm677, inf, %v597
        %v694 = vsel %vm678, inf, %v598
        %v695 = vsel %vm679, inf, %v599
        %v696 = vsel %vm680, inf, %v600
        %v697 = vsel %vm681, inf, %v601
        %v698 = vsel %vm682, inf, %v602
        %v699 = vsel %vm683, inf, %v603
        %700 = vmin.xlane.f32.xlu0 %v692
        %v701 = vpop.xlane.xlu0 %700
        %702 = vmin.xlane.f32.xlu0 %v693
        %v703 = vpop.xlane.xlu0 %702
        %704 = vmin.xlane.f32.xlu0 %v694
        %v705 = vpop.xlane.xlu0 %704
        %706 = vmin.xlane.f32.xlu0 %v695
        %v707 = vpop.xlane.xlu0 %706
        %708 = vmin.xlane.f32.xlu0 %v696
        %v709 = vpop.xlane.xlu0 %708
        %710 = vmin.xlane.f32.xlu0 %v697
        %v711 = vpop.xlane.xlu0 %710
        %712 = vmin.xlane.f32.xlu0 %v698
        %v713 = vpop.xlane.xlu0 %712
        %714 = vmin.xlane.f32.xlu0 %v699
        %v715 = vpop.xlane.xlu0 %714
        %v724 = vand.u32 %v701, 127
        %v725 = vand.u32 %v703, 127
        %v726 = vand.u32 %v705, 127
        %v727 = vand.u32 %v707, 127
        %v728 = vand.u32 %v709, 127
        %v729 = vand.u32 %v711, 127
        %v730 = vand.u32 %v713, 127
        %v731 = vand.u32 %v715, 127
        %v732 = vand.u32 %v701, 4294967168
        %v733 = vand.u32 %v703, 4294967168
        %v734 = vand.u32 %v705, 4294967168
        %v735 = vand.u32 %v707, 4294967168
        %v736 = vand.u32 %v709, 4294967168
        %v737 = vand.u32 %v711, 4294967168
        %v738 = vand.u32 %v713, 4294967168
        %v739 = vand.u32 %v715, 4294967168
        %v748 = vmul.f32 %v732, -0.5
        %v749 = vmul.f32 %v733, -0.5
        %v750 = vmul.f32 %v734, -0.5
        %v751 = vmul.f32 %v735, -0.5
        %v752 = vmul.f32 %v736, -0.5
        %v753 = vmul.f32 %v737, -0.5
        %v754 = vmul.f32 %v738, -0.5
        %v755 = vmul.f32 %v739, -0.5
        %v756 = vmul.f32 %v748, 1.442695
        %v757 = vpow.pop %v756
        %v758 = vmul.f32 %v749, 1.442695
        %v759 = vpow.pop %v758
        %v760 = vmul.f32 %v750, 1.442695
        %v761 = vpow.pop %v760
        %v762 = vmul.f32 %v751, 1.442695
        %v763 = vpow.pop %v762
        %v764 = vmul.f32 %v752, 1.442695
        %v765 = vpow.pop %v764
        %v766 = vmul.f32 %v753, 1.442695
        %v767 = vpow.pop %v766
        %v768 = vmul.f32 %v754, 1.442695
        %v769 = vpow.pop %v768
        %v770 = vmul.f32 %v755, 1.442695
        %v771 = vpow.pop %v770
        %vm772 = vcmp.eq.s32.totalorder %v179, %v724
        %vm773 = vcmp.eq.s32.totalorder %v179, %v725
        %vm774 = vcmp.eq.s32.totalorder %v179, %v726
        %vm775 = vcmp.eq.s32.totalorder %v179, %v727
        %vm776 = vcmp.eq.s32.totalorder %v179, %v728
        %vm777 = vcmp.eq.s32.totalorder %v179, %v729
        %vm778 = vcmp.eq.s32.totalorder %v179, %v730
        %vm779 = vcmp.eq.s32.totalorder %v179, %v731
        %v780 = vsel %vm772, %v757, %v684
        %v781 = vsel %vm773, %v759, %v685
        %v782 = vsel %vm774, %v761, %v686
        %v783 = vsel %vm775, %v763, %v687
        %v784 = vsel %vm776, %v765, %v688
        %v785 = vsel %vm777, %v767, %v689
        %v786 = vsel %vm778, %v769, %v690
        %v787 = vsel %vm779, %v771, %v691
        %788 = vst [vmem:[#allocation2] sm:$0xff] %v780
        %789 = vst [vmem:[#allocation2 + $0x8] sm:$0xff] %v781
        %790 = vst [vmem:[#allocation2 + $0x10] sm:$0xff] %v782
        %791 = vst [vmem:[#allocation2 + $0x18] sm:$0xff] %v783
        %792 = vst [vmem:[#allocation2 + $0x20] sm:$0xff] %v784
        %793 = vst [vmem:[#allocation2 + $0x28] sm:$0xff] %v785
        %794 = vst [vmem:[#allocation2 + $0x30] sm:$0xff] %v786
        %795 = vst [vmem:[#allocation2 + $0x38] sm:$0xff] %v787
        %s796 = scalar_lea.vmem %s169, 64
        %v797 = vld [vmem:[%s796] sm:$0xff]
        %v798 = vld [vmem:[%s796 + $0x8] sm:$0xff]
        %v799 = vld [vmem:[%s796 + $0x10] sm:$0xff]
        %v800 = vld [vmem:[%s796 + $0x18] sm:$0xff]
        %v801 = vld [vmem:[%s796 + $0x20] sm:$0xff]
        %v802 = vld [vmem:[%s796 + $0x28] sm:$0xff]
        %v803 = vld [vmem:[%s796 + $0x30] sm:$0xff]
        %v804 = vld [vmem:[%s796 + $0x38] sm:$0xff]
        %806 = vset.pattern.permute.xlu0 0
        %807 = vperm.xlu0 %806, %v797
        %v808 = vpop.permute.xlu0 %807
        %811 = vset.pattern.permute.xlu0 0
        %812 = vperm.xlu0 %811, %v798
        %v813 = vpop.permute.xlu0 %812
        %816 = vset.pattern.permute.xlu0 0
        %817 = vperm.xlu0 %816, %v799
        %v818 = vpop.permute.xlu0 %817
        %821 = vset.pattern.permute.xlu0 0
        %822 = vperm.xlu0 %821, %v800
        %v823 = vpop.permute.xlu0 %822
        %826 = vset.pattern.permute.xlu0 0
        %827 = vperm.xlu0 %826, %v801
        %v828 = vpop.permute.xlu0 %827
        %831 = vset.pattern.permute.xlu0 0
        %832 = vperm.xlu0 %831, %v802
        %v833 = vpop.permute.xlu0 %832
        %836 = vset.pattern.permute.xlu0 0
        %837 = vperm.xlu0 %836, %v803
        %v838 = vpop.permute.xlu0 %837
        %841 = vset.pattern.permute.xlu0 0
        %842 = vperm.xlu0 %841, %v804
        %v843 = vpop.permute.xlu0 %842
        %845 = vset.pattern.permute.xlu0 1
        %846 = vperm.xlu0 %845, %v797
        %v847 = vpop.permute.xlu0 %846
        %849 = vset.pattern.permute.xlu0 1
        %850 = vperm.xlu0 %849, %v798
        %v851 = vpop.permute.xlu0 %850
        %853 = vset.pattern.permute.xlu0 1
        %854 = vperm.xlu0 %853, %v799
        %v855 = vpop.permute.xlu0 %854
        %857 = vset.pattern.permute.xlu0 1
        %858 = vperm.xlu0 %857, %v800
        %v859 = vpop.permute.xlu0 %858
        %861 = vset.pattern.permute.xlu0 1
        %862 = vperm.xlu0 %861, %v801
        %v863 = vpop.permute.xlu0 %862
        %865 = vset.pattern.permute.xlu0 1
        %866 = vperm.xlu0 %865, %v802
        %v867 = vpop.permute.xlu0 %866
        %869 = vset.pattern.permute.xlu0 1
        %870 = vperm.xlu0 %869, %v803
        %v871 = vpop.permute.xlu0 %870
        %873 = vset.pattern.permute.xlu0 1
        %874 = vperm.xlu0 %873, %v804
        %v875 = vpop.permute.xlu0 %874
        %v877 = vmul.f32 %v263, %v808
        %v878 = vmul.f32 %v263, %v813
        %v879 = vmul.f32 %v263, %v818
        %v880 = vmul.f32 %v263, %v823
        %v881 = vmul.f32 %v263, %v828
        %v882 = vmul.f32 %v263, %v833
        %v883 = vmul.f32 %v263, %v838
        %v884 = vmul.f32 %v263, %v843
        %v885 = vmul.f32 %v275, %v847
        %v886 = vmul.f32 %v275, %v851
        %v887 = vmul.f32 %v275, %v855
        %v888 = vmul.f32 %v275, %v859
        %v889 = vmul.f32 %v275, %v863
        %v890 = vmul.f32 %v275, %v867
        %v891 = vmul.f32 %v275, %v871
        %v892 = vmul.f32 %v275, %v875
        %v893 = vadd.f32 %v877, %v885
        %v894 = vadd.f32 %v878, %v886
        %v895 = vadd.f32 %v879, %v887
        %v896 = vadd.f32 %v880, %v888
        %v897 = vadd.f32 %v881, %v889
        %v898 = vadd.f32 %v882, %v890
        %v899 = vadd.f32 %v883, %v891
        %v900 = vadd.f32 %v884, %v892
        %v901 = vsub.f32 %v893, %v295
        %v902 = vsub.f32 %v894, %v295
        %v903 = vsub.f32 %v895, %v295
        %v904 = vsub.f32 %v896, %v295
        %v905 = vsub.f32 %v897, %v295
        %v906 = vsub.f32 %v898, %v295
        %v907 = vsub.f32 %v899, %v295
        %v908 = vsub.f32 %v900, %v295
        %v909 = vmul.f32 %v307, %v808
        %v910 = vmul.f32 %v307, %v813
        %v911 = vmul.f32 %v307, %v818
        %v912 = vmul.f32 %v307, %v823
        %v913 = vmul.f32 %v307, %v828
        %v914 = vmul.f32 %v307, %v833
        %v915 = vmul.f32 %v307, %v838
        %v916 = vmul.f32 %v307, %v843
        %v917 = vmul.f32 %v319, %v847
        %v918 = vmul.f32 %v319, %v851
        %v919 = vmul.f32 %v319, %v855
        %v920 = vmul.f32 %v319, %v859
        %v921 = vmul.f32 %v319, %v863
        %v922 = vmul.f32 %v319, %v867
        %v923 = vmul.f32 %v319, %v871
        %v924 = vmul.f32 %v319, %v875
        %v925 = vadd.f32 %v909, %v917
        %v926 = vadd.f32 %v910, %v918
        %v927 = vadd.f32 %v911, %v919
        %v928 = vadd.f32 %v912, %v920
        %v929 = vadd.f32 %v913, %v921
        %v930 = vadd.f32 %v914, %v922
        %v931 = vadd.f32 %v915, %v923
        %v932 = vadd.f32 %v916, %v924
        %v933 = vsub.f32 %v925, %v339
        %v934 = vsub.f32 %v926, %v339
        %v935 = vsub.f32 %v927, %v339
        %v936 = vsub.f32 %v928, %v339
        %v937 = vsub.f32 %v929, %v339
        %v938 = vsub.f32 %v930, %v339
        %v939 = vsub.f32 %v931, %v339
        %v940 = vsub.f32 %v932, %v339
        %v941 = vmul.f32 %v901, %v901
        %v942 = vmul.f32 %v902, %v902
        %v943 = vmul.f32 %v903, %v903
        %v944 = vmul.f32 %v904, %v904
        %v945 = vmul.f32 %v905, %v905
        %v946 = vmul.f32 %v906, %v906
        %v947 = vmul.f32 %v907, %v907
        %v948 = vmul.f32 %v908, %v908
        %v949 = vmul.f32 %v933, %v933
        %v950 = vmul.f32 %v934, %v934
        %v951 = vmul.f32 %v935, %v935
        %v952 = vmul.f32 %v936, %v936
        %v953 = vmul.f32 %v937, %v937
        %v954 = vmul.f32 %v938, %v938
        %v955 = vmul.f32 %v939, %v939
        %v956 = vmul.f32 %v940, %v940
        %v957 = vadd.f32 %v941, %v949
        %v958 = vadd.f32 %v942, %v950
        %v959 = vadd.f32 %v943, %v951
        %v960 = vadd.f32 %v944, %v952
        %v961 = vadd.f32 %v945, %v953
        %v962 = vadd.f32 %v946, %v954
        %v963 = vadd.f32 %v947, %v955
        %v964 = vadd.f32 %v948, %v956
        %v965 = vmin.f32 %v957, 1e+30
        %v966 = vmin.f32 %v958, 1e+30
        %v967 = vmin.f32 %v959, 1e+30
        %v968 = vmin.f32 %v960, 1e+30
        %v969 = vmin.f32 %v961, 1e+30
        %v970 = vmin.f32 %v962, 1e+30
        %v971 = vmin.f32 %v963, 1e+30
        %v972 = vmin.f32 %v964, 1e+30
        %v981 = vand.u32 %v965, 4294967168
        %v982 = vand.u32 %v966, 4294967168
        %v983 = vand.u32 %v967, 4294967168
        %v984 = vand.u32 %v968, 4294967168
        %v985 = vand.u32 %v969, 4294967168
        %v986 = vand.u32 %v970, 4294967168
        %v987 = vand.u32 %v971, 4294967168
        %v988 = vand.u32 %v972, 4294967168
        %v989 = vor.u32 %v981, %v179
        %v990 = vor.u32 %v982, %v179
        %v991 = vor.u32 %v983, %v179
        %v992 = vor.u32 %v984, %v179
        %v993 = vor.u32 %v985, %v179
        %v994 = vor.u32 %v986, %v179
        %v995 = vor.u32 %v987, %v179
        %v996 = vor.u32 %v988, %v179
        %1005 = vmin.xlane.f32.xlu0 %v989
        %v1006 = vpop.xlane.xlu0 %1005
        %1007 = vmin.xlane.f32.xlu0 %v990
        %v1008 = vpop.xlane.xlu0 %1007
        %1009 = vmin.xlane.f32.xlu0 %v991
        %v1010 = vpop.xlane.xlu0 %1009
        %1011 = vmin.xlane.f32.xlu0 %v992
        %v1012 = vpop.xlane.xlu0 %1011
        %1013 = vmin.xlane.f32.xlu0 %v993
        %v1014 = vpop.xlane.xlu0 %1013
        %1015 = vmin.xlane.f32.xlu0 %v994
        %v1016 = vpop.xlane.xlu0 %1015
        %1017 = vmin.xlane.f32.xlu0 %v995
        %v1018 = vpop.xlane.xlu0 %1017
        %1019 = vmin.xlane.f32.xlu0 %v996
        %v1020 = vpop.xlane.xlu0 %1019
        %v1029 = vand.u32 %v1006, 127
        %v1030 = vand.u32 %v1008, 127
        %v1031 = vand.u32 %v1010, 127
        %v1032 = vand.u32 %v1012, 127
        %v1033 = vand.u32 %v1014, 127
        %v1034 = vand.u32 %v1016, 127
        %v1035 = vand.u32 %v1018, 127
        %v1036 = vand.u32 %v1020, 127
        %v1037 = vand.u32 %v1006, 4294967168
        %v1038 = vand.u32 %v1008, 4294967168
        %v1039 = vand.u32 %v1010, 4294967168
        %v1040 = vand.u32 %v1012, 4294967168
        %v1041 = vand.u32 %v1014, 4294967168
        %v1042 = vand.u32 %v1016, 4294967168
        %v1043 = vand.u32 %v1018, 4294967168
        %v1044 = vand.u32 %v1020, 4294967168
        %v1053 = vmul.f32 %v1037, -0.5
        %v1054 = vmul.f32 %v1038, -0.5
        %v1055 = vmul.f32 %v1039, -0.5
        %v1056 = vmul.f32 %v1040, -0.5
        %v1057 = vmul.f32 %v1041, -0.5
        %v1058 = vmul.f32 %v1042, -0.5
        %v1059 = vmul.f32 %v1043, -0.5
        %v1060 = vmul.f32 %v1044, -0.5
        %v1061 = vmul.f32 %v1053, 1.442695
        %v1062 = vpow.pop %v1061
        %v1063 = vmul.f32 %v1054, 1.442695
        %v1064 = vpow.pop %v1063
        %v1065 = vmul.f32 %v1055, 1.442695
        %v1066 = vpow.pop %v1065
        %v1067 = vmul.f32 %v1056, 1.442695
        %v1068 = vpow.pop %v1067
        %v1069 = vmul.f32 %v1057, 1.442695
        %v1070 = vpow.pop %v1069
        %v1071 = vmul.f32 %v1058, 1.442695
        %v1072 = vpow.pop %v1071
        %v1073 = vmul.f32 %v1059, 1.442695
        %v1074 = vpow.pop %v1073
        %v1075 = vmul.f32 %v1060, 1.442695
        %v1076 = vpow.pop %v1075
        %vm1077 = vcmp.eq.s32.totalorder %v179, %v1029
        %vm1078 = vcmp.eq.s32.totalorder %v179, %v1030
        %vm1079 = vcmp.eq.s32.totalorder %v179, %v1031
        %vm1080 = vcmp.eq.s32.totalorder %v179, %v1032
        %vm1081 = vcmp.eq.s32.totalorder %v179, %v1033
        %vm1082 = vcmp.eq.s32.totalorder %v179, %v1034
        %vm1083 = vcmp.eq.s32.totalorder %v179, %v1035
        %vm1084 = vcmp.eq.s32.totalorder %v179, %v1036
        %v1085 = vsel %vm1077, %v1062, 0.0
        %v1086 = vsel %vm1078, %v1064, 0.0
        %v1087 = vsel %vm1079, %v1066, 0.0
        %v1088 = vsel %vm1080, %v1068, 0.0
        %v1089 = vsel %vm1081, %v1070, 0.0
        %v1090 = vsel %vm1082, %v1072, 0.0
        %v1091 = vsel %vm1083, %v1074, 0.0
        %v1092 = vsel %vm1084, %v1076, 0.0
        %v1093 = vsel %vm1077, inf, %v989
        %v1094 = vsel %vm1078, inf, %v990
        %v1095 = vsel %vm1079, inf, %v991
        %v1096 = vsel %vm1080, inf, %v992
        %v1097 = vsel %vm1081, inf, %v993
        %v1098 = vsel %vm1082, inf, %v994
        %v1099 = vsel %vm1083, inf, %v995
        %v1100 = vsel %vm1084, inf, %v996
        %1101 = vmin.xlane.f32.xlu0 %v1093
        %v1102 = vpop.xlane.xlu0 %1101
        %1103 = vmin.xlane.f32.xlu0 %v1094
        %v1104 = vpop.xlane.xlu0 %1103
        %1105 = vmin.xlane.f32.xlu0 %v1095
        %v1106 = vpop.xlane.xlu0 %1105
        %1107 = vmin.xlane.f32.xlu0 %v1096
        %v1108 = vpop.xlane.xlu0 %1107
        %1109 = vmin.xlane.f32.xlu0 %v1097
        %v1110 = vpop.xlane.xlu0 %1109
        %1111 = vmin.xlane.f32.xlu0 %v1098
        %v1112 = vpop.xlane.xlu0 %1111
        %1113 = vmin.xlane.f32.xlu0 %v1099
        %v1114 = vpop.xlane.xlu0 %1113
        %1115 = vmin.xlane.f32.xlu0 %v1100
        %v1116 = vpop.xlane.xlu0 %1115
        %v1125 = vand.u32 %v1102, 127
        %v1126 = vand.u32 %v1104, 127
        %v1127 = vand.u32 %v1106, 127
        %v1128 = vand.u32 %v1108, 127
        %v1129 = vand.u32 %v1110, 127
        %v1130 = vand.u32 %v1112, 127
        %v1131 = vand.u32 %v1114, 127
        %v1132 = vand.u32 %v1116, 127
        %v1133 = vand.u32 %v1102, 4294967168
        %v1134 = vand.u32 %v1104, 4294967168
        %v1135 = vand.u32 %v1106, 4294967168
        %v1136 = vand.u32 %v1108, 4294967168
        %v1137 = vand.u32 %v1110, 4294967168
        %v1138 = vand.u32 %v1112, 4294967168
        %v1139 = vand.u32 %v1114, 4294967168
        %v1140 = vand.u32 %v1116, 4294967168
        %v1149 = vmul.f32 %v1133, -0.5
        %v1150 = vmul.f32 %v1134, -0.5
        %v1151 = vmul.f32 %v1135, -0.5
        %v1152 = vmul.f32 %v1136, -0.5
        %v1153 = vmul.f32 %v1137, -0.5
        %v1154 = vmul.f32 %v1138, -0.5
        %v1155 = vmul.f32 %v1139, -0.5
        %v1156 = vmul.f32 %v1140, -0.5
        %v1157 = vmul.f32 %v1149, 1.442695
        %v1158 = vpow.pop %v1157
        %v1159 = vmul.f32 %v1150, 1.442695
        %v1160 = vpow.pop %v1159
        %v1161 = vmul.f32 %v1151, 1.442695
        %v1162 = vpow.pop %v1161
        %v1163 = vmul.f32 %v1152, 1.442695
        %v1164 = vpow.pop %v1163
        %v1165 = vmul.f32 %v1153, 1.442695
        %v1166 = vpow.pop %v1165
        %v1167 = vmul.f32 %v1154, 1.442695
        %v1168 = vpow.pop %v1167
        %v1169 = vmul.f32 %v1155, 1.442695
        %v1170 = vpow.pop %v1169
        %v1171 = vmul.f32 %v1156, 1.442695
        %v1172 = vpow.pop %v1171
        %vm1173 = vcmp.eq.s32.totalorder %v179, %v1125
        %vm1174 = vcmp.eq.s32.totalorder %v179, %v1126
        %vm1175 = vcmp.eq.s32.totalorder %v179, %v1127
        %vm1176 = vcmp.eq.s32.totalorder %v179, %v1128
        %vm1177 = vcmp.eq.s32.totalorder %v179, %v1129
        %vm1178 = vcmp.eq.s32.totalorder %v179, %v1130
        %vm1179 = vcmp.eq.s32.totalorder %v179, %v1131
        %vm1180 = vcmp.eq.s32.totalorder %v179, %v1132
        %v1181 = vsel %vm1173, %v1158, %v1085
        %v1182 = vsel %vm1174, %v1160, %v1086
        %v1183 = vsel %vm1175, %v1162, %v1087
        %v1184 = vsel %vm1176, %v1164, %v1088
        %v1185 = vsel %vm1177, %v1166, %v1089
        %v1186 = vsel %vm1178, %v1168, %v1090
        %v1187 = vsel %vm1179, %v1170, %v1091
        %v1188 = vsel %vm1180, %v1172, %v1092
        %v1189 = vsel %vm1173, inf, %v1093
        %v1190 = vsel %vm1174, inf, %v1094
        %v1191 = vsel %vm1175, inf, %v1095
        %v1192 = vsel %vm1176, inf, %v1096
        %v1193 = vsel %vm1177, inf, %v1097
        %v1194 = vsel %vm1178, inf, %v1098
        %v1195 = vsel %vm1179, inf, %v1099
        %v1196 = vsel %vm1180, inf, %v1100
        %1197 = vmin.xlane.f32.xlu0 %v1189
        %v1198 = vpop.xlane.xlu0 %1197
        %1199 = vmin.xlane.f32.xlu0 %v1190
        %v1200 = vpop.xlane.xlu0 %1199
        %1201 = vmin.xlane.f32.xlu0 %v1191
        %v1202 = vpop.xlane.xlu0 %1201
        %1203 = vmin.xlane.f32.xlu0 %v1192
        %v1204 = vpop.xlane.xlu0 %1203
        %1205 = vmin.xlane.f32.xlu0 %v1193
        %v1206 = vpop.xlane.xlu0 %1205
        %1207 = vmin.xlane.f32.xlu0 %v1194
        %v1208 = vpop.xlane.xlu0 %1207
        %1209 = vmin.xlane.f32.xlu0 %v1195
        %v1210 = vpop.xlane.xlu0 %1209
        %1211 = vmin.xlane.f32.xlu0 %v1196
        %v1212 = vpop.xlane.xlu0 %1211
        %v1221 = vand.u32 %v1198, 127
        %v1222 = vand.u32 %v1200, 127
        %v1223 = vand.u32 %v1202, 127
        %v1224 = vand.u32 %v1204, 127
        %v1225 = vand.u32 %v1206, 127
        %v1226 = vand.u32 %v1208, 127
        %v1227 = vand.u32 %v1210, 127
        %v1228 = vand.u32 %v1212, 127
        %v1229 = vand.u32 %v1198, 4294967168
        %v1230 = vand.u32 %v1200, 4294967168
        %v1231 = vand.u32 %v1202, 4294967168
        %v1232 = vand.u32 %v1204, 4294967168
        %v1233 = vand.u32 %v1206, 4294967168
        %v1234 = vand.u32 %v1208, 4294967168
        %v1235 = vand.u32 %v1210, 4294967168
        %v1236 = vand.u32 %v1212, 4294967168
        %v1245 = vmul.f32 %v1229, -0.5
        %v1246 = vmul.f32 %v1230, -0.5
        %v1247 = vmul.f32 %v1231, -0.5
        %v1248 = vmul.f32 %v1232, -0.5
        %v1249 = vmul.f32 %v1233, -0.5
        %v1250 = vmul.f32 %v1234, -0.5
        %v1251 = vmul.f32 %v1235, -0.5
        %v1252 = vmul.f32 %v1236, -0.5
        %v1253 = vmul.f32 %v1245, 1.442695
        %v1254 = vpow.pop %v1253
        %v1255 = vmul.f32 %v1246, 1.442695
        %v1256 = vpow.pop %v1255
        %v1257 = vmul.f32 %v1247, 1.442695
        %v1258 = vpow.pop %v1257
        %v1259 = vmul.f32 %v1248, 1.442695
        %v1260 = vpow.pop %v1259
        %v1261 = vmul.f32 %v1249, 1.442695
        %v1262 = vpow.pop %v1261
        %v1263 = vmul.f32 %v1250, 1.442695
        %v1264 = vpow.pop %v1263
        %v1265 = vmul.f32 %v1251, 1.442695
        %v1266 = vpow.pop %v1265
        %v1267 = vmul.f32 %v1252, 1.442695
        %v1268 = vpow.pop %v1267
        %vm1269 = vcmp.eq.s32.totalorder %v179, %v1221
        %vm1270 = vcmp.eq.s32.totalorder %v179, %v1222
        %vm1271 = vcmp.eq.s32.totalorder %v179, %v1223
        %vm1272 = vcmp.eq.s32.totalorder %v179, %v1224
        %vm1273 = vcmp.eq.s32.totalorder %v179, %v1225
        %vm1274 = vcmp.eq.s32.totalorder %v179, %v1226
        %vm1275 = vcmp.eq.s32.totalorder %v179, %v1227
        %vm1276 = vcmp.eq.s32.totalorder %v179, %v1228
        %v1277 = vsel %vm1269, %v1254, %v1181
        %v1278 = vsel %vm1270, %v1256, %v1182
        %v1279 = vsel %vm1271, %v1258, %v1183
        %v1280 = vsel %vm1272, %v1260, %v1184
        %v1281 = vsel %vm1273, %v1262, %v1185
        %v1282 = vsel %vm1274, %v1264, %v1186
        %v1283 = vsel %vm1275, %v1266, %v1187
        %v1284 = vsel %vm1276, %v1268, %v1188
        %v1285 = vsel %vm1269, inf, %v1189
        %v1286 = vsel %vm1270, inf, %v1190
        %v1287 = vsel %vm1271, inf, %v1191
        %v1288 = vsel %vm1272, inf, %v1192
        %v1289 = vsel %vm1273, inf, %v1193
        %v1290 = vsel %vm1274, inf, %v1194
        %v1291 = vsel %vm1275, inf, %v1195
        %v1292 = vsel %vm1276, inf, %v1196
        %1293 = vmin.xlane.f32.xlu0 %v1285
        %v1294 = vpop.xlane.xlu0 %1293
        %1295 = vmin.xlane.f32.xlu0 %v1286
        %v1296 = vpop.xlane.xlu0 %1295
        %1297 = vmin.xlane.f32.xlu0 %v1287
        %v1298 = vpop.xlane.xlu0 %1297
        %1299 = vmin.xlane.f32.xlu0 %v1288
        %v1300 = vpop.xlane.xlu0 %1299
        %1301 = vmin.xlane.f32.xlu0 %v1289
        %v1302 = vpop.xlane.xlu0 %1301
        %1303 = vmin.xlane.f32.xlu0 %v1290
        %v1304 = vpop.xlane.xlu0 %1303
        %1305 = vmin.xlane.f32.xlu0 %v1291
        %v1306 = vpop.xlane.xlu0 %1305
        %1307 = vmin.xlane.f32.xlu0 %v1292
        %v1308 = vpop.xlane.xlu0 %1307
        %v1317 = vand.u32 %v1294, 127
        %v1318 = vand.u32 %v1296, 127
        %v1319 = vand.u32 %v1298, 127
        %v1320 = vand.u32 %v1300, 127
        %v1321 = vand.u32 %v1302, 127
        %v1322 = vand.u32 %v1304, 127
        %v1323 = vand.u32 %v1306, 127
        %v1324 = vand.u32 %v1308, 127
        %v1325 = vand.u32 %v1294, 4294967168
        %v1326 = vand.u32 %v1296, 4294967168
        %v1327 = vand.u32 %v1298, 4294967168
        %v1328 = vand.u32 %v1300, 4294967168
        %v1329 = vand.u32 %v1302, 4294967168
        %v1330 = vand.u32 %v1304, 4294967168
        %v1331 = vand.u32 %v1306, 4294967168
        %v1332 = vand.u32 %v1308, 4294967168
        %v1341 = vmul.f32 %v1325, -0.5
        %v1342 = vmul.f32 %v1326, -0.5
        %v1343 = vmul.f32 %v1327, -0.5
        %v1344 = vmul.f32 %v1328, -0.5
        %v1345 = vmul.f32 %v1329, -0.5
        %v1346 = vmul.f32 %v1330, -0.5
        %v1347 = vmul.f32 %v1331, -0.5
        %v1348 = vmul.f32 %v1332, -0.5
        %v1349 = vmul.f32 %v1341, 1.442695
        %v1350 = vpow.pop %v1349
        %v1351 = vmul.f32 %v1342, 1.442695
        %v1352 = vpow.pop %v1351
        %v1353 = vmul.f32 %v1343, 1.442695
        %v1354 = vpow.pop %v1353
        %v1355 = vmul.f32 %v1344, 1.442695
        %v1356 = vpow.pop %v1355
        %v1357 = vmul.f32 %v1345, 1.442695
        %v1358 = vpow.pop %v1357
        %v1359 = vmul.f32 %v1346, 1.442695
        %v1360 = vpow.pop %v1359
        %v1361 = vmul.f32 %v1347, 1.442695
        %v1362 = vpow.pop %v1361
        %v1363 = vmul.f32 %v1348, 1.442695
        %v1364 = vpow.pop %v1363
        %vm1365 = vcmp.eq.s32.totalorder %v179, %v1317
        %vm1366 = vcmp.eq.s32.totalorder %v179, %v1318
        %vm1367 = vcmp.eq.s32.totalorder %v179, %v1319
        %vm1368 = vcmp.eq.s32.totalorder %v179, %v1320
        %vm1369 = vcmp.eq.s32.totalorder %v179, %v1321
        %vm1370 = vcmp.eq.s32.totalorder %v179, %v1322
        %vm1371 = vcmp.eq.s32.totalorder %v179, %v1323
        %vm1372 = vcmp.eq.s32.totalorder %v179, %v1324
        %v1373 = vsel %vm1365, %v1350, %v1277
        %v1374 = vsel %vm1366, %v1352, %v1278
        %v1375 = vsel %vm1367, %v1354, %v1279
        %v1376 = vsel %vm1368, %v1356, %v1280
        %v1377 = vsel %vm1369, %v1358, %v1281
        %v1378 = vsel %vm1370, %v1360, %v1282
        %v1379 = vsel %vm1371, %v1362, %v1283
        %v1380 = vsel %vm1372, %v1364, %v1284
        %s1381 = scalar_lea.vmem [#allocation2], 64
        %1382 = vst [vmem:[%s1381] sm:$0xff] %v1373
        %1383 = vst [vmem:[%s1381 + $0x8] sm:$0xff] %v1374
        %1384 = vst [vmem:[%s1381 + $0x10] sm:$0xff] %v1375
        %1385 = vst [vmem:[%s1381 + $0x18] sm:$0xff] %v1376
        %1386 = vst [vmem:[%s1381 + $0x20] sm:$0xff] %v1377
        %1387 = vst [vmem:[%s1381 + $0x28] sm:$0xff] %v1378
        %1388 = vst [vmem:[%s1381 + $0x30] sm:$0xff] %v1379
        %1389 = vst [vmem:[%s1381 + $0x38] sm:$0xff] %v1380
        %s1390 = scalar_lea.vmem %s169, 128
        %v1391 = vld [vmem:[%s1390] sm:$0xff]
        %v1392 = vld [vmem:[%s1390 + $0x8] sm:$0xff]
        %v1393 = vld [vmem:[%s1390 + $0x10] sm:$0xff]
        %v1394 = vld [vmem:[%s1390 + $0x18] sm:$0xff]
        %v1395 = vld [vmem:[%s1390 + $0x20] sm:$0xff]
        %v1396 = vld [vmem:[%s1390 + $0x28] sm:$0xff]
        %v1397 = vld [vmem:[%s1390 + $0x30] sm:$0xff]
        %v1398 = vld [vmem:[%s1390 + $0x38] sm:$0xff]
        %1400 = vset.pattern.permute.xlu0 0
        %1401 = vperm.xlu0 %1400, %v1391
        %v1402 = vpop.permute.xlu0 %1401
        %1405 = vset.pattern.permute.xlu0 0
        %1406 = vperm.xlu0 %1405, %v1392
        %v1407 = vpop.permute.xlu0 %1406
        %1410 = vset.pattern.permute.xlu0 0
        %1411 = vperm.xlu0 %1410, %v1393
        %v1412 = vpop.permute.xlu0 %1411
        %1415 = vset.pattern.permute.xlu0 0
        %1416 = vperm.xlu0 %1415, %v1394
        %v1417 = vpop.permute.xlu0 %1416
        %1420 = vset.pattern.permute.xlu0 0
        %1421 = vperm.xlu0 %1420, %v1395
        %v1422 = vpop.permute.xlu0 %1421
        %1425 = vset.pattern.permute.xlu0 0
        %1426 = vperm.xlu0 %1425, %v1396
        %v1427 = vpop.permute.xlu0 %1426
        %1430 = vset.pattern.permute.xlu0 0
        %1431 = vperm.xlu0 %1430, %v1397
        %v1432 = vpop.permute.xlu0 %1431
        %1435 = vset.pattern.permute.xlu0 0
        %1436 = vperm.xlu0 %1435, %v1398
        %v1437 = vpop.permute.xlu0 %1436
        %1439 = vset.pattern.permute.xlu0 1
        %1440 = vperm.xlu0 %1439, %v1391
        %v1441 = vpop.permute.xlu0 %1440
        %1443 = vset.pattern.permute.xlu0 1
        %1444 = vperm.xlu0 %1443, %v1392
        %v1445 = vpop.permute.xlu0 %1444
        %1447 = vset.pattern.permute.xlu0 1
        %1448 = vperm.xlu0 %1447, %v1393
        %v1449 = vpop.permute.xlu0 %1448
        %1451 = vset.pattern.permute.xlu0 1
        %1452 = vperm.xlu0 %1451, %v1394
        %v1453 = vpop.permute.xlu0 %1452
        %1455 = vset.pattern.permute.xlu0 1
        %1456 = vperm.xlu0 %1455, %v1395
        %v1457 = vpop.permute.xlu0 %1456
        %1459 = vset.pattern.permute.xlu0 1
        %1460 = vperm.xlu0 %1459, %v1396
        %v1461 = vpop.permute.xlu0 %1460
        %1463 = vset.pattern.permute.xlu0 1
        %1464 = vperm.xlu0 %1463, %v1397
        %v1465 = vpop.permute.xlu0 %1464
        %1467 = vset.pattern.permute.xlu0 1
        %1468 = vperm.xlu0 %1467, %v1398
        %v1469 = vpop.permute.xlu0 %1468
        %v1471 = vmul.f32 %v263, %v1402
        %v1472 = vmul.f32 %v263, %v1407
        %v1473 = vmul.f32 %v263, %v1412
        %v1474 = vmul.f32 %v263, %v1417
        %v1475 = vmul.f32 %v263, %v1422
        %v1476 = vmul.f32 %v263, %v1427
        %v1477 = vmul.f32 %v263, %v1432
        %v1478 = vmul.f32 %v263, %v1437
        %v1479 = vmul.f32 %v275, %v1441
        %v1480 = vmul.f32 %v275, %v1445
        %v1481 = vmul.f32 %v275, %v1449
        %v1482 = vmul.f32 %v275, %v1453
        %v1483 = vmul.f32 %v275, %v1457
        %v1484 = vmul.f32 %v275, %v1461
        %v1485 = vmul.f32 %v275, %v1465
        %v1486 = vmul.f32 %v275, %v1469
        %v1487 = vadd.f32 %v1471, %v1479
        %v1488 = vadd.f32 %v1472, %v1480
        %v1489 = vadd.f32 %v1473, %v1481
        %v1490 = vadd.f32 %v1474, %v1482
        %v1491 = vadd.f32 %v1475, %v1483
        %v1492 = vadd.f32 %v1476, %v1484
        %v1493 = vadd.f32 %v1477, %v1485
        %v1494 = vadd.f32 %v1478, %v1486
        %v1495 = vsub.f32 %v1487, %v295
        %v1496 = vsub.f32 %v1488, %v295
        %v1497 = vsub.f32 %v1489, %v295
        %v1498 = vsub.f32 %v1490, %v295
        %v1499 = vsub.f32 %v1491, %v295
        %v1500 = vsub.f32 %v1492, %v295
        %v1501 = vsub.f32 %v1493, %v295
        %v1502 = vsub.f32 %v1494, %v295
        %v1503 = vmul.f32 %v307, %v1402
        %v1504 = vmul.f32 %v307, %v1407
        %v1505 = vmul.f32 %v307, %v1412
        %v1506 = vmul.f32 %v307, %v1417
        %v1507 = vmul.f32 %v307, %v1422
        %v1508 = vmul.f32 %v307, %v1427
        %v1509 = vmul.f32 %v307, %v1432
        %v1510 = vmul.f32 %v307, %v1437
        %v1511 = vmul.f32 %v319, %v1441
        %v1512 = vmul.f32 %v319, %v1445
        %v1513 = vmul.f32 %v319, %v1449
        %v1514 = vmul.f32 %v319, %v1453
        %v1515 = vmul.f32 %v319, %v1457
        %v1516 = vmul.f32 %v319, %v1461
        %v1517 = vmul.f32 %v319, %v1465
        %v1518 = vmul.f32 %v319, %v1469
        %v1519 = vadd.f32 %v1503, %v1511
        %v1520 = vadd.f32 %v1504, %v1512
        %v1521 = vadd.f32 %v1505, %v1513
        %v1522 = vadd.f32 %v1506, %v1514
        %v1523 = vadd.f32 %v1507, %v1515
        %v1524 = vadd.f32 %v1508, %v1516
        %v1525 = vadd.f32 %v1509, %v1517
        %v1526 = vadd.f32 %v1510, %v1518
        %v1527 = vsub.f32 %v1519, %v339
        %v1528 = vsub.f32 %v1520, %v339
        %v1529 = vsub.f32 %v1521, %v339
        %v1530 = vsub.f32 %v1522, %v339
        %v1531 = vsub.f32 %v1523, %v339
        %v1532 = vsub.f32 %v1524, %v339
        %v1533 = vsub.f32 %v1525, %v339
        %v1534 = vsub.f32 %v1526, %v339
        %v1535 = vmul.f32 %v1495, %v1495
        %v1536 = vmul.f32 %v1496, %v1496
        %v1537 = vmul.f32 %v1497, %v1497
        %v1538 = vmul.f32 %v1498, %v1498
        %v1539 = vmul.f32 %v1499, %v1499
        %v1540 = vmul.f32 %v1500, %v1500
        %v1541 = vmul.f32 %v1501, %v1501
        %v1542 = vmul.f32 %v1502, %v1502
        %v1543 = vmul.f32 %v1527, %v1527
        %v1544 = vmul.f32 %v1528, %v1528
        %v1545 = vmul.f32 %v1529, %v1529
        %v1546 = vmul.f32 %v1530, %v1530
        %v1547 = vmul.f32 %v1531, %v1531
        %v1548 = vmul.f32 %v1532, %v1532
        %v1549 = vmul.f32 %v1533, %v1533
        %v1550 = vmul.f32 %v1534, %v1534
        %v1551 = vadd.f32 %v1535, %v1543
        %v1552 = vadd.f32 %v1536, %v1544
        %v1553 = vadd.f32 %v1537, %v1545
        %v1554 = vadd.f32 %v1538, %v1546
        %v1555 = vadd.f32 %v1539, %v1547
        %v1556 = vadd.f32 %v1540, %v1548
        %v1557 = vadd.f32 %v1541, %v1549
        %v1558 = vadd.f32 %v1542, %v1550
        %v1559 = vmin.f32 %v1551, 1e+30
        %v1560 = vmin.f32 %v1552, 1e+30
        %v1561 = vmin.f32 %v1553, 1e+30
        %v1562 = vmin.f32 %v1554, 1e+30
        %v1563 = vmin.f32 %v1555, 1e+30
        %v1564 = vmin.f32 %v1556, 1e+30
        %v1565 = vmin.f32 %v1557, 1e+30
        %v1566 = vmin.f32 %v1558, 1e+30
        %v1575 = vand.u32 %v1559, 4294967168
        %v1576 = vand.u32 %v1560, 4294967168
        %v1577 = vand.u32 %v1561, 4294967168
        %v1578 = vand.u32 %v1562, 4294967168
        %v1579 = vand.u32 %v1563, 4294967168
        %v1580 = vand.u32 %v1564, 4294967168
        %v1581 = vand.u32 %v1565, 4294967168
        %v1582 = vand.u32 %v1566, 4294967168
        %v1583 = vor.u32 %v1575, %v179
        %v1584 = vor.u32 %v1576, %v179
        %v1585 = vor.u32 %v1577, %v179
        %v1586 = vor.u32 %v1578, %v179
        %v1587 = vor.u32 %v1579, %v179
        %v1588 = vor.u32 %v1580, %v179
        %v1589 = vor.u32 %v1581, %v179
        %v1590 = vor.u32 %v1582, %v179
        %1599 = vmin.xlane.f32.xlu0 %v1583
        %v1600 = vpop.xlane.xlu0 %1599
        %1601 = vmin.xlane.f32.xlu0 %v1584
        %v1602 = vpop.xlane.xlu0 %1601
        %1603 = vmin.xlane.f32.xlu0 %v1585
        %v1604 = vpop.xlane.xlu0 %1603
        %1605 = vmin.xlane.f32.xlu0 %v1586
        %v1606 = vpop.xlane.xlu0 %1605
        %1607 = vmin.xlane.f32.xlu0 %v1587
        %v1608 = vpop.xlane.xlu0 %1607
        %1609 = vmin.xlane.f32.xlu0 %v1588
        %v1610 = vpop.xlane.xlu0 %1609
        %1611 = vmin.xlane.f32.xlu0 %v1589
        %v1612 = vpop.xlane.xlu0 %1611
        %1613 = vmin.xlane.f32.xlu0 %v1590
        %v1614 = vpop.xlane.xlu0 %1613
        %v1623 = vand.u32 %v1600, 127
        %v1624 = vand.u32 %v1602, 127
        %v1625 = vand.u32 %v1604, 127
        %v1626 = vand.u32 %v1606, 127
        %v1627 = vand.u32 %v1608, 127
        %v1628 = vand.u32 %v1610, 127
        %v1629 = vand.u32 %v1612, 127
        %v1630 = vand.u32 %v1614, 127
        %v1631 = vand.u32 %v1600, 4294967168
        %v1632 = vand.u32 %v1602, 4294967168
        %v1633 = vand.u32 %v1604, 4294967168
        %v1634 = vand.u32 %v1606, 4294967168
        %v1635 = vand.u32 %v1608, 4294967168
        %v1636 = vand.u32 %v1610, 4294967168
        %v1637 = vand.u32 %v1612, 4294967168
        %v1638 = vand.u32 %v1614, 4294967168
        %v1647 = vmul.f32 %v1631, -0.5
        %v1648 = vmul.f32 %v1632, -0.5
        %v1649 = vmul.f32 %v1633, -0.5
        %v1650 = vmul.f32 %v1634, -0.5
        %v1651 = vmul.f32 %v1635, -0.5
        %v1652 = vmul.f32 %v1636, -0.5
        %v1653 = vmul.f32 %v1637, -0.5
        %v1654 = vmul.f32 %v1638, -0.5
        %v1655 = vmul.f32 %v1647, 1.442695
        %v1656 = vpow.pop %v1655
        %v1657 = vmul.f32 %v1648, 1.442695
        %v1658 = vpow.pop %v1657
        %v1659 = vmul.f32 %v1649, 1.442695
        %v1660 = vpow.pop %v1659
        %v1661 = vmul.f32 %v1650, 1.442695
        %v1662 = vpow.pop %v1661
        %v1663 = vmul.f32 %v1651, 1.442695
        %v1664 = vpow.pop %v1663
        %v1665 = vmul.f32 %v1652, 1.442695
        %v1666 = vpow.pop %v1665
        %v1667 = vmul.f32 %v1653, 1.442695
        %v1668 = vpow.pop %v1667
        %v1669 = vmul.f32 %v1654, 1.442695
        %v1670 = vpow.pop %v1669
        %vm1671 = vcmp.eq.s32.totalorder %v179, %v1623
        %vm1672 = vcmp.eq.s32.totalorder %v179, %v1624
        %vm1673 = vcmp.eq.s32.totalorder %v179, %v1625
        %vm1674 = vcmp.eq.s32.totalorder %v179, %v1626
        %vm1675 = vcmp.eq.s32.totalorder %v179, %v1627
        %vm1676 = vcmp.eq.s32.totalorder %v179, %v1628
        %vm1677 = vcmp.eq.s32.totalorder %v179, %v1629
        %vm1678 = vcmp.eq.s32.totalorder %v179, %v1630
        %v1679 = vsel %vm1671, %v1656, 0.0
        %v1680 = vsel %vm1672, %v1658, 0.0
        %v1681 = vsel %vm1673, %v1660, 0.0
        %v1682 = vsel %vm1674, %v1662, 0.0
        %v1683 = vsel %vm1675, %v1664, 0.0
        %v1684 = vsel %vm1676, %v1666, 0.0
        %v1685 = vsel %vm1677, %v1668, 0.0
        %v1686 = vsel %vm1678, %v1670, 0.0
        %v1687 = vsel %vm1671, inf, %v1583
        %v1688 = vsel %vm1672, inf, %v1584
        %v1689 = vsel %vm1673, inf, %v1585
        %v1690 = vsel %vm1674, inf, %v1586
        %v1691 = vsel %vm1675, inf, %v1587
        %v1692 = vsel %vm1676, inf, %v1588
        %v1693 = vsel %vm1677, inf, %v1589
        %v1694 = vsel %vm1678, inf, %v1590
        %1695 = vmin.xlane.f32.xlu0 %v1687
        %v1696 = vpop.xlane.xlu0 %1695
        %1697 = vmin.xlane.f32.xlu0 %v1688
        %v1698 = vpop.xlane.xlu0 %1697
        %1699 = vmin.xlane.f32.xlu0 %v1689
        %v1700 = vpop.xlane.xlu0 %1699
        %1701 = vmin.xlane.f32.xlu0 %v1690
        %v1702 = vpop.xlane.xlu0 %1701
        %1703 = vmin.xlane.f32.xlu0 %v1691
        %v1704 = vpop.xlane.xlu0 %1703
        %1705 = vmin.xlane.f32.xlu0 %v1692
        %v1706 = vpop.xlane.xlu0 %1705
        %1707 = vmin.xlane.f32.xlu0 %v1693
        %v1708 = vpop.xlane.xlu0 %1707
        %1709 = vmin.xlane.f32.xlu0 %v1694
        %v1710 = vpop.xlane.xlu0 %1709
        %v1719 = vand.u32 %v1696, 127
        %v1720 = vand.u32 %v1698, 127
        %v1721 = vand.u32 %v1700, 127
        %v1722 = vand.u32 %v1702, 127
        %v1723 = vand.u32 %v1704, 127
        %v1724 = vand.u32 %v1706, 127
        %v1725 = vand.u32 %v1708, 127
        %v1726 = vand.u32 %v1710, 127
        %v1727 = vand.u32 %v1696, 4294967168
        %v1728 = vand.u32 %v1698, 4294967168
        %v1729 = vand.u32 %v1700, 4294967168
        %v1730 = vand.u32 %v1702, 4294967168
        %v1731 = vand.u32 %v1704, 4294967168
        %v1732 = vand.u32 %v1706, 4294967168
        %v1733 = vand.u32 %v1708, 4294967168
        %v1734 = vand.u32 %v1710, 4294967168
        %v1743 = vmul.f32 %v1727, -0.5
        %v1744 = vmul.f32 %v1728, -0.5
        %v1745 = vmul.f32 %v1729, -0.5
        %v1746 = vmul.f32 %v1730, -0.5
        %v1747 = vmul.f32 %v1731, -0.5
        %v1748 = vmul.f32 %v1732, -0.5
        %v1749 = vmul.f32 %v1733, -0.5
        %v1750 = vmul.f32 %v1734, -0.5
        %v1751 = vmul.f32 %v1743, 1.442695
        %v1752 = vpow.pop %v1751
        %v1753 = vmul.f32 %v1744, 1.442695
        %v1754 = vpow.pop %v1753
        %v1755 = vmul.f32 %v1745, 1.442695
        %v1756 = vpow.pop %v1755
        %v1757 = vmul.f32 %v1746, 1.442695
        %v1758 = vpow.pop %v1757
        %v1759 = vmul.f32 %v1747, 1.442695
        %v1760 = vpow.pop %v1759
        %v1761 = vmul.f32 %v1748, 1.442695
        %v1762 = vpow.pop %v1761
        %v1763 = vmul.f32 %v1749, 1.442695
        %v1764 = vpow.pop %v1763
        %v1765 = vmul.f32 %v1750, 1.442695
        %v1766 = vpow.pop %v1765
        %vm1767 = vcmp.eq.s32.totalorder %v179, %v1719
        %vm1768 = vcmp.eq.s32.totalorder %v179, %v1720
        %vm1769 = vcmp.eq.s32.totalorder %v179, %v1721
        %vm1770 = vcmp.eq.s32.totalorder %v179, %v1722
        %vm1771 = vcmp.eq.s32.totalorder %v179, %v1723
        %vm1772 = vcmp.eq.s32.totalorder %v179, %v1724
        %vm1773 = vcmp.eq.s32.totalorder %v179, %v1725
        %vm1774 = vcmp.eq.s32.totalorder %v179, %v1726
        %v1775 = vsel %vm1767, %v1752, %v1679
        %v1776 = vsel %vm1768, %v1754, %v1680
        %v1777 = vsel %vm1769, %v1756, %v1681
        %v1778 = vsel %vm1770, %v1758, %v1682
        %v1779 = vsel %vm1771, %v1760, %v1683
        %v1780 = vsel %vm1772, %v1762, %v1684
        %v1781 = vsel %vm1773, %v1764, %v1685
        %v1782 = vsel %vm1774, %v1766, %v1686
        %v1783 = vsel %vm1767, inf, %v1687
        %v1784 = vsel %vm1768, inf, %v1688
        %v1785 = vsel %vm1769, inf, %v1689
        %v1786 = vsel %vm1770, inf, %v1690
        %v1787 = vsel %vm1771, inf, %v1691
        %v1788 = vsel %vm1772, inf, %v1692
        %v1789 = vsel %vm1773, inf, %v1693
        %v1790 = vsel %vm1774, inf, %v1694
        %1791 = vmin.xlane.f32.xlu0 %v1783
        %v1792 = vpop.xlane.xlu0 %1791
        %1793 = vmin.xlane.f32.xlu0 %v1784
        %v1794 = vpop.xlane.xlu0 %1793
        %1795 = vmin.xlane.f32.xlu0 %v1785
        %v1796 = vpop.xlane.xlu0 %1795
        %1797 = vmin.xlane.f32.xlu0 %v1786
        %v1798 = vpop.xlane.xlu0 %1797
        %1799 = vmin.xlane.f32.xlu0 %v1787
        %v1800 = vpop.xlane.xlu0 %1799
        %1801 = vmin.xlane.f32.xlu0 %v1788
        %v1802 = vpop.xlane.xlu0 %1801
        %1803 = vmin.xlane.f32.xlu0 %v1789
        %v1804 = vpop.xlane.xlu0 %1803
        %1805 = vmin.xlane.f32.xlu0 %v1790
        %v1806 = vpop.xlane.xlu0 %1805
        %v1815 = vand.u32 %v1792, 127
        %v1816 = vand.u32 %v1794, 127
        %v1817 = vand.u32 %v1796, 127
        %v1818 = vand.u32 %v1798, 127
        %v1819 = vand.u32 %v1800, 127
        %v1820 = vand.u32 %v1802, 127
        %v1821 = vand.u32 %v1804, 127
        %v1822 = vand.u32 %v1806, 127
        %v1823 = vand.u32 %v1792, 4294967168
        %v1824 = vand.u32 %v1794, 4294967168
        %v1825 = vand.u32 %v1796, 4294967168
        %v1826 = vand.u32 %v1798, 4294967168
        %v1827 = vand.u32 %v1800, 4294967168
        %v1828 = vand.u32 %v1802, 4294967168
        %v1829 = vand.u32 %v1804, 4294967168
        %v1830 = vand.u32 %v1806, 4294967168
        %v1839 = vmul.f32 %v1823, -0.5
        %v1840 = vmul.f32 %v1824, -0.5
        %v1841 = vmul.f32 %v1825, -0.5
        %v1842 = vmul.f32 %v1826, -0.5
        %v1843 = vmul.f32 %v1827, -0.5
        %v1844 = vmul.f32 %v1828, -0.5
        %v1845 = vmul.f32 %v1829, -0.5
        %v1846 = vmul.f32 %v1830, -0.5
        %v1847 = vmul.f32 %v1839, 1.442695
        %v1848 = vpow.pop %v1847
        %v1849 = vmul.f32 %v1840, 1.442695
        %v1850 = vpow.pop %v1849
        %v1851 = vmul.f32 %v1841, 1.442695
        %v1852 = vpow.pop %v1851
        %v1853 = vmul.f32 %v1842, 1.442695
        %v1854 = vpow.pop %v1853
        %v1855 = vmul.f32 %v1843, 1.442695
        %v1856 = vpow.pop %v1855
        %v1857 = vmul.f32 %v1844, 1.442695
        %v1858 = vpow.pop %v1857
        %v1859 = vmul.f32 %v1845, 1.442695
        %v1860 = vpow.pop %v1859
        %v1861 = vmul.f32 %v1846, 1.442695
        %v1862 = vpow.pop %v1861
        %vm1863 = vcmp.eq.s32.totalorder %v179, %v1815
        %vm1864 = vcmp.eq.s32.totalorder %v179, %v1816
        %vm1865 = vcmp.eq.s32.totalorder %v179, %v1817
        %vm1866 = vcmp.eq.s32.totalorder %v179, %v1818
        %vm1867 = vcmp.eq.s32.totalorder %v179, %v1819
        %vm1868 = vcmp.eq.s32.totalorder %v179, %v1820
        %vm1869 = vcmp.eq.s32.totalorder %v179, %v1821
        %vm1870 = vcmp.eq.s32.totalorder %v179, %v1822
        %v1871 = vsel %vm1863, %v1848, %v1775
        %v1872 = vsel %vm1864, %v1850, %v1776
        %v1873 = vsel %vm1865, %v1852, %v1777
        %v1874 = vsel %vm1866, %v1854, %v1778
        %v1875 = vsel %vm1867, %v1856, %v1779
        %v1876 = vsel %vm1868, %v1858, %v1780
        %v1877 = vsel %vm1869, %v1860, %v1781
        %v1878 = vsel %vm1870, %v1862, %v1782
        %v1879 = vsel %vm1863, inf, %v1783
        %v1880 = vsel %vm1864, inf, %v1784
        %v1881 = vsel %vm1865, inf, %v1785
        %v1882 = vsel %vm1866, inf, %v1786
        %v1883 = vsel %vm1867, inf, %v1787
        %v1884 = vsel %vm1868, inf, %v1788
        %v1885 = vsel %vm1869, inf, %v1789
        %v1886 = vsel %vm1870, inf, %v1790
        %1887 = vmin.xlane.f32.xlu0 %v1879
        %v1888 = vpop.xlane.xlu0 %1887
        %1889 = vmin.xlane.f32.xlu0 %v1880
        %v1890 = vpop.xlane.xlu0 %1889
        %1891 = vmin.xlane.f32.xlu0 %v1881
        %v1892 = vpop.xlane.xlu0 %1891
        %1893 = vmin.xlane.f32.xlu0 %v1882
        %v1894 = vpop.xlane.xlu0 %1893
        %1895 = vmin.xlane.f32.xlu0 %v1883
        %v1896 = vpop.xlane.xlu0 %1895
        %1897 = vmin.xlane.f32.xlu0 %v1884
        %v1898 = vpop.xlane.xlu0 %1897
        %1899 = vmin.xlane.f32.xlu0 %v1885
        %v1900 = vpop.xlane.xlu0 %1899
        %1901 = vmin.xlane.f32.xlu0 %v1886
        %v1902 = vpop.xlane.xlu0 %1901
        %v1911 = vand.u32 %v1888, 127
        %v1912 = vand.u32 %v1890, 127
        %v1913 = vand.u32 %v1892, 127
        %v1914 = vand.u32 %v1894, 127
        %v1915 = vand.u32 %v1896, 127
        %v1916 = vand.u32 %v1898, 127
        %v1917 = vand.u32 %v1900, 127
        %v1918 = vand.u32 %v1902, 127
        %v1919 = vand.u32 %v1888, 4294967168
        %v1920 = vand.u32 %v1890, 4294967168
        %v1921 = vand.u32 %v1892, 4294967168
        %v1922 = vand.u32 %v1894, 4294967168
        %v1923 = vand.u32 %v1896, 4294967168
        %v1924 = vand.u32 %v1898, 4294967168
        %v1925 = vand.u32 %v1900, 4294967168
        %v1926 = vand.u32 %v1902, 4294967168
        %v1935 = vmul.f32 %v1919, -0.5
        %v1936 = vmul.f32 %v1920, -0.5
        %v1937 = vmul.f32 %v1921, -0.5
        %v1938 = vmul.f32 %v1922, -0.5
        %v1939 = vmul.f32 %v1923, -0.5
        %v1940 = vmul.f32 %v1924, -0.5
        %v1941 = vmul.f32 %v1925, -0.5
        %v1942 = vmul.f32 %v1926, -0.5
        %v1943 = vmul.f32 %v1935, 1.442695
        %v1944 = vpow.pop %v1943
        %v1945 = vmul.f32 %v1936, 1.442695
        %v1946 = vpow.pop %v1945
        %v1947 = vmul.f32 %v1937, 1.442695
        %v1948 = vpow.pop %v1947
        %v1949 = vmul.f32 %v1938, 1.442695
        %v1950 = vpow.pop %v1949
        %v1951 = vmul.f32 %v1939, 1.442695
        %v1952 = vpow.pop %v1951
        %v1953 = vmul.f32 %v1940, 1.442695
        %v1954 = vpow.pop %v1953
        %v1955 = vmul.f32 %v1941, 1.442695
        %v1956 = vpow.pop %v1955
        %v1957 = vmul.f32 %v1942, 1.442695
        %v1958 = vpow.pop %v1957
        %vm1959 = vcmp.eq.s32.totalorder %v179, %v1911
        %vm1960 = vcmp.eq.s32.totalorder %v179, %v1912
        %vm1961 = vcmp.eq.s32.totalorder %v179, %v1913
        %vm1962 = vcmp.eq.s32.totalorder %v179, %v1914
        %vm1963 = vcmp.eq.s32.totalorder %v179, %v1915
        %vm1964 = vcmp.eq.s32.totalorder %v179, %v1916
        %vm1965 = vcmp.eq.s32.totalorder %v179, %v1917
        %vm1966 = vcmp.eq.s32.totalorder %v179, %v1918
        %v1967 = vsel %vm1959, %v1944, %v1871
        %v1968 = vsel %vm1960, %v1946, %v1872
        %v1969 = vsel %vm1961, %v1948, %v1873
        %v1970 = vsel %vm1962, %v1950, %v1874
        %v1971 = vsel %vm1963, %v1952, %v1875
        %v1972 = vsel %vm1964, %v1954, %v1876
        %v1973 = vsel %vm1965, %v1956, %v1877
        %v1974 = vsel %vm1966, %v1958, %v1878
        %s1975 = scalar_lea.vmem [#allocation2], 128
        %1976 = vst [vmem:[%s1975] sm:$0xff] %v1967
        %1977 = vst [vmem:[%s1975 + $0x8] sm:$0xff] %v1968
        %1978 = vst [vmem:[%s1975 + $0x10] sm:$0xff] %v1969
        %1979 = vst [vmem:[%s1975 + $0x18] sm:$0xff] %v1970
        %1980 = vst [vmem:[%s1975 + $0x20] sm:$0xff] %v1971
        %1981 = vst [vmem:[%s1975 + $0x28] sm:$0xff] %v1972
        %1982 = vst [vmem:[%s1975 + $0x30] sm:$0xff] %v1973
        %1983 = vst [vmem:[%s1975 + $0x38] sm:$0xff] %v1974
        %s1984 = scalar_lea.vmem %s169, 192
        %v1985 = vld [vmem:[%s1984] sm:$0xff]
        %v1986 = vld [vmem:[%s1984 + $0x8] sm:$0xff]
        %v1987 = vld [vmem:[%s1984 + $0x10] sm:$0xff]
        %v1988 = vld [vmem:[%s1984 + $0x18] sm:$0xff]
        %v1989 = vld [vmem:[%s1984 + $0x20] sm:$0xff]
        %v1990 = vld [vmem:[%s1984 + $0x28] sm:$0xff]
        %v1991 = vld [vmem:[%s1984 + $0x30] sm:$0xff]
        %v1992 = vld [vmem:[%s1984 + $0x38] sm:$0xff]
        %1994 = vset.pattern.permute.xlu0 0
        %1995 = vperm.xlu0 %1994, %v1985
        %v1996 = vpop.permute.xlu0 %1995
        %1999 = vset.pattern.permute.xlu0 0
        %2000 = vperm.xlu0 %1999, %v1986
        %v2001 = vpop.permute.xlu0 %2000
        %2004 = vset.pattern.permute.xlu0 0
        %2005 = vperm.xlu0 %2004, %v1987
        %v2006 = vpop.permute.xlu0 %2005
        %2009 = vset.pattern.permute.xlu0 0
        %2010 = vperm.xlu0 %2009, %v1988
        %v2011 = vpop.permute.xlu0 %2010
        %2014 = vset.pattern.permute.xlu0 0
        %2015 = vperm.xlu0 %2014, %v1989
        %v2016 = vpop.permute.xlu0 %2015
        %2019 = vset.pattern.permute.xlu0 0
        %2020 = vperm.xlu0 %2019, %v1990
        %v2021 = vpop.permute.xlu0 %2020
        %2024 = vset.pattern.permute.xlu0 0
        %2025 = vperm.xlu0 %2024, %v1991
        %v2026 = vpop.permute.xlu0 %2025
        %2029 = vset.pattern.permute.xlu0 0
        %2030 = vperm.xlu0 %2029, %v1992
        %v2031 = vpop.permute.xlu0 %2030
        %2033 = vset.pattern.permute.xlu0 1
        %2034 = vperm.xlu0 %2033, %v1985
        %v2035 = vpop.permute.xlu0 %2034
        %2037 = vset.pattern.permute.xlu0 1
        %2038 = vperm.xlu0 %2037, %v1986
        %v2039 = vpop.permute.xlu0 %2038
        %2041 = vset.pattern.permute.xlu0 1
        %2042 = vperm.xlu0 %2041, %v1987
        %v2043 = vpop.permute.xlu0 %2042
        %2045 = vset.pattern.permute.xlu0 1
        %2046 = vperm.xlu0 %2045, %v1988
        %v2047 = vpop.permute.xlu0 %2046
        %2049 = vset.pattern.permute.xlu0 1
        %2050 = vperm.xlu0 %2049, %v1989
        %v2051 = vpop.permute.xlu0 %2050
        %2053 = vset.pattern.permute.xlu0 1
        %2054 = vperm.xlu0 %2053, %v1990
        %v2055 = vpop.permute.xlu0 %2054
        %2057 = vset.pattern.permute.xlu0 1
        %2058 = vperm.xlu0 %2057, %v1991
        %v2059 = vpop.permute.xlu0 %2058
        %2061 = vset.pattern.permute.xlu0 1
        %2062 = vperm.xlu0 %2061, %v1992
        %v2063 = vpop.permute.xlu0 %2062
        %v2065 = vmul.f32 %v263, %v1996
        %v2066 = vmul.f32 %v263, %v2001
        %v2067 = vmul.f32 %v263, %v2006
        %v2068 = vmul.f32 %v263, %v2011
        %v2069 = vmul.f32 %v263, %v2016
        %v2070 = vmul.f32 %v263, %v2021
        %v2071 = vmul.f32 %v263, %v2026
        %v2072 = vmul.f32 %v263, %v2031
        %v2073 = vmul.f32 %v275, %v2035
        %v2074 = vmul.f32 %v275, %v2039
        %v2075 = vmul.f32 %v275, %v2043
        %v2076 = vmul.f32 %v275, %v2047
        %v2077 = vmul.f32 %v275, %v2051
        %v2078 = vmul.f32 %v275, %v2055
        %v2079 = vmul.f32 %v275, %v2059
        %v2080 = vmul.f32 %v275, %v2063
        %v2081 = vadd.f32 %v2065, %v2073
        %v2082 = vadd.f32 %v2066, %v2074
        %v2083 = vadd.f32 %v2067, %v2075
        %v2084 = vadd.f32 %v2068, %v2076
        %v2085 = vadd.f32 %v2069, %v2077
        %v2086 = vadd.f32 %v2070, %v2078
        %v2087 = vadd.f32 %v2071, %v2079
        %v2088 = vadd.f32 %v2072, %v2080
        %v2089 = vsub.f32 %v2081, %v295
        %v2090 = vsub.f32 %v2082, %v295
        %v2091 = vsub.f32 %v2083, %v295
        %v2092 = vsub.f32 %v2084, %v295
        %v2093 = vsub.f32 %v2085, %v295
        %v2094 = vsub.f32 %v2086, %v295
        %v2095 = vsub.f32 %v2087, %v295
        %v2096 = vsub.f32 %v2088, %v295
        %v2097 = vmul.f32 %v307, %v1996
        %v2098 = vmul.f32 %v307, %v2001
        %v2099 = vmul.f32 %v307, %v2006
        %v2100 = vmul.f32 %v307, %v2011
        %v2101 = vmul.f32 %v307, %v2016
        %v2102 = vmul.f32 %v307, %v2021
        %v2103 = vmul.f32 %v307, %v2026
        %v2104 = vmul.f32 %v307, %v2031
        %v2105 = vmul.f32 %v319, %v2035
        %v2106 = vmul.f32 %v319, %v2039
        %v2107 = vmul.f32 %v319, %v2043
        %v2108 = vmul.f32 %v319, %v2047
        %v2109 = vmul.f32 %v319, %v2051
        %v2110 = vmul.f32 %v319, %v2055
        %v2111 = vmul.f32 %v319, %v2059
        %v2112 = vmul.f32 %v319, %v2063
        %v2113 = vadd.f32 %v2097, %v2105
        %v2114 = vadd.f32 %v2098, %v2106
        %v2115 = vadd.f32 %v2099, %v2107
        %v2116 = vadd.f32 %v2100, %v2108
        %v2117 = vadd.f32 %v2101, %v2109
        %v2118 = vadd.f32 %v2102, %v2110
        %v2119 = vadd.f32 %v2103, %v2111
        %v2120 = vadd.f32 %v2104, %v2112
        %v2121 = vsub.f32 %v2113, %v339
        %v2122 = vsub.f32 %v2114, %v339
        %v2123 = vsub.f32 %v2115, %v339
        %v2124 = vsub.f32 %v2116, %v339
        %v2125 = vsub.f32 %v2117, %v339
        %v2126 = vsub.f32 %v2118, %v339
        %v2127 = vsub.f32 %v2119, %v339
        %v2128 = vsub.f32 %v2120, %v339
        %v2129 = vmul.f32 %v2089, %v2089
        %v2130 = vmul.f32 %v2090, %v2090
        %v2131 = vmul.f32 %v2091, %v2091
        %v2132 = vmul.f32 %v2092, %v2092
        %v2133 = vmul.f32 %v2093, %v2093
        %v2134 = vmul.f32 %v2094, %v2094
        %v2135 = vmul.f32 %v2095, %v2095
        %v2136 = vmul.f32 %v2096, %v2096
        %v2137 = vmul.f32 %v2121, %v2121
        %v2138 = vmul.f32 %v2122, %v2122
        %v2139 = vmul.f32 %v2123, %v2123
        %v2140 = vmul.f32 %v2124, %v2124
        %v2141 = vmul.f32 %v2125, %v2125
        %v2142 = vmul.f32 %v2126, %v2126
        %v2143 = vmul.f32 %v2127, %v2127
        %v2144 = vmul.f32 %v2128, %v2128
        %v2145 = vadd.f32 %v2129, %v2137
        %v2146 = vadd.f32 %v2130, %v2138
        %v2147 = vadd.f32 %v2131, %v2139
        %v2148 = vadd.f32 %v2132, %v2140
        %v2149 = vadd.f32 %v2133, %v2141
        %v2150 = vadd.f32 %v2134, %v2142
        %v2151 = vadd.f32 %v2135, %v2143
        %v2152 = vadd.f32 %v2136, %v2144
        %v2153 = vmin.f32 %v2145, 1e+30
        %v2154 = vmin.f32 %v2146, 1e+30
        %v2155 = vmin.f32 %v2147, 1e+30
        %v2156 = vmin.f32 %v2148, 1e+30
        %v2157 = vmin.f32 %v2149, 1e+30
        %v2158 = vmin.f32 %v2150, 1e+30
        %v2159 = vmin.f32 %v2151, 1e+30
        %v2160 = vmin.f32 %v2152, 1e+30
        %v2169 = vand.u32 %v2153, 4294967168
        %v2170 = vand.u32 %v2154, 4294967168
        %v2171 = vand.u32 %v2155, 4294967168
        %v2172 = vand.u32 %v2156, 4294967168
        %v2173 = vand.u32 %v2157, 4294967168
        %v2174 = vand.u32 %v2158, 4294967168
        %v2175 = vand.u32 %v2159, 4294967168
        %v2176 = vand.u32 %v2160, 4294967168
        %v2177 = vor.u32 %v2169, %v179
        %v2178 = vor.u32 %v2170, %v179
        %v2179 = vor.u32 %v2171, %v179
        %v2180 = vor.u32 %v2172, %v179
        %v2181 = vor.u32 %v2173, %v179
        %v2182 = vor.u32 %v2174, %v179
        %v2183 = vor.u32 %v2175, %v179
        %v2184 = vor.u32 %v2176, %v179
        %2193 = vmin.xlane.f32.xlu0 %v2177
        %v2194 = vpop.xlane.xlu0 %2193
        %2195 = vmin.xlane.f32.xlu0 %v2178
        %v2196 = vpop.xlane.xlu0 %2195
        %2197 = vmin.xlane.f32.xlu0 %v2179
        %v2198 = vpop.xlane.xlu0 %2197
        %2199 = vmin.xlane.f32.xlu0 %v2180
        %v2200 = vpop.xlane.xlu0 %2199
        %2201 = vmin.xlane.f32.xlu0 %v2181
        %v2202 = vpop.xlane.xlu0 %2201
        %2203 = vmin.xlane.f32.xlu0 %v2182
        %v2204 = vpop.xlane.xlu0 %2203
        %2205 = vmin.xlane.f32.xlu0 %v2183
        %v2206 = vpop.xlane.xlu0 %2205
        %2207 = vmin.xlane.f32.xlu0 %v2184
        %v2208 = vpop.xlane.xlu0 %2207
        %v2217 = vand.u32 %v2194, 127
        %v2218 = vand.u32 %v2196, 127
        %v2219 = vand.u32 %v2198, 127
        %v2220 = vand.u32 %v2200, 127
        %v2221 = vand.u32 %v2202, 127
        %v2222 = vand.u32 %v2204, 127
        %v2223 = vand.u32 %v2206, 127
        %v2224 = vand.u32 %v2208, 127
        %v2225 = vand.u32 %v2194, 4294967168
        %v2226 = vand.u32 %v2196, 4294967168
        %v2227 = vand.u32 %v2198, 4294967168
        %v2228 = vand.u32 %v2200, 4294967168
        %v2229 = vand.u32 %v2202, 4294967168
        %v2230 = vand.u32 %v2204, 4294967168
        %v2231 = vand.u32 %v2206, 4294967168
        %v2232 = vand.u32 %v2208, 4294967168
        %v2241 = vmul.f32 %v2225, -0.5
        %v2242 = vmul.f32 %v2226, -0.5
        %v2243 = vmul.f32 %v2227, -0.5
        %v2244 = vmul.f32 %v2228, -0.5
        %v2245 = vmul.f32 %v2229, -0.5
        %v2246 = vmul.f32 %v2230, -0.5
        %v2247 = vmul.f32 %v2231, -0.5
        %v2248 = vmul.f32 %v2232, -0.5
        %v2249 = vmul.f32 %v2241, 1.442695
        %v2250 = vpow.pop %v2249
        %v2251 = vmul.f32 %v2242, 1.442695
        %v2252 = vpow.pop %v2251
        %v2253 = vmul.f32 %v2243, 1.442695
        %v2254 = vpow.pop %v2253
        %v2255 = vmul.f32 %v2244, 1.442695
        %v2256 = vpow.pop %v2255
        %v2257 = vmul.f32 %v2245, 1.442695
        %v2258 = vpow.pop %v2257
        %v2259 = vmul.f32 %v2246, 1.442695
        %v2260 = vpow.pop %v2259
        %v2261 = vmul.f32 %v2247, 1.442695
        %v2262 = vpow.pop %v2261
        %v2263 = vmul.f32 %v2248, 1.442695
        %v2264 = vpow.pop %v2263
        %vm2265 = vcmp.eq.s32.totalorder %v179, %v2217
        %vm2266 = vcmp.eq.s32.totalorder %v179, %v2218
        %vm2267 = vcmp.eq.s32.totalorder %v179, %v2219
        %vm2268 = vcmp.eq.s32.totalorder %v179, %v2220
        %vm2269 = vcmp.eq.s32.totalorder %v179, %v2221
        %vm2270 = vcmp.eq.s32.totalorder %v179, %v2222
        %vm2271 = vcmp.eq.s32.totalorder %v179, %v2223
        %vm2272 = vcmp.eq.s32.totalorder %v179, %v2224
        %v2273 = vsel %vm2265, %v2250, 0.0
        %v2274 = vsel %vm2266, %v2252, 0.0
        %v2275 = vsel %vm2267, %v2254, 0.0
        %v2276 = vsel %vm2268, %v2256, 0.0
        %v2277 = vsel %vm2269, %v2258, 0.0
        %v2278 = vsel %vm2270, %v2260, 0.0
        %v2279 = vsel %vm2271, %v2262, 0.0
        %v2280 = vsel %vm2272, %v2264, 0.0
        %v2281 = vsel %vm2265, inf, %v2177
        %v2282 = vsel %vm2266, inf, %v2178
        %v2283 = vsel %vm2267, inf, %v2179
        %v2284 = vsel %vm2268, inf, %v2180
        %v2285 = vsel %vm2269, inf, %v2181
        %v2286 = vsel %vm2270, inf, %v2182
        %v2287 = vsel %vm2271, inf, %v2183
        %v2288 = vsel %vm2272, inf, %v2184
        %2289 = vmin.xlane.f32.xlu0 %v2281
        %v2290 = vpop.xlane.xlu0 %2289
        %2291 = vmin.xlane.f32.xlu0 %v2282
        %v2292 = vpop.xlane.xlu0 %2291
        %2293 = vmin.xlane.f32.xlu0 %v2283
        %v2294 = vpop.xlane.xlu0 %2293
        %2295 = vmin.xlane.f32.xlu0 %v2284
        %v2296 = vpop.xlane.xlu0 %2295
        %2297 = vmin.xlane.f32.xlu0 %v2285
        %v2298 = vpop.xlane.xlu0 %2297
        %2299 = vmin.xlane.f32.xlu0 %v2286
        %v2300 = vpop.xlane.xlu0 %2299
        %2301 = vmin.xlane.f32.xlu0 %v2287
        %v2302 = vpop.xlane.xlu0 %2301
        %2303 = vmin.xlane.f32.xlu0 %v2288
        %v2304 = vpop.xlane.xlu0 %2303
        %v2313 = vand.u32 %v2290, 127
        %v2314 = vand.u32 %v2292, 127
        %v2315 = vand.u32 %v2294, 127
        %v2316 = vand.u32 %v2296, 127
        %v2317 = vand.u32 %v2298, 127
        %v2318 = vand.u32 %v2300, 127
        %v2319 = vand.u32 %v2302, 127
        %v2320 = vand.u32 %v2304, 127
        %v2321 = vand.u32 %v2290, 4294967168
        %v2322 = vand.u32 %v2292, 4294967168
        %v2323 = vand.u32 %v2294, 4294967168
        %v2324 = vand.u32 %v2296, 4294967168
        %v2325 = vand.u32 %v2298, 4294967168
        %v2326 = vand.u32 %v2300, 4294967168
        %v2327 = vand.u32 %v2302, 4294967168
        %v2328 = vand.u32 %v2304, 4294967168
        %v2337 = vmul.f32 %v2321, -0.5
        %v2338 = vmul.f32 %v2322, -0.5
        %v2339 = vmul.f32 %v2323, -0.5
        %v2340 = vmul.f32 %v2324, -0.5
        %v2341 = vmul.f32 %v2325, -0.5
        %v2342 = vmul.f32 %v2326, -0.5
        %v2343 = vmul.f32 %v2327, -0.5
        %v2344 = vmul.f32 %v2328, -0.5
        %v2345 = vmul.f32 %v2337, 1.442695
        %v2346 = vpow.pop %v2345
        %v2347 = vmul.f32 %v2338, 1.442695
        %v2348 = vpow.pop %v2347
        %v2349 = vmul.f32 %v2339, 1.442695
        %v2350 = vpow.pop %v2349
        %v2351 = vmul.f32 %v2340, 1.442695
        %v2352 = vpow.pop %v2351
        %v2353 = vmul.f32 %v2341, 1.442695
        %v2354 = vpow.pop %v2353
        %v2355 = vmul.f32 %v2342, 1.442695
        %v2356 = vpow.pop %v2355
        %v2357 = vmul.f32 %v2343, 1.442695
        %v2358 = vpow.pop %v2357
        %v2359 = vmul.f32 %v2344, 1.442695
        %v2360 = vpow.pop %v2359
        %vm2361 = vcmp.eq.s32.totalorder %v179, %v2313
        %vm2362 = vcmp.eq.s32.totalorder %v179, %v2314
        %vm2363 = vcmp.eq.s32.totalorder %v179, %v2315
        %vm2364 = vcmp.eq.s32.totalorder %v179, %v2316
        %vm2365 = vcmp.eq.s32.totalorder %v179, %v2317
        %vm2366 = vcmp.eq.s32.totalorder %v179, %v2318
        %vm2367 = vcmp.eq.s32.totalorder %v179, %v2319
        %vm2368 = vcmp.eq.s32.totalorder %v179, %v2320
        %v2369 = vsel %vm2361, %v2346, %v2273
        %v2370 = vsel %vm2362, %v2348, %v2274
        %v2371 = vsel %vm2363, %v2350, %v2275
        %v2372 = vsel %vm2364, %v2352, %v2276
        %v2373 = vsel %vm2365, %v2354, %v2277
        %v2374 = vsel %vm2366, %v2356, %v2278
        %v2375 = vsel %vm2367, %v2358, %v2279
        %v2376 = vsel %vm2368, %v2360, %v2280
        %v2377 = vsel %vm2361, inf, %v2281
        %v2378 = vsel %vm2362, inf, %v2282
        %v2379 = vsel %vm2363, inf, %v2283
        %v2380 = vsel %vm2364, inf, %v2284
        %v2381 = vsel %vm2365, inf, %v2285
        %v2382 = vsel %vm2366, inf, %v2286
        %v2383 = vsel %vm2367, inf, %v2287
        %v2384 = vsel %vm2368, inf, %v2288
        %2385 = vmin.xlane.f32.xlu0 %v2377
        %v2386 = vpop.xlane.xlu0 %2385
        %2387 = vmin.xlane.f32.xlu0 %v2378
        %v2388 = vpop.xlane.xlu0 %2387
        %2389 = vmin.xlane.f32.xlu0 %v2379
        %v2390 = vpop.xlane.xlu0 %2389
        %2391 = vmin.xlane.f32.xlu0 %v2380
        %v2392 = vpop.xlane.xlu0 %2391
        %2393 = vmin.xlane.f32.xlu0 %v2381
        %v2394 = vpop.xlane.xlu0 %2393
        %2395 = vmin.xlane.f32.xlu0 %v2382
        %v2396 = vpop.xlane.xlu0 %2395
        %2397 = vmin.xlane.f32.xlu0 %v2383
        %v2398 = vpop.xlane.xlu0 %2397
        %2399 = vmin.xlane.f32.xlu0 %v2384
        %v2400 = vpop.xlane.xlu0 %2399
        %v2409 = vand.u32 %v2386, 127
        %v2410 = vand.u32 %v2388, 127
        %v2411 = vand.u32 %v2390, 127
        %v2412 = vand.u32 %v2392, 127
        %v2413 = vand.u32 %v2394, 127
        %v2414 = vand.u32 %v2396, 127
        %v2415 = vand.u32 %v2398, 127
        %v2416 = vand.u32 %v2400, 127
        %v2417 = vand.u32 %v2386, 4294967168
        %v2418 = vand.u32 %v2388, 4294967168
        %v2419 = vand.u32 %v2390, 4294967168
        %v2420 = vand.u32 %v2392, 4294967168
        %v2421 = vand.u32 %v2394, 4294967168
        %v2422 = vand.u32 %v2396, 4294967168
        %v2423 = vand.u32 %v2398, 4294967168
        %v2424 = vand.u32 %v2400, 4294967168
        %v2433 = vmul.f32 %v2417, -0.5
        %v2434 = vmul.f32 %v2418, -0.5
        %v2435 = vmul.f32 %v2419, -0.5
        %v2436 = vmul.f32 %v2420, -0.5
        %v2437 = vmul.f32 %v2421, -0.5
        %v2438 = vmul.f32 %v2422, -0.5
        %v2439 = vmul.f32 %v2423, -0.5
        %v2440 = vmul.f32 %v2424, -0.5
        %v2441 = vmul.f32 %v2433, 1.442695
        %v2442 = vpow.pop %v2441
        %v2443 = vmul.f32 %v2434, 1.442695
        %v2444 = vpow.pop %v2443
        %v2445 = vmul.f32 %v2435, 1.442695
        %v2446 = vpow.pop %v2445
        %v2447 = vmul.f32 %v2436, 1.442695
        %v2448 = vpow.pop %v2447
        %v2449 = vmul.f32 %v2437, 1.442695
        %v2450 = vpow.pop %v2449
        %v2451 = vmul.f32 %v2438, 1.442695
        %v2452 = vpow.pop %v2451
        %v2453 = vmul.f32 %v2439, 1.442695
        %v2454 = vpow.pop %v2453
        %v2455 = vmul.f32 %v2440, 1.442695
        %v2456 = vpow.pop %v2455
        %vm2457 = vcmp.eq.s32.totalorder %v179, %v2409
        %vm2458 = vcmp.eq.s32.totalorder %v179, %v2410
        %vm2459 = vcmp.eq.s32.totalorder %v179, %v2411
        %vm2460 = vcmp.eq.s32.totalorder %v179, %v2412
        %vm2461 = vcmp.eq.s32.totalorder %v179, %v2413
        %vm2462 = vcmp.eq.s32.totalorder %v179, %v2414
        %vm2463 = vcmp.eq.s32.totalorder %v179, %v2415
        %vm2464 = vcmp.eq.s32.totalorder %v179, %v2416
        %v2465 = vsel %vm2457, %v2442, %v2369
        %v2466 = vsel %vm2458, %v2444, %v2370
        %v2467 = vsel %vm2459, %v2446, %v2371
        %v2468 = vsel %vm2460, %v2448, %v2372
        %v2469 = vsel %vm2461, %v2450, %v2373
        %v2470 = vsel %vm2462, %v2452, %v2374
        %v2471 = vsel %vm2463, %v2454, %v2375
        %v2472 = vsel %vm2464, %v2456, %v2376
        %v2473 = vsel %vm2457, inf, %v2377
        %v2474 = vsel %vm2458, inf, %v2378
        %v2475 = vsel %vm2459, inf, %v2379
        %v2476 = vsel %vm2460, inf, %v2380
        %v2477 = vsel %vm2461, inf, %v2381
        %v2478 = vsel %vm2462, inf, %v2382
        %v2479 = vsel %vm2463, inf, %v2383
        %v2480 = vsel %vm2464, inf, %v2384
        %2481 = vmin.xlane.f32.xlu0 %v2473
        %v2482 = vpop.xlane.xlu0 %2481
        %2483 = vmin.xlane.f32.xlu0 %v2474
        %v2484 = vpop.xlane.xlu0 %2483
        %2485 = vmin.xlane.f32.xlu0 %v2475
        %v2486 = vpop.xlane.xlu0 %2485
        %2487 = vmin.xlane.f32.xlu0 %v2476
        %v2488 = vpop.xlane.xlu0 %2487
        %2489 = vmin.xlane.f32.xlu0 %v2477
        %v2490 = vpop.xlane.xlu0 %2489
        %2491 = vmin.xlane.f32.xlu0 %v2478
        %v2492 = vpop.xlane.xlu0 %2491
        %2493 = vmin.xlane.f32.xlu0 %v2479
        %v2494 = vpop.xlane.xlu0 %2493
        %2495 = vmin.xlane.f32.xlu0 %v2480
        %v2496 = vpop.xlane.xlu0 %2495
        %v2505 = vand.u32 %v2482, 127
        %v2506 = vand.u32 %v2484, 127
        %v2507 = vand.u32 %v2486, 127
        %v2508 = vand.u32 %v2488, 127
        %v2509 = vand.u32 %v2490, 127
        %v2510 = vand.u32 %v2492, 127
        %v2511 = vand.u32 %v2494, 127
        %v2512 = vand.u32 %v2496, 127
        %v2513 = vand.u32 %v2482, 4294967168
        %v2514 = vand.u32 %v2484, 4294967168
        %v2515 = vand.u32 %v2486, 4294967168
        %v2516 = vand.u32 %v2488, 4294967168
        %v2517 = vand.u32 %v2490, 4294967168
        %v2518 = vand.u32 %v2492, 4294967168
        %v2519 = vand.u32 %v2494, 4294967168
        %v2520 = vand.u32 %v2496, 4294967168
        %v2529 = vmul.f32 %v2513, -0.5
        %v2530 = vmul.f32 %v2514, -0.5
        %v2531 = vmul.f32 %v2515, -0.5
        %v2532 = vmul.f32 %v2516, -0.5
        %v2533 = vmul.f32 %v2517, -0.5
        %v2534 = vmul.f32 %v2518, -0.5
        %v2535 = vmul.f32 %v2519, -0.5
        %v2536 = vmul.f32 %v2520, -0.5
        %v2537 = vmul.f32 %v2529, 1.442695
        %v2538 = vpow.pop %v2537
        %v2539 = vmul.f32 %v2530, 1.442695
        %v2540 = vpow.pop %v2539
        %v2541 = vmul.f32 %v2531, 1.442695
        %v2542 = vpow.pop %v2541
        %v2543 = vmul.f32 %v2532, 1.442695
        %v2544 = vpow.pop %v2543
        %v2545 = vmul.f32 %v2533, 1.442695
        %v2546 = vpow.pop %v2545
        %v2547 = vmul.f32 %v2534, 1.442695
        %v2548 = vpow.pop %v2547
        %v2549 = vmul.f32 %v2535, 1.442695
        %v2550 = vpow.pop %v2549
        %v2551 = vmul.f32 %v2536, 1.442695
        %v2552 = vpow.pop %v2551
        %vm2553 = vcmp.eq.s32.totalorder %v179, %v2505
        %vm2554 = vcmp.eq.s32.totalorder %v179, %v2506
        %vm2555 = vcmp.eq.s32.totalorder %v179, %v2507
        %vm2556 = vcmp.eq.s32.totalorder %v179, %v2508
        %vm2557 = vcmp.eq.s32.totalorder %v179, %v2509
        %vm2558 = vcmp.eq.s32.totalorder %v179, %v2510
        %vm2559 = vcmp.eq.s32.totalorder %v179, %v2511
        %vm2560 = vcmp.eq.s32.totalorder %v179, %v2512
        %v2561 = vsel %vm2553, %v2538, %v2465
        %v2562 = vsel %vm2554, %v2540, %v2466
        %v2563 = vsel %vm2555, %v2542, %v2467
        %v2564 = vsel %vm2556, %v2544, %v2468
        %v2565 = vsel %vm2557, %v2546, %v2469
        %v2566 = vsel %vm2558, %v2548, %v2470
        %v2567 = vsel %vm2559, %v2550, %v2471
        %v2568 = vsel %vm2560, %v2552, %v2472
        %s2569 = scalar_lea.vmem [#allocation2], 192
        %2570 = vst [vmem:[%s2569] sm:$0xff] %v2561
        %2571 = vst [vmem:[%s2569 + $0x8] sm:$0xff] %v2562
        %2572 = vst [vmem:[%s2569 + $0x10] sm:$0xff] %v2563
        %2573 = vst [vmem:[%s2569 + $0x18] sm:$0xff] %v2564
        %2574 = vst [vmem:[%s2569 + $0x20] sm:$0xff] %v2565
        %2575 = vst [vmem:[%s2569 + $0x28] sm:$0xff] %v2566
        %2576 = vst [vmem:[%s2569 + $0x30] sm:$0xff] %v2567
        %2577 = vst [vmem:[%s2569 + $0x38] sm:$0xff] %v2568
        %s2578 = scalar_lea.vmem %s169, 256
        %v2579 = vld [vmem:[%s2578] sm:$0xff]
        %v2580 = vld [vmem:[%s2578 + $0x8] sm:$0xff]
        %v2581 = vld [vmem:[%s2578 + $0x10] sm:$0xff]
        %v2582 = vld [vmem:[%s2578 + $0x18] sm:$0xff]
        %v2583 = vld [vmem:[%s2578 + $0x20] sm:$0xff]
        %v2584 = vld [vmem:[%s2578 + $0x28] sm:$0xff]
        %v2585 = vld [vmem:[%s2578 + $0x30] sm:$0xff]
        %v2586 = vld [vmem:[%s2578 + $0x38] sm:$0xff]
        %2588 = vset.pattern.permute.xlu0 0
        %2589 = vperm.xlu0 %2588, %v2579
        %v2590 = vpop.permute.xlu0 %2589
        %2593 = vset.pattern.permute.xlu0 0
        %2594 = vperm.xlu0 %2593, %v2580
        %v2595 = vpop.permute.xlu0 %2594
        %2598 = vset.pattern.permute.xlu0 0
        %2599 = vperm.xlu0 %2598, %v2581
        %v2600 = vpop.permute.xlu0 %2599
        %2603 = vset.pattern.permute.xlu0 0
        %2604 = vperm.xlu0 %2603, %v2582
        %v2605 = vpop.permute.xlu0 %2604
        %2608 = vset.pattern.permute.xlu0 0
        %2609 = vperm.xlu0 %2608, %v2583
        %v2610 = vpop.permute.xlu0 %2609
        %2613 = vset.pattern.permute.xlu0 0
        %2614 = vperm.xlu0 %2613, %v2584
        %v2615 = vpop.permute.xlu0 %2614
        %2618 = vset.pattern.permute.xlu0 0
        %2619 = vperm.xlu0 %2618, %v2585
        %v2620 = vpop.permute.xlu0 %2619
        %2623 = vset.pattern.permute.xlu0 0
        %2624 = vperm.xlu0 %2623, %v2586
        %v2625 = vpop.permute.xlu0 %2624
        %2627 = vset.pattern.permute.xlu0 1
        %2628 = vperm.xlu0 %2627, %v2579
        %v2629 = vpop.permute.xlu0 %2628
        %2631 = vset.pattern.permute.xlu0 1
        %2632 = vperm.xlu0 %2631, %v2580
        %v2633 = vpop.permute.xlu0 %2632
        %2635 = vset.pattern.permute.xlu0 1
        %2636 = vperm.xlu0 %2635, %v2581
        %v2637 = vpop.permute.xlu0 %2636
        %2639 = vset.pattern.permute.xlu0 1
        %2640 = vperm.xlu0 %2639, %v2582
        %v2641 = vpop.permute.xlu0 %2640
        %2643 = vset.pattern.permute.xlu0 1
        %2644 = vperm.xlu0 %2643, %v2583
        %v2645 = vpop.permute.xlu0 %2644
        %2647 = vset.pattern.permute.xlu0 1
        %2648 = vperm.xlu0 %2647, %v2584
        %v2649 = vpop.permute.xlu0 %2648
        %2651 = vset.pattern.permute.xlu0 1
        %2652 = vperm.xlu0 %2651, %v2585
        %v2653 = vpop.permute.xlu0 %2652
        %2655 = vset.pattern.permute.xlu0 1
        %2656 = vperm.xlu0 %2655, %v2586
        %v2657 = vpop.permute.xlu0 %2656
        %v2659 = vmul.f32 %v263, %v2590
        %v2660 = vmul.f32 %v263, %v2595
        %v2661 = vmul.f32 %v263, %v2600
        %v2662 = vmul.f32 %v263, %v2605
        %v2663 = vmul.f32 %v263, %v2610
        %v2664 = vmul.f32 %v263, %v2615
        %v2665 = vmul.f32 %v263, %v2620
        %v2666 = vmul.f32 %v263, %v2625
        %v2667 = vmul.f32 %v275, %v2629
        %v2668 = vmul.f32 %v275, %v2633
        %v2669 = vmul.f32 %v275, %v2637
        %v2670 = vmul.f32 %v275, %v2641
        %v2671 = vmul.f32 %v275, %v2645
        %v2672 = vmul.f32 %v275, %v2649
        %v2673 = vmul.f32 %v275, %v2653
        %v2674 = vmul.f32 %v275, %v2657
        %v2675 = vadd.f32 %v2659, %v2667
        %v2676 = vadd.f32 %v2660, %v2668
        %v2677 = vadd.f32 %v2661, %v2669
        %v2678 = vadd.f32 %v2662, %v2670
        %v2679 = vadd.f32 %v2663, %v2671
        %v2680 = vadd.f32 %v2664, %v2672
        %v2681 = vadd.f32 %v2665, %v2673
        %v2682 = vadd.f32 %v2666, %v2674
        %v2683 = vsub.f32 %v2675, %v295
        %v2684 = vsub.f32 %v2676, %v295
        %v2685 = vsub.f32 %v2677, %v295
        %v2686 = vsub.f32 %v2678, %v295
        %v2687 = vsub.f32 %v2679, %v295
        %v2688 = vsub.f32 %v2680, %v295
        %v2689 = vsub.f32 %v2681, %v295
        %v2690 = vsub.f32 %v2682, %v295
        %v2691 = vmul.f32 %v307, %v2590
        %v2692 = vmul.f32 %v307, %v2595
        %v2693 = vmul.f32 %v307, %v2600
        %v2694 = vmul.f32 %v307, %v2605
        %v2695 = vmul.f32 %v307, %v2610
        %v2696 = vmul.f32 %v307, %v2615
        %v2697 = vmul.f32 %v307, %v2620
        %v2698 = vmul.f32 %v307, %v2625
        %v2699 = vmul.f32 %v319, %v2629
        %v2700 = vmul.f32 %v319, %v2633
        %v2701 = vmul.f32 %v319, %v2637
        %v2702 = vmul.f32 %v319, %v2641
        %v2703 = vmul.f32 %v319, %v2645
        %v2704 = vmul.f32 %v319, %v2649
        %v2705 = vmul.f32 %v319, %v2653
        %v2706 = vmul.f32 %v319, %v2657
        %v2707 = vadd.f32 %v2691, %v2699
        %v2708 = vadd.f32 %v2692, %v2700
        %v2709 = vadd.f32 %v2693, %v2701
        %v2710 = vadd.f32 %v2694, %v2702
        %v2711 = vadd.f32 %v2695, %v2703
        %v2712 = vadd.f32 %v2696, %v2704
        %v2713 = vadd.f32 %v2697, %v2705
        %v2714 = vadd.f32 %v2698, %v2706
        %v2715 = vsub.f32 %v2707, %v339
        %v2716 = vsub.f32 %v2708, %v339
        %v2717 = vsub.f32 %v2709, %v339
        %v2718 = vsub.f32 %v2710, %v339
        %v2719 = vsub.f32 %v2711, %v339
        %v2720 = vsub.f32 %v2712, %v339
        %v2721 = vsub.f32 %v2713, %v339
        %v2722 = vsub.f32 %v2714, %v339
        %v2723 = vmul.f32 %v2683, %v2683
        %v2724 = vmul.f32 %v2684, %v2684
        %v2725 = vmul.f32 %v2685, %v2685
        %v2726 = vmul.f32 %v2686, %v2686
        %v2727 = vmul.f32 %v2687, %v2687
        %v2728 = vmul.f32 %v2688, %v2688
        %v2729 = vmul.f32 %v2689, %v2689
        %v2730 = vmul.f32 %v2690, %v2690
        %v2731 = vmul.f32 %v2715, %v2715
        %v2732 = vmul.f32 %v2716, %v2716
        %v2733 = vmul.f32 %v2717, %v2717
        %v2734 = vmul.f32 %v2718, %v2718
        %v2735 = vmul.f32 %v2719, %v2719
        %v2736 = vmul.f32 %v2720, %v2720
        %v2737 = vmul.f32 %v2721, %v2721
        %v2738 = vmul.f32 %v2722, %v2722
        %v2739 = vadd.f32 %v2723, %v2731
        %v2740 = vadd.f32 %v2724, %v2732
        %v2741 = vadd.f32 %v2725, %v2733
        %v2742 = vadd.f32 %v2726, %v2734
        %v2743 = vadd.f32 %v2727, %v2735
        %v2744 = vadd.f32 %v2728, %v2736
        %v2745 = vadd.f32 %v2729, %v2737
        %v2746 = vadd.f32 %v2730, %v2738
        %v2747 = vmin.f32 %v2739, 1e+30
        %v2748 = vmin.f32 %v2740, 1e+30
        %v2749 = vmin.f32 %v2741, 1e+30
        %v2750 = vmin.f32 %v2742, 1e+30
        %v2751 = vmin.f32 %v2743, 1e+30
        %v2752 = vmin.f32 %v2744, 1e+30
        %v2753 = vmin.f32 %v2745, 1e+30
        %v2754 = vmin.f32 %v2746, 1e+30
        %v2763 = vand.u32 %v2747, 4294967168
        %v2764 = vand.u32 %v2748, 4294967168
        %v2765 = vand.u32 %v2749, 4294967168
        %v2766 = vand.u32 %v2750, 4294967168
        %v2767 = vand.u32 %v2751, 4294967168
        %v2768 = vand.u32 %v2752, 4294967168
        %v2769 = vand.u32 %v2753, 4294967168
        %v2770 = vand.u32 %v2754, 4294967168
        %v2771 = vor.u32 %v2763, %v179
        %v2772 = vor.u32 %v2764, %v179
        %v2773 = vor.u32 %v2765, %v179
        %v2774 = vor.u32 %v2766, %v179
        %v2775 = vor.u32 %v2767, %v179
        %v2776 = vor.u32 %v2768, %v179
        %v2777 = vor.u32 %v2769, %v179
        %v2778 = vor.u32 %v2770, %v179
        %2787 = vmin.xlane.f32.xlu0 %v2771
        %v2788 = vpop.xlane.xlu0 %2787
        %2789 = vmin.xlane.f32.xlu0 %v2772
        %v2790 = vpop.xlane.xlu0 %2789
        %2791 = vmin.xlane.f32.xlu0 %v2773
        %v2792 = vpop.xlane.xlu0 %2791
        %2793 = vmin.xlane.f32.xlu0 %v2774
        %v2794 = vpop.xlane.xlu0 %2793
        %2795 = vmin.xlane.f32.xlu0 %v2775
        %v2796 = vpop.xlane.xlu0 %2795
        %2797 = vmin.xlane.f32.xlu0 %v2776
        %v2798 = vpop.xlane.xlu0 %2797
        %2799 = vmin.xlane.f32.xlu0 %v2777
        %v2800 = vpop.xlane.xlu0 %2799
        %2801 = vmin.xlane.f32.xlu0 %v2778
        %v2802 = vpop.xlane.xlu0 %2801
        %v2811 = vand.u32 %v2788, 127
        %v2812 = vand.u32 %v2790, 127
        %v2813 = vand.u32 %v2792, 127
        %v2814 = vand.u32 %v2794, 127
        %v2815 = vand.u32 %v2796, 127
        %v2816 = vand.u32 %v2798, 127
        %v2817 = vand.u32 %v2800, 127
        %v2818 = vand.u32 %v2802, 127
        %v2819 = vand.u32 %v2788, 4294967168
        %v2820 = vand.u32 %v2790, 4294967168
        %v2821 = vand.u32 %v2792, 4294967168
        %v2822 = vand.u32 %v2794, 4294967168
        %v2823 = vand.u32 %v2796, 4294967168
        %v2824 = vand.u32 %v2798, 4294967168
        %v2825 = vand.u32 %v2800, 4294967168
        %v2826 = vand.u32 %v2802, 4294967168
        %v2835 = vmul.f32 %v2819, -0.5
        %v2836 = vmul.f32 %v2820, -0.5
        %v2837 = vmul.f32 %v2821, -0.5
        %v2838 = vmul.f32 %v2822, -0.5
        %v2839 = vmul.f32 %v2823, -0.5
        %v2840 = vmul.f32 %v2824, -0.5
        %v2841 = vmul.f32 %v2825, -0.5
        %v2842 = vmul.f32 %v2826, -0.5
        %v2843 = vmul.f32 %v2835, 1.442695
        %v2844 = vpow.pop %v2843
        %v2845 = vmul.f32 %v2836, 1.442695
        %v2846 = vpow.pop %v2845
        %v2847 = vmul.f32 %v2837, 1.442695
        %v2848 = vpow.pop %v2847
        %v2849 = vmul.f32 %v2838, 1.442695
        %v2850 = vpow.pop %v2849
        %v2851 = vmul.f32 %v2839, 1.442695
        %v2852 = vpow.pop %v2851
        %v2853 = vmul.f32 %v2840, 1.442695
        %v2854 = vpow.pop %v2853
        %v2855 = vmul.f32 %v2841, 1.442695
        %v2856 = vpow.pop %v2855
        %v2857 = vmul.f32 %v2842, 1.442695
        %v2858 = vpow.pop %v2857
        %vm2859 = vcmp.eq.s32.totalorder %v179, %v2811
        %vm2860 = vcmp.eq.s32.totalorder %v179, %v2812
        %vm2861 = vcmp.eq.s32.totalorder %v179, %v2813
        %vm2862 = vcmp.eq.s32.totalorder %v179, %v2814
        %vm2863 = vcmp.eq.s32.totalorder %v179, %v2815
        %vm2864 = vcmp.eq.s32.totalorder %v179, %v2816
        %vm2865 = vcmp.eq.s32.totalorder %v179, %v2817
        %vm2866 = vcmp.eq.s32.totalorder %v179, %v2818
        %v2867 = vsel %vm2859, %v2844, 0.0
        %v2868 = vsel %vm2860, %v2846, 0.0
        %v2869 = vsel %vm2861, %v2848, 0.0
        %v2870 = vsel %vm2862, %v2850, 0.0
        %v2871 = vsel %vm2863, %v2852, 0.0
        %v2872 = vsel %vm2864, %v2854, 0.0
        %v2873 = vsel %vm2865, %v2856, 0.0
        %v2874 = vsel %vm2866, %v2858, 0.0
        %v2875 = vsel %vm2859, inf, %v2771
        %v2876 = vsel %vm2860, inf, %v2772
        %v2877 = vsel %vm2861, inf, %v2773
        %v2878 = vsel %vm2862, inf, %v2774
        %v2879 = vsel %vm2863, inf, %v2775
        %v2880 = vsel %vm2864, inf, %v2776
        %v2881 = vsel %vm2865, inf, %v2777
        %v2882 = vsel %vm2866, inf, %v2778
        %2883 = vmin.xlane.f32.xlu0 %v2875
        %v2884 = vpop.xlane.xlu0 %2883
        %2885 = vmin.xlane.f32.xlu0 %v2876
        %v2886 = vpop.xlane.xlu0 %2885
        %2887 = vmin.xlane.f32.xlu0 %v2877
        %v2888 = vpop.xlane.xlu0 %2887
        %2889 = vmin.xlane.f32.xlu0 %v2878
        %v2890 = vpop.xlane.xlu0 %2889
        %2891 = vmin.xlane.f32.xlu0 %v2879
        %v2892 = vpop.xlane.xlu0 %2891
        %2893 = vmin.xlane.f32.xlu0 %v2880
        %v2894 = vpop.xlane.xlu0 %2893
        %2895 = vmin.xlane.f32.xlu0 %v2881
        %v2896 = vpop.xlane.xlu0 %2895
        %2897 = vmin.xlane.f32.xlu0 %v2882
        %v2898 = vpop.xlane.xlu0 %2897
        %v2907 = vand.u32 %v2884, 127
        %v2908 = vand.u32 %v2886, 127
        %v2909 = vand.u32 %v2888, 127
        %v2910 = vand.u32 %v2890, 127
        %v2911 = vand.u32 %v2892, 127
        %v2912 = vand.u32 %v2894, 127
        %v2913 = vand.u32 %v2896, 127
        %v2914 = vand.u32 %v2898, 127
        %v2915 = vand.u32 %v2884, 4294967168
        %v2916 = vand.u32 %v2886, 4294967168
        %v2917 = vand.u32 %v2888, 4294967168
        %v2918 = vand.u32 %v2890, 4294967168
        %v2919 = vand.u32 %v2892, 4294967168
        %v2920 = vand.u32 %v2894, 4294967168
        %v2921 = vand.u32 %v2896, 4294967168
        %v2922 = vand.u32 %v2898, 4294967168
        %v2931 = vmul.f32 %v2915, -0.5
        %v2932 = vmul.f32 %v2916, -0.5
        %v2933 = vmul.f32 %v2917, -0.5
        %v2934 = vmul.f32 %v2918, -0.5
        %v2935 = vmul.f32 %v2919, -0.5
        %v2936 = vmul.f32 %v2920, -0.5
        %v2937 = vmul.f32 %v2921, -0.5
        %v2938 = vmul.f32 %v2922, -0.5
        %v2939 = vmul.f32 %v2931, 1.442695
        %v2940 = vpow.pop %v2939
        %v2941 = vmul.f32 %v2932, 1.442695
        %v2942 = vpow.pop %v2941
        %v2943 = vmul.f32 %v2933, 1.442695
        %v2944 = vpow.pop %v2943
        %v2945 = vmul.f32 %v2934, 1.442695
        %v2946 = vpow.pop %v2945
        %v2947 = vmul.f32 %v2935, 1.442695
        %v2948 = vpow.pop %v2947
        %v2949 = vmul.f32 %v2936, 1.442695
        %v2950 = vpow.pop %v2949
        %v2951 = vmul.f32 %v2937, 1.442695
        %v2952 = vpow.pop %v2951
        %v2953 = vmul.f32 %v2938, 1.442695
        %v2954 = vpow.pop %v2953
        %vm2955 = vcmp.eq.s32.totalorder %v179, %v2907
        %vm2956 = vcmp.eq.s32.totalorder %v179, %v2908
        %vm2957 = vcmp.eq.s32.totalorder %v179, %v2909
        %vm2958 = vcmp.eq.s32.totalorder %v179, %v2910
        %vm2959 = vcmp.eq.s32.totalorder %v179, %v2911
        %vm2960 = vcmp.eq.s32.totalorder %v179, %v2912
        %vm2961 = vcmp.eq.s32.totalorder %v179, %v2913
        %vm2962 = vcmp.eq.s32.totalorder %v179, %v2914
        %v2963 = vsel %vm2955, %v2940, %v2867
        %v2964 = vsel %vm2956, %v2942, %v2868
        %v2965 = vsel %vm2957, %v2944, %v2869
        %v2966 = vsel %vm2958, %v2946, %v2870
        %v2967 = vsel %vm2959, %v2948, %v2871
        %v2968 = vsel %vm2960, %v2950, %v2872
        %v2969 = vsel %vm2961, %v2952, %v2873
        %v2970 = vsel %vm2962, %v2954, %v2874
        %v2971 = vsel %vm2955, inf, %v2875
        %v2972 = vsel %vm2956, inf, %v2876
        %v2973 = vsel %vm2957, inf, %v2877
        %v2974 = vsel %vm2958, inf, %v2878
        %v2975 = vsel %vm2959, inf, %v2879
        %v2976 = vsel %vm2960, inf, %v2880
        %v2977 = vsel %vm2961, inf, %v2881
        %v2978 = vsel %vm2962, inf, %v2882
        %2979 = vmin.xlane.f32.xlu0 %v2971
        %v2980 = vpop.xlane.xlu0 %2979
        %2981 = vmin.xlane.f32.xlu0 %v2972
        %v2982 = vpop.xlane.xlu0 %2981
        %2983 = vmin.xlane.f32.xlu0 %v2973
        %v2984 = vpop.xlane.xlu0 %2983
        %2985 = vmin.xlane.f32.xlu0 %v2974
        %v2986 = vpop.xlane.xlu0 %2985
        %2987 = vmin.xlane.f32.xlu0 %v2975
        %v2988 = vpop.xlane.xlu0 %2987
        %2989 = vmin.xlane.f32.xlu0 %v2976
        %v2990 = vpop.xlane.xlu0 %2989
        %2991 = vmin.xlane.f32.xlu0 %v2977
        %v2992 = vpop.xlane.xlu0 %2991
        %2993 = vmin.xlane.f32.xlu0 %v2978
        %v2994 = vpop.xlane.xlu0 %2993
        %v3003 = vand.u32 %v2980, 127
        %v3004 = vand.u32 %v2982, 127
        %v3005 = vand.u32 %v2984, 127
        %v3006 = vand.u32 %v2986, 127
        %v3007 = vand.u32 %v2988, 127
        %v3008 = vand.u32 %v2990, 127
        %v3009 = vand.u32 %v2992, 127
        %v3010 = vand.u32 %v2994, 127
        %v3011 = vand.u32 %v2980, 4294967168
        %v3012 = vand.u32 %v2982, 4294967168
        %v3013 = vand.u32 %v2984, 4294967168
        %v3014 = vand.u32 %v2986, 4294967168
        %v3015 = vand.u32 %v2988, 4294967168
        %v3016 = vand.u32 %v2990, 4294967168
        %v3017 = vand.u32 %v2992, 4294967168
        %v3018 = vand.u32 %v2994, 4294967168
        %v3027 = vmul.f32 %v3011, -0.5
        %v3028 = vmul.f32 %v3012, -0.5
        %v3029 = vmul.f32 %v3013, -0.5
        %v3030 = vmul.f32 %v3014, -0.5
        %v3031 = vmul.f32 %v3015, -0.5
        %v3032 = vmul.f32 %v3016, -0.5
        %v3033 = vmul.f32 %v3017, -0.5
        %v3034 = vmul.f32 %v3018, -0.5
        %v3035 = vmul.f32 %v3027, 1.442695
        %v3036 = vpow.pop %v3035
        %v3037 = vmul.f32 %v3028, 1.442695
        %v3038 = vpow.pop %v3037
        %v3039 = vmul.f32 %v3029, 1.442695
        %v3040 = vpow.pop %v3039
        %v3041 = vmul.f32 %v3030, 1.442695
        %v3042 = vpow.pop %v3041
        %v3043 = vmul.f32 %v3031, 1.442695
        %v3044 = vpow.pop %v3043
        %v3045 = vmul.f32 %v3032, 1.442695
        %v3046 = vpow.pop %v3045
        %v3047 = vmul.f32 %v3033, 1.442695
        %v3048 = vpow.pop %v3047
        %v3049 = vmul.f32 %v3034, 1.442695
        %v3050 = vpow.pop %v3049
        %vm3051 = vcmp.eq.s32.totalorder %v179, %v3003
        %vm3052 = vcmp.eq.s32.totalorder %v179, %v3004
        %vm3053 = vcmp.eq.s32.totalorder %v179, %v3005
        %vm3054 = vcmp.eq.s32.totalorder %v179, %v3006
        %vm3055 = vcmp.eq.s32.totalorder %v179, %v3007
        %vm3056 = vcmp.eq.s32.totalorder %v179, %v3008
        %vm3057 = vcmp.eq.s32.totalorder %v179, %v3009
        %vm3058 = vcmp.eq.s32.totalorder %v179, %v3010
        %v3059 = vsel %vm3051, %v3036, %v2963
        %v3060 = vsel %vm3052, %v3038, %v2964
        %v3061 = vsel %vm3053, %v3040, %v2965
        %v3062 = vsel %vm3054, %v3042, %v2966
        %v3063 = vsel %vm3055, %v3044, %v2967
        %v3064 = vsel %vm3056, %v3046, %v2968
        %v3065 = vsel %vm3057, %v3048, %v2969
        %v3066 = vsel %vm3058, %v3050, %v2970
        %v3067 = vsel %vm3051, inf, %v2971
        %v3068 = vsel %vm3052, inf, %v2972
        %v3069 = vsel %vm3053, inf, %v2973
        %v3070 = vsel %vm3054, inf, %v2974
        %v3071 = vsel %vm3055, inf, %v2975
        %v3072 = vsel %vm3056, inf, %v2976
        %v3073 = vsel %vm3057, inf, %v2977
        %v3074 = vsel %vm3058, inf, %v2978
        %3075 = vmin.xlane.f32.xlu0 %v3067
        %v3076 = vpop.xlane.xlu0 %3075
        %3077 = vmin.xlane.f32.xlu0 %v3068
        %v3078 = vpop.xlane.xlu0 %3077
        %3079 = vmin.xlane.f32.xlu0 %v3069
        %v3080 = vpop.xlane.xlu0 %3079
        %3081 = vmin.xlane.f32.xlu0 %v3070
        %v3082 = vpop.xlane.xlu0 %3081
        %3083 = vmin.xlane.f32.xlu0 %v3071
        %v3084 = vpop.xlane.xlu0 %3083
        %3085 = vmin.xlane.f32.xlu0 %v3072
        %v3086 = vpop.xlane.xlu0 %3085
        %3087 = vmin.xlane.f32.xlu0 %v3073
        %v3088 = vpop.xlane.xlu0 %3087
        %3089 = vmin.xlane.f32.xlu0 %v3074
        %v3090 = vpop.xlane.xlu0 %3089
        %v3099 = vand.u32 %v3076, 127
        %v3100 = vand.u32 %v3078, 127
        %v3101 = vand.u32 %v3080, 127
        %v3102 = vand.u32 %v3082, 127
        %v3103 = vand.u32 %v3084, 127
        %v3104 = vand.u32 %v3086, 127
        %v3105 = vand.u32 %v3088, 127
        %v3106 = vand.u32 %v3090, 127
        %v3107 = vand.u32 %v3076, 4294967168
        %v3108 = vand.u32 %v3078, 4294967168
        %v3109 = vand.u32 %v3080, 4294967168
        %v3110 = vand.u32 %v3082, 4294967168
        %v3111 = vand.u32 %v3084, 4294967168
        %v3112 = vand.u32 %v3086, 4294967168
        %v3113 = vand.u32 %v3088, 4294967168
        %v3114 = vand.u32 %v3090, 4294967168
        %v3123 = vmul.f32 %v3107, -0.5
        %v3124 = vmul.f32 %v3108, -0.5
        %v3125 = vmul.f32 %v3109, -0.5
        %v3126 = vmul.f32 %v3110, -0.5
        %v3127 = vmul.f32 %v3111, -0.5
        %v3128 = vmul.f32 %v3112, -0.5
        %v3129 = vmul.f32 %v3113, -0.5
        %v3130 = vmul.f32 %v3114, -0.5
        %v3131 = vmul.f32 %v3123, 1.442695
        %v3132 = vpow.pop %v3131
        %v3133 = vmul.f32 %v3124, 1.442695
        %v3134 = vpow.pop %v3133
        %v3135 = vmul.f32 %v3125, 1.442695
        %v3136 = vpow.pop %v3135
        %v3137 = vmul.f32 %v3126, 1.442695
        %v3138 = vpow.pop %v3137
        %v3139 = vmul.f32 %v3127, 1.442695
        %v3140 = vpow.pop %v3139
        %v3141 = vmul.f32 %v3128, 1.442695
        %v3142 = vpow.pop %v3141
        %v3143 = vmul.f32 %v3129, 1.442695
        %v3144 = vpow.pop %v3143
        %v3145 = vmul.f32 %v3130, 1.442695
        %v3146 = vpow.pop %v3145
        %vm3147 = vcmp.eq.s32.totalorder %v179, %v3099
        %vm3148 = vcmp.eq.s32.totalorder %v179, %v3100
        %vm3149 = vcmp.eq.s32.totalorder %v179, %v3101
        %vm3150 = vcmp.eq.s32.totalorder %v179, %v3102
        %vm3151 = vcmp.eq.s32.totalorder %v179, %v3103
        %vm3152 = vcmp.eq.s32.totalorder %v179, %v3104
        %vm3153 = vcmp.eq.s32.totalorder %v179, %v3105
        %vm3154 = vcmp.eq.s32.totalorder %v179, %v3106
        %v3155 = vsel %vm3147, %v3132, %v3059
        %v3156 = vsel %vm3148, %v3134, %v3060
        %v3157 = vsel %vm3149, %v3136, %v3061
        %v3158 = vsel %vm3150, %v3138, %v3062
        %v3159 = vsel %vm3151, %v3140, %v3063
        %v3160 = vsel %vm3152, %v3142, %v3064
        %v3161 = vsel %vm3153, %v3144, %v3065
        %v3162 = vsel %vm3154, %v3146, %v3066
        %s3163 = scalar_lea.vmem [#allocation2], 256
        %3164 = vst [vmem:[%s3163] sm:$0xff] %v3155
        %3165 = vst [vmem:[%s3163 + $0x8] sm:$0xff] %v3156
        %3166 = vst [vmem:[%s3163 + $0x10] sm:$0xff] %v3157
        %3167 = vst [vmem:[%s3163 + $0x18] sm:$0xff] %v3158
        %3168 = vst [vmem:[%s3163 + $0x20] sm:$0xff] %v3159
        %3169 = vst [vmem:[%s3163 + $0x28] sm:$0xff] %v3160
        %3170 = vst [vmem:[%s3163 + $0x30] sm:$0xff] %v3161
        %3171 = vst [vmem:[%s3163 + $0x38] sm:$0xff] %v3162
        %s3172 = scalar_lea.vmem %s169, 320
        %v3173 = vld [vmem:[%s3172] sm:$0xff]
        %v3174 = vld [vmem:[%s3172 + $0x8] sm:$0xff]
        %v3175 = vld [vmem:[%s3172 + $0x10] sm:$0xff]
        %v3176 = vld [vmem:[%s3172 + $0x18] sm:$0xff]
        %v3177 = vld [vmem:[%s3172 + $0x20] sm:$0xff]
        %v3178 = vld [vmem:[%s3172 + $0x28] sm:$0xff]
        %v3179 = vld [vmem:[%s3172 + $0x30] sm:$0xff]
        %v3180 = vld [vmem:[%s3172 + $0x38] sm:$0xff]
        %3182 = vset.pattern.permute.xlu0 0
        %3183 = vperm.xlu0 %3182, %v3173
        %v3184 = vpop.permute.xlu0 %3183
        %3187 = vset.pattern.permute.xlu0 0
        %3188 = vperm.xlu0 %3187, %v3174
        %v3189 = vpop.permute.xlu0 %3188
        %3192 = vset.pattern.permute.xlu0 0
        %3193 = vperm.xlu0 %3192, %v3175
        %v3194 = vpop.permute.xlu0 %3193
        %3197 = vset.pattern.permute.xlu0 0
        %3198 = vperm.xlu0 %3197, %v3176
        %v3199 = vpop.permute.xlu0 %3198
        %3202 = vset.pattern.permute.xlu0 0
        %3203 = vperm.xlu0 %3202, %v3177
        %v3204 = vpop.permute.xlu0 %3203
        %3207 = vset.pattern.permute.xlu0 0
        %3208 = vperm.xlu0 %3207, %v3178
        %v3209 = vpop.permute.xlu0 %3208
        %3212 = vset.pattern.permute.xlu0 0
        %3213 = vperm.xlu0 %3212, %v3179
        %v3214 = vpop.permute.xlu0 %3213
        %3217 = vset.pattern.permute.xlu0 0
        %3218 = vperm.xlu0 %3217, %v3180
        %v3219 = vpop.permute.xlu0 %3218
        %3221 = vset.pattern.permute.xlu0 1
        %3222 = vperm.xlu0 %3221, %v3173
        %v3223 = vpop.permute.xlu0 %3222
        %3225 = vset.pattern.permute.xlu0 1
        %3226 = vperm.xlu0 %3225, %v3174
        %v3227 = vpop.permute.xlu0 %3226
        %3229 = vset.pattern.permute.xlu0 1
        %3230 = vperm.xlu0 %3229, %v3175
        %v3231 = vpop.permute.xlu0 %3230
        %3233 = vset.pattern.permute.xlu0 1
        %3234 = vperm.xlu0 %3233, %v3176
        %v3235 = vpop.permute.xlu0 %3234
        %3237 = vset.pattern.permute.xlu0 1
        %3238 = vperm.xlu0 %3237, %v3177
        %v3239 = vpop.permute.xlu0 %3238
        %3241 = vset.pattern.permute.xlu0 1
        %3242 = vperm.xlu0 %3241, %v3178
        %v3243 = vpop.permute.xlu0 %3242
        %3245 = vset.pattern.permute.xlu0 1
        %3246 = vperm.xlu0 %3245, %v3179
        %v3247 = vpop.permute.xlu0 %3246
        %3249 = vset.pattern.permute.xlu0 1
        %3250 = vperm.xlu0 %3249, %v3180
        %v3251 = vpop.permute.xlu0 %3250
        %v3253 = vmul.f32 %v263, %v3184
        %v3254 = vmul.f32 %v263, %v3189
        %v3255 = vmul.f32 %v263, %v3194
        %v3256 = vmul.f32 %v263, %v3199
        %v3257 = vmul.f32 %v263, %v3204
        %v3258 = vmul.f32 %v263, %v3209
        %v3259 = vmul.f32 %v263, %v3214
        %v3260 = vmul.f32 %v263, %v3219
        %v3261 = vmul.f32 %v275, %v3223
        %v3262 = vmul.f32 %v275, %v3227
        %v3263 = vmul.f32 %v275, %v3231
        %v3264 = vmul.f32 %v275, %v3235
        %v3265 = vmul.f32 %v275, %v3239
        %v3266 = vmul.f32 %v275, %v3243
        %v3267 = vmul.f32 %v275, %v3247
        %v3268 = vmul.f32 %v275, %v3251
        %v3269 = vadd.f32 %v3253, %v3261
        %v3270 = vadd.f32 %v3254, %v3262
        %v3271 = vadd.f32 %v3255, %v3263
        %v3272 = vadd.f32 %v3256, %v3264
        %v3273 = vadd.f32 %v3257, %v3265
        %v3274 = vadd.f32 %v3258, %v3266
        %v3275 = vadd.f32 %v3259, %v3267
        %v3276 = vadd.f32 %v3260, %v3268
        %v3277 = vsub.f32 %v3269, %v295
        %v3278 = vsub.f32 %v3270, %v295
        %v3279 = vsub.f32 %v3271, %v295
        %v3280 = vsub.f32 %v3272, %v295
        %v3281 = vsub.f32 %v3273, %v295
        %v3282 = vsub.f32 %v3274, %v295
        %v3283 = vsub.f32 %v3275, %v295
        %v3284 = vsub.f32 %v3276, %v295
        %v3285 = vmul.f32 %v307, %v3184
        %v3286 = vmul.f32 %v307, %v3189
        %v3287 = vmul.f32 %v307, %v3194
        %v3288 = vmul.f32 %v307, %v3199
        %v3289 = vmul.f32 %v307, %v3204
        %v3290 = vmul.f32 %v307, %v3209
        %v3291 = vmul.f32 %v307, %v3214
        %v3292 = vmul.f32 %v307, %v3219
        %v3293 = vmul.f32 %v319, %v3223
        %v3294 = vmul.f32 %v319, %v3227
        %v3295 = vmul.f32 %v319, %v3231
        %v3296 = vmul.f32 %v319, %v3235
        %v3297 = vmul.f32 %v319, %v3239
        %v3298 = vmul.f32 %v319, %v3243
        %v3299 = vmul.f32 %v319, %v3247
        %v3300 = vmul.f32 %v319, %v3251
        %v3301 = vadd.f32 %v3285, %v3293
        %v3302 = vadd.f32 %v3286, %v3294
        %v3303 = vadd.f32 %v3287, %v3295
        %v3304 = vadd.f32 %v3288, %v3296
        %v3305 = vadd.f32 %v3289, %v3297
        %v3306 = vadd.f32 %v3290, %v3298
        %v3307 = vadd.f32 %v3291, %v3299
        %v3308 = vadd.f32 %v3292, %v3300
        %v3309 = vsub.f32 %v3301, %v339
        %v3310 = vsub.f32 %v3302, %v339
        %v3311 = vsub.f32 %v3303, %v339
        %v3312 = vsub.f32 %v3304, %v339
        %v3313 = vsub.f32 %v3305, %v339
        %v3314 = vsub.f32 %v3306, %v339
        %v3315 = vsub.f32 %v3307, %v339
        %v3316 = vsub.f32 %v3308, %v339
        %v3317 = vmul.f32 %v3277, %v3277
        %v3318 = vmul.f32 %v3278, %v3278
        %v3319 = vmul.f32 %v3279, %v3279
        %v3320 = vmul.f32 %v3280, %v3280
        %v3321 = vmul.f32 %v3281, %v3281
        %v3322 = vmul.f32 %v3282, %v3282
        %v3323 = vmul.f32 %v3283, %v3283
        %v3324 = vmul.f32 %v3284, %v3284
        %v3325 = vmul.f32 %v3309, %v3309
        %v3326 = vmul.f32 %v3310, %v3310
        %v3327 = vmul.f32 %v3311, %v3311
        %v3328 = vmul.f32 %v3312, %v3312
        %v3329 = vmul.f32 %v3313, %v3313
        %v3330 = vmul.f32 %v3314, %v3314
        %v3331 = vmul.f32 %v3315, %v3315
        %v3332 = vmul.f32 %v3316, %v3316
        %v3333 = vadd.f32 %v3317, %v3325
        %v3334 = vadd.f32 %v3318, %v3326
        %v3335 = vadd.f32 %v3319, %v3327
        %v3336 = vadd.f32 %v3320, %v3328
        %v3337 = vadd.f32 %v3321, %v3329
        %v3338 = vadd.f32 %v3322, %v3330
        %v3339 = vadd.f32 %v3323, %v3331
        %v3340 = vadd.f32 %v3324, %v3332
        %v3341 = vmin.f32 %v3333, 1e+30
        %v3342 = vmin.f32 %v3334, 1e+30
        %v3343 = vmin.f32 %v3335, 1e+30
        %v3344 = vmin.f32 %v3336, 1e+30
        %v3345 = vmin.f32 %v3337, 1e+30
        %v3346 = vmin.f32 %v3338, 1e+30
        %v3347 = vmin.f32 %v3339, 1e+30
        %v3348 = vmin.f32 %v3340, 1e+30
        %v3357 = vand.u32 %v3341, 4294967168
        %v3358 = vand.u32 %v3342, 4294967168
        %v3359 = vand.u32 %v3343, 4294967168
        %v3360 = vand.u32 %v3344, 4294967168
        %v3361 = vand.u32 %v3345, 4294967168
        %v3362 = vand.u32 %v3346, 4294967168
        %v3363 = vand.u32 %v3347, 4294967168
        %v3364 = vand.u32 %v3348, 4294967168
        %v3365 = vor.u32 %v3357, %v179
        %v3366 = vor.u32 %v3358, %v179
        %v3367 = vor.u32 %v3359, %v179
        %v3368 = vor.u32 %v3360, %v179
        %v3369 = vor.u32 %v3361, %v179
        %v3370 = vor.u32 %v3362, %v179
        %v3371 = vor.u32 %v3363, %v179
        %v3372 = vor.u32 %v3364, %v179
        %3381 = vmin.xlane.f32.xlu0 %v3365
        %v3382 = vpop.xlane.xlu0 %3381
        %3383 = vmin.xlane.f32.xlu0 %v3366
        %v3384 = vpop.xlane.xlu0 %3383
        %3385 = vmin.xlane.f32.xlu0 %v3367
        %v3386 = vpop.xlane.xlu0 %3385
        %3387 = vmin.xlane.f32.xlu0 %v3368
        %v3388 = vpop.xlane.xlu0 %3387
        %3389 = vmin.xlane.f32.xlu0 %v3369
        %v3390 = vpop.xlane.xlu0 %3389
        %3391 = vmin.xlane.f32.xlu0 %v3370
        %v3392 = vpop.xlane.xlu0 %3391
        %3393 = vmin.xlane.f32.xlu0 %v3371
        %v3394 = vpop.xlane.xlu0 %3393
        %3395 = vmin.xlane.f32.xlu0 %v3372
        %v3396 = vpop.xlane.xlu0 %3395
        %v3405 = vand.u32 %v3382, 127
        %v3406 = vand.u32 %v3384, 127
        %v3407 = vand.u32 %v3386, 127
        %v3408 = vand.u32 %v3388, 127
        %v3409 = vand.u32 %v3390, 127
        %v3410 = vand.u32 %v3392, 127
        %v3411 = vand.u32 %v3394, 127
        %v3412 = vand.u32 %v3396, 127
        %v3413 = vand.u32 %v3382, 4294967168
        %v3414 = vand.u32 %v3384, 4294967168
        %v3415 = vand.u32 %v3386, 4294967168
        %v3416 = vand.u32 %v3388, 4294967168
        %v3417 = vand.u32 %v3390, 4294967168
        %v3418 = vand.u32 %v3392, 4294967168
        %v3419 = vand.u32 %v3394, 4294967168
        %v3420 = vand.u32 %v3396, 4294967168
        %v3429 = vmul.f32 %v3413, -0.5
        %v3430 = vmul.f32 %v3414, -0.5
        %v3431 = vmul.f32 %v3415, -0.5
        %v3432 = vmul.f32 %v3416, -0.5
        %v3433 = vmul.f32 %v3417, -0.5
        %v3434 = vmul.f32 %v3418, -0.5
        %v3435 = vmul.f32 %v3419, -0.5
        %v3436 = vmul.f32 %v3420, -0.5
        %v3437 = vmul.f32 %v3429, 1.442695
        %v3438 = vpow.pop %v3437
        %v3439 = vmul.f32 %v3430, 1.442695
        %v3440 = vpow.pop %v3439
        %v3441 = vmul.f32 %v3431, 1.442695
        %v3442 = vpow.pop %v3441
        %v3443 = vmul.f32 %v3432, 1.442695
        %v3444 = vpow.pop %v3443
        %v3445 = vmul.f32 %v3433, 1.442695
        %v3446 = vpow.pop %v3445
        %v3447 = vmul.f32 %v3434, 1.442695
        %v3448 = vpow.pop %v3447
        %v3449 = vmul.f32 %v3435, 1.442695
        %v3450 = vpow.pop %v3449
        %v3451 = vmul.f32 %v3436, 1.442695
        %v3452 = vpow.pop %v3451
        %vm3453 = vcmp.eq.s32.totalorder %v179, %v3405
        %vm3454 = vcmp.eq.s32.totalorder %v179, %v3406
        %vm3455 = vcmp.eq.s32.totalorder %v179, %v3407
        %vm3456 = vcmp.eq.s32.totalorder %v179, %v3408
        %vm3457 = vcmp.eq.s32.totalorder %v179, %v3409
        %vm3458 = vcmp.eq.s32.totalorder %v179, %v3410
        %vm3459 = vcmp.eq.s32.totalorder %v179, %v3411
        %vm3460 = vcmp.eq.s32.totalorder %v179, %v3412
        %v3461 = vsel %vm3453, %v3438, 0.0
        %v3462 = vsel %vm3454, %v3440, 0.0
        %v3463 = vsel %vm3455, %v3442, 0.0
        %v3464 = vsel %vm3456, %v3444, 0.0
        %v3465 = vsel %vm3457, %v3446, 0.0
        %v3466 = vsel %vm3458, %v3448, 0.0
        %v3467 = vsel %vm3459, %v3450, 0.0
        %v3468 = vsel %vm3460, %v3452, 0.0
        %v3469 = vsel %vm3453, inf, %v3365
        %v3470 = vsel %vm3454, inf, %v3366
        %v3471 = vsel %vm3455, inf, %v3367
        %v3472 = vsel %vm3456, inf, %v3368
        %v3473 = vsel %vm3457, inf, %v3369
        %v3474 = vsel %vm3458, inf, %v3370
        %v3475 = vsel %vm3459, inf, %v3371
        %v3476 = vsel %vm3460, inf, %v3372
        %3477 = vmin.xlane.f32.xlu0 %v3469
        %v3478 = vpop.xlane.xlu0 %3477
        %3479 = vmin.xlane.f32.xlu0 %v3470
        %v3480 = vpop.xlane.xlu0 %3479
        %3481 = vmin.xlane.f32.xlu0 %v3471
        %v3482 = vpop.xlane.xlu0 %3481
        %3483 = vmin.xlane.f32.xlu0 %v3472
        %v3484 = vpop.xlane.xlu0 %3483
        %3485 = vmin.xlane.f32.xlu0 %v3473
        %v3486 = vpop.xlane.xlu0 %3485
        %3487 = vmin.xlane.f32.xlu0 %v3474
        %v3488 = vpop.xlane.xlu0 %3487
        %3489 = vmin.xlane.f32.xlu0 %v3475
        %v3490 = vpop.xlane.xlu0 %3489
        %3491 = vmin.xlane.f32.xlu0 %v3476
        %v3492 = vpop.xlane.xlu0 %3491
        %v3501 = vand.u32 %v3478, 127
        %v3502 = vand.u32 %v3480, 127
        %v3503 = vand.u32 %v3482, 127
        %v3504 = vand.u32 %v3484, 127
        %v3505 = vand.u32 %v3486, 127
        %v3506 = vand.u32 %v3488, 127
        %v3507 = vand.u32 %v3490, 127
        %v3508 = vand.u32 %v3492, 127
        %v3509 = vand.u32 %v3478, 4294967168
        %v3510 = vand.u32 %v3480, 4294967168
        %v3511 = vand.u32 %v3482, 4294967168
        %v3512 = vand.u32 %v3484, 4294967168
        %v3513 = vand.u32 %v3486, 4294967168
        %v3514 = vand.u32 %v3488, 4294967168
        %v3515 = vand.u32 %v3490, 4294967168
        %v3516 = vand.u32 %v3492, 4294967168
        %v3525 = vmul.f32 %v3509, -0.5
        %v3526 = vmul.f32 %v3510, -0.5
        %v3527 = vmul.f32 %v3511, -0.5
        %v3528 = vmul.f32 %v3512, -0.5
        %v3529 = vmul.f32 %v3513, -0.5
        %v3530 = vmul.f32 %v3514, -0.5
        %v3531 = vmul.f32 %v3515, -0.5
        %v3532 = vmul.f32 %v3516, -0.5
        %v3533 = vmul.f32 %v3525, 1.442695
        %v3534 = vpow.pop %v3533
        %v3535 = vmul.f32 %v3526, 1.442695
        %v3536 = vpow.pop %v3535
        %v3537 = vmul.f32 %v3527, 1.442695
        %v3538 = vpow.pop %v3537
        %v3539 = vmul.f32 %v3528, 1.442695
        %v3540 = vpow.pop %v3539
        %v3541 = vmul.f32 %v3529, 1.442695
        %v3542 = vpow.pop %v3541
        %v3543 = vmul.f32 %v3530, 1.442695
        %v3544 = vpow.pop %v3543
        %v3545 = vmul.f32 %v3531, 1.442695
        %v3546 = vpow.pop %v3545
        %v3547 = vmul.f32 %v3532, 1.442695
        %v3548 = vpow.pop %v3547
        %vm3549 = vcmp.eq.s32.totalorder %v179, %v3501
        %vm3550 = vcmp.eq.s32.totalorder %v179, %v3502
        %vm3551 = vcmp.eq.s32.totalorder %v179, %v3503
        %vm3552 = vcmp.eq.s32.totalorder %v179, %v3504
        %vm3553 = vcmp.eq.s32.totalorder %v179, %v3505
        %vm3554 = vcmp.eq.s32.totalorder %v179, %v3506
        %vm3555 = vcmp.eq.s32.totalorder %v179, %v3507
        %vm3556 = vcmp.eq.s32.totalorder %v179, %v3508
        %v3557 = vsel %vm3549, %v3534, %v3461
        %v3558 = vsel %vm3550, %v3536, %v3462
        %v3559 = vsel %vm3551, %v3538, %v3463
        %v3560 = vsel %vm3552, %v3540, %v3464
        %v3561 = vsel %vm3553, %v3542, %v3465
        %v3562 = vsel %vm3554, %v3544, %v3466
        %v3563 = vsel %vm3555, %v3546, %v3467
        %v3564 = vsel %vm3556, %v3548, %v3468
        %v3565 = vsel %vm3549, inf, %v3469
        %v3566 = vsel %vm3550, inf, %v3470
        %v3567 = vsel %vm3551, inf, %v3471
        %v3568 = vsel %vm3552, inf, %v3472
        %v3569 = vsel %vm3553, inf, %v3473
        %v3570 = vsel %vm3554, inf, %v3474
        %v3571 = vsel %vm3555, inf, %v3475
        %v3572 = vsel %vm3556, inf, %v3476
        %3573 = vmin.xlane.f32.xlu0 %v3565
        %v3574 = vpop.xlane.xlu0 %3573
        %3575 = vmin.xlane.f32.xlu0 %v3566
        %v3576 = vpop.xlane.xlu0 %3575
        %3577 = vmin.xlane.f32.xlu0 %v3567
        %v3578 = vpop.xlane.xlu0 %3577
        %3579 = vmin.xlane.f32.xlu0 %v3568
        %v3580 = vpop.xlane.xlu0 %3579
        %3581 = vmin.xlane.f32.xlu0 %v3569
        %v3582 = vpop.xlane.xlu0 %3581
        %3583 = vmin.xlane.f32.xlu0 %v3570
        %v3584 = vpop.xlane.xlu0 %3583
        %3585 = vmin.xlane.f32.xlu0 %v3571
        %v3586 = vpop.xlane.xlu0 %3585
        %3587 = vmin.xlane.f32.xlu0 %v3572
        %v3588 = vpop.xlane.xlu0 %3587
        %v3597 = vand.u32 %v3574, 127
        %v3598 = vand.u32 %v3576, 127
        %v3599 = vand.u32 %v3578, 127
        %v3600 = vand.u32 %v3580, 127
        %v3601 = vand.u32 %v3582, 127
        %v3602 = vand.u32 %v3584, 127
        %v3603 = vand.u32 %v3586, 127
        %v3604 = vand.u32 %v3588, 127
        %v3605 = vand.u32 %v3574, 4294967168
        %v3606 = vand.u32 %v3576, 4294967168
        %v3607 = vand.u32 %v3578, 4294967168
        %v3608 = vand.u32 %v3580, 4294967168
        %v3609 = vand.u32 %v3582, 4294967168
        %v3610 = vand.u32 %v3584, 4294967168
        %v3611 = vand.u32 %v3586, 4294967168
        %v3612 = vand.u32 %v3588, 4294967168
        %v3621 = vmul.f32 %v3605, -0.5
        %v3622 = vmul.f32 %v3606, -0.5
        %v3623 = vmul.f32 %v3607, -0.5
        %v3624 = vmul.f32 %v3608, -0.5
        %v3625 = vmul.f32 %v3609, -0.5
        %v3626 = vmul.f32 %v3610, -0.5
        %v3627 = vmul.f32 %v3611, -0.5
        %v3628 = vmul.f32 %v3612, -0.5
        %v3629 = vmul.f32 %v3621, 1.442695
        %v3630 = vpow.pop %v3629
        %v3631 = vmul.f32 %v3622, 1.442695
        %v3632 = vpow.pop %v3631
        %v3633 = vmul.f32 %v3623, 1.442695
        %v3634 = vpow.pop %v3633
        %v3635 = vmul.f32 %v3624, 1.442695
        %v3636 = vpow.pop %v3635
        %v3637 = vmul.f32 %v3625, 1.442695
        %v3638 = vpow.pop %v3637
        %v3639 = vmul.f32 %v3626, 1.442695
        %v3640 = vpow.pop %v3639
        %v3641 = vmul.f32 %v3627, 1.442695
        %v3642 = vpow.pop %v3641
        %v3643 = vmul.f32 %v3628, 1.442695
        %v3644 = vpow.pop %v3643
        %vm3645 = vcmp.eq.s32.totalorder %v179, %v3597
        %vm3646 = vcmp.eq.s32.totalorder %v179, %v3598
        %vm3647 = vcmp.eq.s32.totalorder %v179, %v3599
        %vm3648 = vcmp.eq.s32.totalorder %v179, %v3600
        %vm3649 = vcmp.eq.s32.totalorder %v179, %v3601
        %vm3650 = vcmp.eq.s32.totalorder %v179, %v3602
        %vm3651 = vcmp.eq.s32.totalorder %v179, %v3603
        %vm3652 = vcmp.eq.s32.totalorder %v179, %v3604
        %v3653 = vsel %vm3645, %v3630, %v3557
        %v3654 = vsel %vm3646, %v3632, %v3558
        %v3655 = vsel %vm3647, %v3634, %v3559
        %v3656 = vsel %vm3648, %v3636, %v3560
        %v3657 = vsel %vm3649, %v3638, %v3561
        %v3658 = vsel %vm3650, %v3640, %v3562
        %v3659 = vsel %vm3651, %v3642, %v3563
        %v3660 = vsel %vm3652, %v3644, %v3564
        %v3661 = vsel %vm3645, inf, %v3565
        %v3662 = vsel %vm3646, inf, %v3566
        %v3663 = vsel %vm3647, inf, %v3567
        %v3664 = vsel %vm3648, inf, %v3568
        %v3665 = vsel %vm3649, inf, %v3569
        %v3666 = vsel %vm3650, inf, %v3570
        %v3667 = vsel %vm3651, inf, %v3571
        %v3668 = vsel %vm3652, inf, %v3572
        %3669 = vmin.xlane.f32.xlu0 %v3661
        %v3670 = vpop.xlane.xlu0 %3669
        %3671 = vmin.xlane.f32.xlu0 %v3662
        %v3672 = vpop.xlane.xlu0 %3671
        %3673 = vmin.xlane.f32.xlu0 %v3663
        %v3674 = vpop.xlane.xlu0 %3673
        %3675 = vmin.xlane.f32.xlu0 %v3664
        %v3676 = vpop.xlane.xlu0 %3675
        %3677 = vmin.xlane.f32.xlu0 %v3665
        %v3678 = vpop.xlane.xlu0 %3677
        %3679 = vmin.xlane.f32.xlu0 %v3666
        %v3680 = vpop.xlane.xlu0 %3679
        %3681 = vmin.xlane.f32.xlu0 %v3667
        %v3682 = vpop.xlane.xlu0 %3681
        %3683 = vmin.xlane.f32.xlu0 %v3668
        %v3684 = vpop.xlane.xlu0 %3683
        %v3693 = vand.u32 %v3670, 127
        %v3694 = vand.u32 %v3672, 127
        %v3695 = vand.u32 %v3674, 127
        %v3696 = vand.u32 %v3676, 127
        %v3697 = vand.u32 %v3678, 127
        %v3698 = vand.u32 %v3680, 127
        %v3699 = vand.u32 %v3682, 127
        %v3700 = vand.u32 %v3684, 127
        %v3701 = vand.u32 %v3670, 4294967168
        %v3702 = vand.u32 %v3672, 4294967168
        %v3703 = vand.u32 %v3674, 4294967168
        %v3704 = vand.u32 %v3676, 4294967168
        %v3705 = vand.u32 %v3678, 4294967168
        %v3706 = vand.u32 %v3680, 4294967168
        %v3707 = vand.u32 %v3682, 4294967168
        %v3708 = vand.u32 %v3684, 4294967168
        %v3717 = vmul.f32 %v3701, -0.5
        %v3718 = vmul.f32 %v3702, -0.5
        %v3719 = vmul.f32 %v3703, -0.5
        %v3720 = vmul.f32 %v3704, -0.5
        %v3721 = vmul.f32 %v3705, -0.5
        %v3722 = vmul.f32 %v3706, -0.5
        %v3723 = vmul.f32 %v3707, -0.5
        %v3724 = vmul.f32 %v3708, -0.5
        %v3725 = vmul.f32 %v3717, 1.442695
        %v3726 = vpow.pop %v3725
        %v3727 = vmul.f32 %v3718, 1.442695
        %v3728 = vpow.pop %v3727
        %v3729 = vmul.f32 %v3719, 1.442695
        %v3730 = vpow.pop %v3729
        %v3731 = vmul.f32 %v3720, 1.442695
        %v3732 = vpow.pop %v3731
        %v3733 = vmul.f32 %v3721, 1.442695
        %v3734 = vpow.pop %v3733
        %v3735 = vmul.f32 %v3722, 1.442695
        %v3736 = vpow.pop %v3735
        %v3737 = vmul.f32 %v3723, 1.442695
        %v3738 = vpow.pop %v3737
        %v3739 = vmul.f32 %v3724, 1.442695
        %v3740 = vpow.pop %v3739
        %vm3741 = vcmp.eq.s32.totalorder %v179, %v3693
        %vm3742 = vcmp.eq.s32.totalorder %v179, %v3694
        %vm3743 = vcmp.eq.s32.totalorder %v179, %v3695
        %vm3744 = vcmp.eq.s32.totalorder %v179, %v3696
        %vm3745 = vcmp.eq.s32.totalorder %v179, %v3697
        %vm3746 = vcmp.eq.s32.totalorder %v179, %v3698
        %vm3747 = vcmp.eq.s32.totalorder %v179, %v3699
        %vm3748 = vcmp.eq.s32.totalorder %v179, %v3700
        %v3749 = vsel %vm3741, %v3726, %v3653
        %v3750 = vsel %vm3742, %v3728, %v3654
        %v3751 = vsel %vm3743, %v3730, %v3655
        %v3752 = vsel %vm3744, %v3732, %v3656
        %v3753 = vsel %vm3745, %v3734, %v3657
        %v3754 = vsel %vm3746, %v3736, %v3658
        %v3755 = vsel %vm3747, %v3738, %v3659
        %v3756 = vsel %vm3748, %v3740, %v3660
        %s3757 = scalar_lea.vmem [#allocation2], 320
        %3758 = vst [vmem:[%s3757] sm:$0xff] %v3749
        %3759 = vst [vmem:[%s3757 + $0x8] sm:$0xff] %v3750
        %3760 = vst [vmem:[%s3757 + $0x10] sm:$0xff] %v3751
        %3761 = vst [vmem:[%s3757 + $0x18] sm:$0xff] %v3752
        %3762 = vst [vmem:[%s3757 + $0x20] sm:$0xff] %v3753
        %3763 = vst [vmem:[%s3757 + $0x28] sm:$0xff] %v3754
        %3764 = vst [vmem:[%s3757 + $0x30] sm:$0xff] %v3755
        %3765 = vst [vmem:[%s3757 + $0x38] sm:$0xff] %v3756
        %s3766 = scalar_lea.vmem %s169, 384
        %v3767 = vld [vmem:[%s3766] sm:$0xff]
        %v3768 = vld [vmem:[%s3766 + $0x8] sm:$0xff]
        %v3769 = vld [vmem:[%s3766 + $0x10] sm:$0xff]
        %v3770 = vld [vmem:[%s3766 + $0x18] sm:$0xff]
        %v3771 = vld [vmem:[%s3766 + $0x20] sm:$0xff]
        %v3772 = vld [vmem:[%s3766 + $0x28] sm:$0xff]
        %v3773 = vld [vmem:[%s3766 + $0x30] sm:$0xff]
        %v3774 = vld [vmem:[%s3766 + $0x38] sm:$0xff]
        %3776 = vset.pattern.permute.xlu0 0
        %3777 = vperm.xlu0 %3776, %v3767
        %v3778 = vpop.permute.xlu0 %3777
        %3781 = vset.pattern.permute.xlu0 0
        %3782 = vperm.xlu0 %3781, %v3768
        %v3783 = vpop.permute.xlu0 %3782
        %3786 = vset.pattern.permute.xlu0 0
        %3787 = vperm.xlu0 %3786, %v3769
        %v3788 = vpop.permute.xlu0 %3787
        %3791 = vset.pattern.permute.xlu0 0
        %3792 = vperm.xlu0 %3791, %v3770
        %v3793 = vpop.permute.xlu0 %3792
        %3796 = vset.pattern.permute.xlu0 0
        %3797 = vperm.xlu0 %3796, %v3771
        %v3798 = vpop.permute.xlu0 %3797
        %3801 = vset.pattern.permute.xlu0 0
        %3802 = vperm.xlu0 %3801, %v3772
        %v3803 = vpop.permute.xlu0 %3802
        %3806 = vset.pattern.permute.xlu0 0
        %3807 = vperm.xlu0 %3806, %v3773
        %v3808 = vpop.permute.xlu0 %3807
        %3811 = vset.pattern.permute.xlu0 0
        %3812 = vperm.xlu0 %3811, %v3774
        %v3813 = vpop.permute.xlu0 %3812
        %3815 = vset.pattern.permute.xlu0 1
        %3816 = vperm.xlu0 %3815, %v3767
        %v3817 = vpop.permute.xlu0 %3816
        %3819 = vset.pattern.permute.xlu0 1
        %3820 = vperm.xlu0 %3819, %v3768
        %v3821 = vpop.permute.xlu0 %3820
        %3823 = vset.pattern.permute.xlu0 1
        %3824 = vperm.xlu0 %3823, %v3769
        %v3825 = vpop.permute.xlu0 %3824
        %3827 = vset.pattern.permute.xlu0 1
        %3828 = vperm.xlu0 %3827, %v3770
        %v3829 = vpop.permute.xlu0 %3828
        %3831 = vset.pattern.permute.xlu0 1
        %3832 = vperm.xlu0 %3831, %v3771
        %v3833 = vpop.permute.xlu0 %3832
        %3835 = vset.pattern.permute.xlu0 1
        %3836 = vperm.xlu0 %3835, %v3772
        %v3837 = vpop.permute.xlu0 %3836
        %3839 = vset.pattern.permute.xlu0 1
        %3840 = vperm.xlu0 %3839, %v3773
        %v3841 = vpop.permute.xlu0 %3840
        %3843 = vset.pattern.permute.xlu0 1
        %3844 = vperm.xlu0 %3843, %v3774
        %v3845 = vpop.permute.xlu0 %3844
        %v3847 = vmul.f32 %v263, %v3778
        %v3848 = vmul.f32 %v263, %v3783
        %v3849 = vmul.f32 %v263, %v3788
        %v3850 = vmul.f32 %v263, %v3793
        %v3851 = vmul.f32 %v263, %v3798
        %v3852 = vmul.f32 %v263, %v3803
        %v3853 = vmul.f32 %v263, %v3808
        %v3854 = vmul.f32 %v263, %v3813
        %v3855 = vmul.f32 %v275, %v3817
        %v3856 = vmul.f32 %v275, %v3821
        %v3857 = vmul.f32 %v275, %v3825
        %v3858 = vmul.f32 %v275, %v3829
        %v3859 = vmul.f32 %v275, %v3833
        %v3860 = vmul.f32 %v275, %v3837
        %v3861 = vmul.f32 %v275, %v3841
        %v3862 = vmul.f32 %v275, %v3845
        %v3863 = vadd.f32 %v3847, %v3855
        %v3864 = vadd.f32 %v3848, %v3856
        %v3865 = vadd.f32 %v3849, %v3857
        %v3866 = vadd.f32 %v3850, %v3858
        %v3867 = vadd.f32 %v3851, %v3859
        %v3868 = vadd.f32 %v3852, %v3860
        %v3869 = vadd.f32 %v3853, %v3861
        %v3870 = vadd.f32 %v3854, %v3862
        %v3871 = vsub.f32 %v3863, %v295
        %v3872 = vsub.f32 %v3864, %v295
        %v3873 = vsub.f32 %v3865, %v295
        %v3874 = vsub.f32 %v3866, %v295
        %v3875 = vsub.f32 %v3867, %v295
        %v3876 = vsub.f32 %v3868, %v295
        %v3877 = vsub.f32 %v3869, %v295
        %v3878 = vsub.f32 %v3870, %v295
        %v3879 = vmul.f32 %v307, %v3778
        %v3880 = vmul.f32 %v307, %v3783
        %v3881 = vmul.f32 %v307, %v3788
        %v3882 = vmul.f32 %v307, %v3793
        %v3883 = vmul.f32 %v307, %v3798
        %v3884 = vmul.f32 %v307, %v3803
        %v3885 = vmul.f32 %v307, %v3808
        %v3886 = vmul.f32 %v307, %v3813
        %v3887 = vmul.f32 %v319, %v3817
        %v3888 = vmul.f32 %v319, %v3821
        %v3889 = vmul.f32 %v319, %v3825
        %v3890 = vmul.f32 %v319, %v3829
        %v3891 = vmul.f32 %v319, %v3833
        %v3892 = vmul.f32 %v319, %v3837
        %v3893 = vmul.f32 %v319, %v3841
        %v3894 = vmul.f32 %v319, %v3845
        %v3895 = vadd.f32 %v3879, %v3887
        %v3896 = vadd.f32 %v3880, %v3888
        %v3897 = vadd.f32 %v3881, %v3889
        %v3898 = vadd.f32 %v3882, %v3890
        %v3899 = vadd.f32 %v3883, %v3891
        %v3900 = vadd.f32 %v3884, %v3892
        %v3901 = vadd.f32 %v3885, %v3893
        %v3902 = vadd.f32 %v3886, %v3894
        %v3903 = vsub.f32 %v3895, %v339
        %v3904 = vsub.f32 %v3896, %v339
        %v3905 = vsub.f32 %v3897, %v339
        %v3906 = vsub.f32 %v3898, %v339
        %v3907 = vsub.f32 %v3899, %v339
        %v3908 = vsub.f32 %v3900, %v339
        %v3909 = vsub.f32 %v3901, %v339
        %v3910 = vsub.f32 %v3902, %v339
        %v3911 = vmul.f32 %v3871, %v3871
        %v3912 = vmul.f32 %v3872, %v3872
        %v3913 = vmul.f32 %v3873, %v3873
        %v3914 = vmul.f32 %v3874, %v3874
        %v3915 = vmul.f32 %v3875, %v3875
        %v3916 = vmul.f32 %v3876, %v3876
        %v3917 = vmul.f32 %v3877, %v3877
        %v3918 = vmul.f32 %v3878, %v3878
        %v3919 = vmul.f32 %v3903, %v3903
        %v3920 = vmul.f32 %v3904, %v3904
        %v3921 = vmul.f32 %v3905, %v3905
        %v3922 = vmul.f32 %v3906, %v3906
        %v3923 = vmul.f32 %v3907, %v3907
        %v3924 = vmul.f32 %v3908, %v3908
        %v3925 = vmul.f32 %v3909, %v3909
        %v3926 = vmul.f32 %v3910, %v3910
        %v3927 = vadd.f32 %v3911, %v3919
        %v3928 = vadd.f32 %v3912, %v3920
        %v3929 = vadd.f32 %v3913, %v3921
        %v3930 = vadd.f32 %v3914, %v3922
        %v3931 = vadd.f32 %v3915, %v3923
        %v3932 = vadd.f32 %v3916, %v3924
        %v3933 = vadd.f32 %v3917, %v3925
        %v3934 = vadd.f32 %v3918, %v3926
        %v3935 = vmin.f32 %v3927, 1e+30
        %v3936 = vmin.f32 %v3928, 1e+30
        %v3937 = vmin.f32 %v3929, 1e+30
        %v3938 = vmin.f32 %v3930, 1e+30
        %v3939 = vmin.f32 %v3931, 1e+30
        %v3940 = vmin.f32 %v3932, 1e+30
        %v3941 = vmin.f32 %v3933, 1e+30
        %v3942 = vmin.f32 %v3934, 1e+30
        %v3951 = vand.u32 %v3935, 4294967168
        %v3952 = vand.u32 %v3936, 4294967168
        %v3953 = vand.u32 %v3937, 4294967168
        %v3954 = vand.u32 %v3938, 4294967168
        %v3955 = vand.u32 %v3939, 4294967168
        %v3956 = vand.u32 %v3940, 4294967168
        %v3957 = vand.u32 %v3941, 4294967168
        %v3958 = vand.u32 %v3942, 4294967168
        %v3959 = vor.u32 %v3951, %v179
        %v3960 = vor.u32 %v3952, %v179
        %v3961 = vor.u32 %v3953, %v179
        %v3962 = vor.u32 %v3954, %v179
        %v3963 = vor.u32 %v3955, %v179
        %v3964 = vor.u32 %v3956, %v179
        %v3965 = vor.u32 %v3957, %v179
        %v3966 = vor.u32 %v3958, %v179
        %3975 = vmin.xlane.f32.xlu0 %v3959
        %v3976 = vpop.xlane.xlu0 %3975
        %3977 = vmin.xlane.f32.xlu0 %v3960
        %v3978 = vpop.xlane.xlu0 %3977
        %3979 = vmin.xlane.f32.xlu0 %v3961
        %v3980 = vpop.xlane.xlu0 %3979
        %3981 = vmin.xlane.f32.xlu0 %v3962
        %v3982 = vpop.xlane.xlu0 %3981
        %3983 = vmin.xlane.f32.xlu0 %v3963
        %v3984 = vpop.xlane.xlu0 %3983
        %3985 = vmin.xlane.f32.xlu0 %v3964
        %v3986 = vpop.xlane.xlu0 %3985
        %3987 = vmin.xlane.f32.xlu0 %v3965
        %v3988 = vpop.xlane.xlu0 %3987
        %3989 = vmin.xlane.f32.xlu0 %v3966
        %v3990 = vpop.xlane.xlu0 %3989
        %v3999 = vand.u32 %v3976, 127
        %v4000 = vand.u32 %v3978, 127
        %v4001 = vand.u32 %v3980, 127
        %v4002 = vand.u32 %v3982, 127
        %v4003 = vand.u32 %v3984, 127
        %v4004 = vand.u32 %v3986, 127
        %v4005 = vand.u32 %v3988, 127
        %v4006 = vand.u32 %v3990, 127
        %v4007 = vand.u32 %v3976, 4294967168
        %v4008 = vand.u32 %v3978, 4294967168
        %v4009 = vand.u32 %v3980, 4294967168
        %v4010 = vand.u32 %v3982, 4294967168
        %v4011 = vand.u32 %v3984, 4294967168
        %v4012 = vand.u32 %v3986, 4294967168
        %v4013 = vand.u32 %v3988, 4294967168
        %v4014 = vand.u32 %v3990, 4294967168
        %v4023 = vmul.f32 %v4007, -0.5
        %v4024 = vmul.f32 %v4008, -0.5
        %v4025 = vmul.f32 %v4009, -0.5
        %v4026 = vmul.f32 %v4010, -0.5
        %v4027 = vmul.f32 %v4011, -0.5
        %v4028 = vmul.f32 %v4012, -0.5
        %v4029 = vmul.f32 %v4013, -0.5
        %v4030 = vmul.f32 %v4014, -0.5
        %v4031 = vmul.f32 %v4023, 1.442695
        %v4032 = vpow.pop %v4031
        %v4033 = vmul.f32 %v4024, 1.442695
        %v4034 = vpow.pop %v4033
        %v4035 = vmul.f32 %v4025, 1.442695
        %v4036 = vpow.pop %v4035
        %v4037 = vmul.f32 %v4026, 1.442695
        %v4038 = vpow.pop %v4037
        %v4039 = vmul.f32 %v4027, 1.442695
        %v4040 = vpow.pop %v4039
        %v4041 = vmul.f32 %v4028, 1.442695
        %v4042 = vpow.pop %v4041
        %v4043 = vmul.f32 %v4029, 1.442695
        %v4044 = vpow.pop %v4043
        %v4045 = vmul.f32 %v4030, 1.442695
        %v4046 = vpow.pop %v4045
        %vm4047 = vcmp.eq.s32.totalorder %v179, %v3999
        %vm4048 = vcmp.eq.s32.totalorder %v179, %v4000
        %vm4049 = vcmp.eq.s32.totalorder %v179, %v4001
        %vm4050 = vcmp.eq.s32.totalorder %v179, %v4002
        %vm4051 = vcmp.eq.s32.totalorder %v179, %v4003
        %vm4052 = vcmp.eq.s32.totalorder %v179, %v4004
        %vm4053 = vcmp.eq.s32.totalorder %v179, %v4005
        %vm4054 = vcmp.eq.s32.totalorder %v179, %v4006
        %v4055 = vsel %vm4047, %v4032, 0.0
        %v4056 = vsel %vm4048, %v4034, 0.0
        %v4057 = vsel %vm4049, %v4036, 0.0
        %v4058 = vsel %vm4050, %v4038, 0.0
        %v4059 = vsel %vm4051, %v4040, 0.0
        %v4060 = vsel %vm4052, %v4042, 0.0
        %v4061 = vsel %vm4053, %v4044, 0.0
        %v4062 = vsel %vm4054, %v4046, 0.0
        %v4063 = vsel %vm4047, inf, %v3959
        %v4064 = vsel %vm4048, inf, %v3960
        %v4065 = vsel %vm4049, inf, %v3961
        %v4066 = vsel %vm4050, inf, %v3962
        %v4067 = vsel %vm4051, inf, %v3963
        %v4068 = vsel %vm4052, inf, %v3964
        %v4069 = vsel %vm4053, inf, %v3965
        %v4070 = vsel %vm4054, inf, %v3966
        %4071 = vmin.xlane.f32.xlu0 %v4063
        %v4072 = vpop.xlane.xlu0 %4071
        %4073 = vmin.xlane.f32.xlu0 %v4064
        %v4074 = vpop.xlane.xlu0 %4073
        %4075 = vmin.xlane.f32.xlu0 %v4065
        %v4076 = vpop.xlane.xlu0 %4075
        %4077 = vmin.xlane.f32.xlu0 %v4066
        %v4078 = vpop.xlane.xlu0 %4077
        %4079 = vmin.xlane.f32.xlu0 %v4067
        %v4080 = vpop.xlane.xlu0 %4079
        %4081 = vmin.xlane.f32.xlu0 %v4068
        %v4082 = vpop.xlane.xlu0 %4081
        %4083 = vmin.xlane.f32.xlu0 %v4069
        %v4084 = vpop.xlane.xlu0 %4083
        %4085 = vmin.xlane.f32.xlu0 %v4070
        %v4086 = vpop.xlane.xlu0 %4085
        %v4095 = vand.u32 %v4072, 127
        %v4096 = vand.u32 %v4074, 127
        %v4097 = vand.u32 %v4076, 127
        %v4098 = vand.u32 %v4078, 127
        %v4099 = vand.u32 %v4080, 127
        %v4100 = vand.u32 %v4082, 127
        %v4101 = vand.u32 %v4084, 127
        %v4102 = vand.u32 %v4086, 127
        %v4103 = vand.u32 %v4072, 4294967168
        %v4104 = vand.u32 %v4074, 4294967168
        %v4105 = vand.u32 %v4076, 4294967168
        %v4106 = vand.u32 %v4078, 4294967168
        %v4107 = vand.u32 %v4080, 4294967168
        %v4108 = vand.u32 %v4082, 4294967168
        %v4109 = vand.u32 %v4084, 4294967168
        %v4110 = vand.u32 %v4086, 4294967168
        %v4119 = vmul.f32 %v4103, -0.5
        %v4120 = vmul.f32 %v4104, -0.5
        %v4121 = vmul.f32 %v4105, -0.5
        %v4122 = vmul.f32 %v4106, -0.5
        %v4123 = vmul.f32 %v4107, -0.5
        %v4124 = vmul.f32 %v4108, -0.5
        %v4125 = vmul.f32 %v4109, -0.5
        %v4126 = vmul.f32 %v4110, -0.5
        %v4127 = vmul.f32 %v4119, 1.442695
        %v4128 = vpow.pop %v4127
        %v4129 = vmul.f32 %v4120, 1.442695
        %v4130 = vpow.pop %v4129
        %v4131 = vmul.f32 %v4121, 1.442695
        %v4132 = vpow.pop %v4131
        %v4133 = vmul.f32 %v4122, 1.442695
        %v4134 = vpow.pop %v4133
        %v4135 = vmul.f32 %v4123, 1.442695
        %v4136 = vpow.pop %v4135
        %v4137 = vmul.f32 %v4124, 1.442695
        %v4138 = vpow.pop %v4137
        %v4139 = vmul.f32 %v4125, 1.442695
        %v4140 = vpow.pop %v4139
        %v4141 = vmul.f32 %v4126, 1.442695
        %v4142 = vpow.pop %v4141
        %vm4143 = vcmp.eq.s32.totalorder %v179, %v4095
        %vm4144 = vcmp.eq.s32.totalorder %v179, %v4096
        %vm4145 = vcmp.eq.s32.totalorder %v179, %v4097
        %vm4146 = vcmp.eq.s32.totalorder %v179, %v4098
        %vm4147 = vcmp.eq.s32.totalorder %v179, %v4099
        %vm4148 = vcmp.eq.s32.totalorder %v179, %v4100
        %vm4149 = vcmp.eq.s32.totalorder %v179, %v4101
        %vm4150 = vcmp.eq.s32.totalorder %v179, %v4102
        %v4151 = vsel %vm4143, %v4128, %v4055
        %v4152 = vsel %vm4144, %v4130, %v4056
        %v4153 = vsel %vm4145, %v4132, %v4057
        %v4154 = vsel %vm4146, %v4134, %v4058
        %v4155 = vsel %vm4147, %v4136, %v4059
        %v4156 = vsel %vm4148, %v4138, %v4060
        %v4157 = vsel %vm4149, %v4140, %v4061
        %v4158 = vsel %vm4150, %v4142, %v4062
        %v4159 = vsel %vm4143, inf, %v4063
        %v4160 = vsel %vm4144, inf, %v4064
        %v4161 = vsel %vm4145, inf, %v4065
        %v4162 = vsel %vm4146, inf, %v4066
        %v4163 = vsel %vm4147, inf, %v4067
        %v4164 = vsel %vm4148, inf, %v4068
        %v4165 = vsel %vm4149, inf, %v4069
        %v4166 = vsel %vm4150, inf, %v4070
        %4167 = vmin.xlane.f32.xlu0 %v4159
        %v4168 = vpop.xlane.xlu0 %4167
        %4169 = vmin.xlane.f32.xlu0 %v4160
        %v4170 = vpop.xlane.xlu0 %4169
        %4171 = vmin.xlane.f32.xlu0 %v4161
        %v4172 = vpop.xlane.xlu0 %4171
        %4173 = vmin.xlane.f32.xlu0 %v4162
        %v4174 = vpop.xlane.xlu0 %4173
        %4175 = vmin.xlane.f32.xlu0 %v4163
        %v4176 = vpop.xlane.xlu0 %4175
        %4177 = vmin.xlane.f32.xlu0 %v4164
        %v4178 = vpop.xlane.xlu0 %4177
        %4179 = vmin.xlane.f32.xlu0 %v4165
        %v4180 = vpop.xlane.xlu0 %4179
        %4181 = vmin.xlane.f32.xlu0 %v4166
        %v4182 = vpop.xlane.xlu0 %4181
        %v4191 = vand.u32 %v4168, 127
        %v4192 = vand.u32 %v4170, 127
        %v4193 = vand.u32 %v4172, 127
        %v4194 = vand.u32 %v4174, 127
        %v4195 = vand.u32 %v4176, 127
        %v4196 = vand.u32 %v4178, 127
        %v4197 = vand.u32 %v4180, 127
        %v4198 = vand.u32 %v4182, 127
        %v4199 = vand.u32 %v4168, 4294967168
        %v4200 = vand.u32 %v4170, 4294967168
        %v4201 = vand.u32 %v4172, 4294967168
        %v4202 = vand.u32 %v4174, 4294967168
        %v4203 = vand.u32 %v4176, 4294967168
        %v4204 = vand.u32 %v4178, 4294967168
        %v4205 = vand.u32 %v4180, 4294967168
        %v4206 = vand.u32 %v4182, 4294967168
        %v4215 = vmul.f32 %v4199, -0.5
        %v4216 = vmul.f32 %v4200, -0.5
        %v4217 = vmul.f32 %v4201, -0.5
        %v4218 = vmul.f32 %v4202, -0.5
        %v4219 = vmul.f32 %v4203, -0.5
        %v4220 = vmul.f32 %v4204, -0.5
        %v4221 = vmul.f32 %v4205, -0.5
        %v4222 = vmul.f32 %v4206, -0.5
        %v4223 = vmul.f32 %v4215, 1.442695
        %v4224 = vpow.pop %v4223
        %v4225 = vmul.f32 %v4216, 1.442695
        %v4226 = vpow.pop %v4225
        %v4227 = vmul.f32 %v4217, 1.442695
        %v4228 = vpow.pop %v4227
        %v4229 = vmul.f32 %v4218, 1.442695
        %v4230 = vpow.pop %v4229
        %v4231 = vmul.f32 %v4219, 1.442695
        %v4232 = vpow.pop %v4231
        %v4233 = vmul.f32 %v4220, 1.442695
        %v4234 = vpow.pop %v4233
        %v4235 = vmul.f32 %v4221, 1.442695
        %v4236 = vpow.pop %v4235
        %v4237 = vmul.f32 %v4222, 1.442695
        %v4238 = vpow.pop %v4237
        %vm4239 = vcmp.eq.s32.totalorder %v179, %v4191
        %vm4240 = vcmp.eq.s32.totalorder %v179, %v4192
        %vm4241 = vcmp.eq.s32.totalorder %v179, %v4193
        %vm4242 = vcmp.eq.s32.totalorder %v179, %v4194
        %vm4243 = vcmp.eq.s32.totalorder %v179, %v4195
        %vm4244 = vcmp.eq.s32.totalorder %v179, %v4196
        %vm4245 = vcmp.eq.s32.totalorder %v179, %v4197
        %vm4246 = vcmp.eq.s32.totalorder %v179, %v4198
        %v4247 = vsel %vm4239, %v4224, %v4151
        %v4248 = vsel %vm4240, %v4226, %v4152
        %v4249 = vsel %vm4241, %v4228, %v4153
        %v4250 = vsel %vm4242, %v4230, %v4154
        %v4251 = vsel %vm4243, %v4232, %v4155
        %v4252 = vsel %vm4244, %v4234, %v4156
        %v4253 = vsel %vm4245, %v4236, %v4157
        %v4254 = vsel %vm4246, %v4238, %v4158
        %v4255 = vsel %vm4239, inf, %v4159
        %v4256 = vsel %vm4240, inf, %v4160
        %v4257 = vsel %vm4241, inf, %v4161
        %v4258 = vsel %vm4242, inf, %v4162
        %v4259 = vsel %vm4243, inf, %v4163
        %v4260 = vsel %vm4244, inf, %v4164
        %v4261 = vsel %vm4245, inf, %v4165
        %v4262 = vsel %vm4246, inf, %v4166
        %4263 = vmin.xlane.f32.xlu0 %v4255
        %v4264 = vpop.xlane.xlu0 %4263
        %4265 = vmin.xlane.f32.xlu0 %v4256
        %v4266 = vpop.xlane.xlu0 %4265
        %4267 = vmin.xlane.f32.xlu0 %v4257
        %v4268 = vpop.xlane.xlu0 %4267
        %4269 = vmin.xlane.f32.xlu0 %v4258
        %v4270 = vpop.xlane.xlu0 %4269
        %4271 = vmin.xlane.f32.xlu0 %v4259
        %v4272 = vpop.xlane.xlu0 %4271
        %4273 = vmin.xlane.f32.xlu0 %v4260
        %v4274 = vpop.xlane.xlu0 %4273
        %4275 = vmin.xlane.f32.xlu0 %v4261
        %v4276 = vpop.xlane.xlu0 %4275
        %4277 = vmin.xlane.f32.xlu0 %v4262
        %v4278 = vpop.xlane.xlu0 %4277
        %v4287 = vand.u32 %v4264, 127
        %v4288 = vand.u32 %v4266, 127
        %v4289 = vand.u32 %v4268, 127
        %v4290 = vand.u32 %v4270, 127
        %v4291 = vand.u32 %v4272, 127
        %v4292 = vand.u32 %v4274, 127
        %v4293 = vand.u32 %v4276, 127
        %v4294 = vand.u32 %v4278, 127
        %v4295 = vand.u32 %v4264, 4294967168
        %v4296 = vand.u32 %v4266, 4294967168
        %v4297 = vand.u32 %v4268, 4294967168
        %v4298 = vand.u32 %v4270, 4294967168
        %v4299 = vand.u32 %v4272, 4294967168
        %v4300 = vand.u32 %v4274, 4294967168
        %v4301 = vand.u32 %v4276, 4294967168
        %v4302 = vand.u32 %v4278, 4294967168
        %v4311 = vmul.f32 %v4295, -0.5
        %v4312 = vmul.f32 %v4296, -0.5
        %v4313 = vmul.f32 %v4297, -0.5
        %v4314 = vmul.f32 %v4298, -0.5
        %v4315 = vmul.f32 %v4299, -0.5
        %v4316 = vmul.f32 %v4300, -0.5
        %v4317 = vmul.f32 %v4301, -0.5
        %v4318 = vmul.f32 %v4302, -0.5
        %v4319 = vmul.f32 %v4311, 1.442695
        %v4320 = vpow.pop %v4319
        %v4321 = vmul.f32 %v4312, 1.442695
        %v4322 = vpow.pop %v4321
        %v4323 = vmul.f32 %v4313, 1.442695
        %v4324 = vpow.pop %v4323
        %v4325 = vmul.f32 %v4314, 1.442695
        %v4326 = vpow.pop %v4325
        %v4327 = vmul.f32 %v4315, 1.442695
        %v4328 = vpow.pop %v4327
        %v4329 = vmul.f32 %v4316, 1.442695
        %v4330 = vpow.pop %v4329
        %v4331 = vmul.f32 %v4317, 1.442695
        %v4332 = vpow.pop %v4331
        %v4333 = vmul.f32 %v4318, 1.442695
        %v4334 = vpow.pop %v4333
        %vm4335 = vcmp.eq.s32.totalorder %v179, %v4287
        %vm4336 = vcmp.eq.s32.totalorder %v179, %v4288
        %vm4337 = vcmp.eq.s32.totalorder %v179, %v4289
        %vm4338 = vcmp.eq.s32.totalorder %v179, %v4290
        %vm4339 = vcmp.eq.s32.totalorder %v179, %v4291
        %vm4340 = vcmp.eq.s32.totalorder %v179, %v4292
        %vm4341 = vcmp.eq.s32.totalorder %v179, %v4293
        %vm4342 = vcmp.eq.s32.totalorder %v179, %v4294
        %v4343 = vsel %vm4335, %v4320, %v4247
        %v4344 = vsel %vm4336, %v4322, %v4248
        %v4345 = vsel %vm4337, %v4324, %v4249
        %v4346 = vsel %vm4338, %v4326, %v4250
        %v4347 = vsel %vm4339, %v4328, %v4251
        %v4348 = vsel %vm4340, %v4330, %v4252
        %v4349 = vsel %vm4341, %v4332, %v4253
        %v4350 = vsel %vm4342, %v4334, %v4254
        %s4351 = scalar_lea.vmem [#allocation2], 384
        %4352 = vst [vmem:[%s4351] sm:$0xff] %v4343
        %4353 = vst [vmem:[%s4351 + $0x8] sm:$0xff] %v4344
        %4354 = vst [vmem:[%s4351 + $0x10] sm:$0xff] %v4345
        %4355 = vst [vmem:[%s4351 + $0x18] sm:$0xff] %v4346
        %4356 = vst [vmem:[%s4351 + $0x20] sm:$0xff] %v4347
        %4357 = vst [vmem:[%s4351 + $0x28] sm:$0xff] %v4348
        %4358 = vst [vmem:[%s4351 + $0x30] sm:$0xff] %v4349
        %4359 = vst [vmem:[%s4351 + $0x38] sm:$0xff] %v4350
        %s4360 = scalar_lea.vmem %s169, 448
        %v4361 = vld [vmem:[%s4360] sm:$0xff]
        %v4362 = vld [vmem:[%s4360 + $0x8] sm:$0xff]
        %v4363 = vld [vmem:[%s4360 + $0x10] sm:$0xff]
        %v4364 = vld [vmem:[%s4360 + $0x18] sm:$0xff]
        %v4365 = vld [vmem:[%s4360 + $0x20] sm:$0xff]
        %v4366 = vld [vmem:[%s4360 + $0x28] sm:$0xff]
        %v4367 = vld [vmem:[%s4360 + $0x30] sm:$0xff]
        %v4368 = vld [vmem:[%s4360 + $0x38] sm:$0xff]
        %4370 = vset.pattern.permute.xlu0 0
        %4371 = vperm.xlu0 %4370, %v4361
        %v4372 = vpop.permute.xlu0 %4371
        %4375 = vset.pattern.permute.xlu0 0
        %4376 = vperm.xlu0 %4375, %v4362
        %v4377 = vpop.permute.xlu0 %4376
        %4380 = vset.pattern.permute.xlu0 0
        %4381 = vperm.xlu0 %4380, %v4363
        %v4382 = vpop.permute.xlu0 %4381
        %4385 = vset.pattern.permute.xlu0 0
        %4386 = vperm.xlu0 %4385, %v4364
        %v4387 = vpop.permute.xlu0 %4386
        %4390 = vset.pattern.permute.xlu0 0
        %4391 = vperm.xlu0 %4390, %v4365
        %v4392 = vpop.permute.xlu0 %4391
        %4395 = vset.pattern.permute.xlu0 0
        %4396 = vperm.xlu0 %4395, %v4366
        %v4397 = vpop.permute.xlu0 %4396
        %4400 = vset.pattern.permute.xlu0 0
        %4401 = vperm.xlu0 %4400, %v4367
        %v4402 = vpop.permute.xlu0 %4401
        %4405 = vset.pattern.permute.xlu0 0
        %4406 = vperm.xlu0 %4405, %v4368
        %v4407 = vpop.permute.xlu0 %4406
        %4409 = vset.pattern.permute.xlu0 1
        %4410 = vperm.xlu0 %4409, %v4361
        %v4411 = vpop.permute.xlu0 %4410
        %4413 = vset.pattern.permute.xlu0 1
        %4414 = vperm.xlu0 %4413, %v4362
        %v4415 = vpop.permute.xlu0 %4414
        %4417 = vset.pattern.permute.xlu0 1
        %4418 = vperm.xlu0 %4417, %v4363
        %v4419 = vpop.permute.xlu0 %4418
        %4421 = vset.pattern.permute.xlu0 1
        %4422 = vperm.xlu0 %4421, %v4364
        %v4423 = vpop.permute.xlu0 %4422
        %4425 = vset.pattern.permute.xlu0 1
        %4426 = vperm.xlu0 %4425, %v4365
        %v4427 = vpop.permute.xlu0 %4426
        %4429 = vset.pattern.permute.xlu0 1
        %4430 = vperm.xlu0 %4429, %v4366
        %v4431 = vpop.permute.xlu0 %4430
        %4433 = vset.pattern.permute.xlu0 1
        %4434 = vperm.xlu0 %4433, %v4367
        %v4435 = vpop.permute.xlu0 %4434
        %4437 = vset.pattern.permute.xlu0 1
        %4438 = vperm.xlu0 %4437, %v4368
        %v4439 = vpop.permute.xlu0 %4438
        %v4441 = vmul.f32 %v263, %v4372
        %v4442 = vmul.f32 %v263, %v4377
        %v4443 = vmul.f32 %v263, %v4382
        %v4444 = vmul.f32 %v263, %v4387
        %v4445 = vmul.f32 %v263, %v4392
        %v4446 = vmul.f32 %v263, %v4397
        %v4447 = vmul.f32 %v263, %v4402
        %v4448 = vmul.f32 %v263, %v4407
        %v4449 = vmul.f32 %v275, %v4411
        %v4450 = vmul.f32 %v275, %v4415
        %v4451 = vmul.f32 %v275, %v4419
        %v4452 = vmul.f32 %v275, %v4423
        %v4453 = vmul.f32 %v275, %v4427
        %v4454 = vmul.f32 %v275, %v4431
        %v4455 = vmul.f32 %v275, %v4435
        %v4456 = vmul.f32 %v275, %v4439
        %v4457 = vadd.f32 %v4441, %v4449
        %v4458 = vadd.f32 %v4442, %v4450
        %v4459 = vadd.f32 %v4443, %v4451
        %v4460 = vadd.f32 %v4444, %v4452
        %v4461 = vadd.f32 %v4445, %v4453
        %v4462 = vadd.f32 %v4446, %v4454
        %v4463 = vadd.f32 %v4447, %v4455
        %v4464 = vadd.f32 %v4448, %v4456
        %v4465 = vsub.f32 %v4457, %v295
        %v4466 = vsub.f32 %v4458, %v295
        %v4467 = vsub.f32 %v4459, %v295
        %v4468 = vsub.f32 %v4460, %v295
        %v4469 = vsub.f32 %v4461, %v295
        %v4470 = vsub.f32 %v4462, %v295
        %v4471 = vsub.f32 %v4463, %v295
        %v4472 = vsub.f32 %v4464, %v295
        %v4473 = vmul.f32 %v307, %v4372
        %v4474 = vmul.f32 %v307, %v4377
        %v4475 = vmul.f32 %v307, %v4382
        %v4476 = vmul.f32 %v307, %v4387
        %v4477 = vmul.f32 %v307, %v4392
        %v4478 = vmul.f32 %v307, %v4397
        %v4479 = vmul.f32 %v307, %v4402
        %v4480 = vmul.f32 %v307, %v4407
        %v4481 = vmul.f32 %v319, %v4411
        %v4482 = vmul.f32 %v319, %v4415
        %v4483 = vmul.f32 %v319, %v4419
        %v4484 = vmul.f32 %v319, %v4423
        %v4485 = vmul.f32 %v319, %v4427
        %v4486 = vmul.f32 %v319, %v4431
        %v4487 = vmul.f32 %v319, %v4435
        %v4488 = vmul.f32 %v319, %v4439
        %v4489 = vadd.f32 %v4473, %v4481
        %v4490 = vadd.f32 %v4474, %v4482
        %v4491 = vadd.f32 %v4475, %v4483
        %v4492 = vadd.f32 %v4476, %v4484
        %v4493 = vadd.f32 %v4477, %v4485
        %v4494 = vadd.f32 %v4478, %v4486
        %v4495 = vadd.f32 %v4479, %v4487
        %v4496 = vadd.f32 %v4480, %v4488
        %v4497 = vsub.f32 %v4489, %v339
        %v4498 = vsub.f32 %v4490, %v339
        %v4499 = vsub.f32 %v4491, %v339
        %v4500 = vsub.f32 %v4492, %v339
        %v4501 = vsub.f32 %v4493, %v339
        %v4502 = vsub.f32 %v4494, %v339
        %v4503 = vsub.f32 %v4495, %v339
        %v4504 = vsub.f32 %v4496, %v339
        %v4505 = vmul.f32 %v4465, %v4465
        %v4506 = vmul.f32 %v4466, %v4466
        %v4507 = vmul.f32 %v4467, %v4467
        %v4508 = vmul.f32 %v4468, %v4468
        %v4509 = vmul.f32 %v4469, %v4469
        %v4510 = vmul.f32 %v4470, %v4470
        %v4511 = vmul.f32 %v4471, %v4471
        %v4512 = vmul.f32 %v4472, %v4472
        %v4513 = vmul.f32 %v4497, %v4497
        %v4514 = vmul.f32 %v4498, %v4498
        %v4515 = vmul.f32 %v4499, %v4499
        %v4516 = vmul.f32 %v4500, %v4500
        %v4517 = vmul.f32 %v4501, %v4501
        %v4518 = vmul.f32 %v4502, %v4502
        %v4519 = vmul.f32 %v4503, %v4503
        %v4520 = vmul.f32 %v4504, %v4504
        %v4521 = vadd.f32 %v4505, %v4513
        %v4522 = vadd.f32 %v4506, %v4514
        %v4523 = vadd.f32 %v4507, %v4515
        %v4524 = vadd.f32 %v4508, %v4516
        %v4525 = vadd.f32 %v4509, %v4517
        %v4526 = vadd.f32 %v4510, %v4518
        %v4527 = vadd.f32 %v4511, %v4519
        %v4528 = vadd.f32 %v4512, %v4520
        %v4529 = vmin.f32 %v4521, 1e+30
        %v4530 = vmin.f32 %v4522, 1e+30
        %v4531 = vmin.f32 %v4523, 1e+30
        %v4532 = vmin.f32 %v4524, 1e+30
        %v4533 = vmin.f32 %v4525, 1e+30
        %v4534 = vmin.f32 %v4526, 1e+30
        %v4535 = vmin.f32 %v4527, 1e+30
        %v4536 = vmin.f32 %v4528, 1e+30
        %v4545 = vand.u32 %v4529, 4294967168
        %v4546 = vand.u32 %v4530, 4294967168
        %v4547 = vand.u32 %v4531, 4294967168
        %v4548 = vand.u32 %v4532, 4294967168
        %v4549 = vand.u32 %v4533, 4294967168
        %v4550 = vand.u32 %v4534, 4294967168
        %v4551 = vand.u32 %v4535, 4294967168
        %v4552 = vand.u32 %v4536, 4294967168
        %v4553 = vor.u32 %v4545, %v179
        %v4554 = vor.u32 %v4546, %v179
        %v4555 = vor.u32 %v4547, %v179
        %v4556 = vor.u32 %v4548, %v179
        %v4557 = vor.u32 %v4549, %v179
        %v4558 = vor.u32 %v4550, %v179
        %v4559 = vor.u32 %v4551, %v179
        %v4560 = vor.u32 %v4552, %v179
        %4569 = vmin.xlane.f32.xlu0 %v4553
        %v4570 = vpop.xlane.xlu0 %4569
        %4571 = vmin.xlane.f32.xlu0 %v4554
        %v4572 = vpop.xlane.xlu0 %4571
        %4573 = vmin.xlane.f32.xlu0 %v4555
        %v4574 = vpop.xlane.xlu0 %4573
        %4575 = vmin.xlane.f32.xlu0 %v4556
        %v4576 = vpop.xlane.xlu0 %4575
        %4577 = vmin.xlane.f32.xlu0 %v4557
        %v4578 = vpop.xlane.xlu0 %4577
        %4579 = vmin.xlane.f32.xlu0 %v4558
        %v4580 = vpop.xlane.xlu0 %4579
        %4581 = vmin.xlane.f32.xlu0 %v4559
        %v4582 = vpop.xlane.xlu0 %4581
        %4583 = vmin.xlane.f32.xlu0 %v4560
        %v4584 = vpop.xlane.xlu0 %4583
        %v4593 = vand.u32 %v4570, 127
        %v4594 = vand.u32 %v4572, 127
        %v4595 = vand.u32 %v4574, 127
        %v4596 = vand.u32 %v4576, 127
        %v4597 = vand.u32 %v4578, 127
        %v4598 = vand.u32 %v4580, 127
        %v4599 = vand.u32 %v4582, 127
        %v4600 = vand.u32 %v4584, 127
        %v4601 = vand.u32 %v4570, 4294967168
        %v4602 = vand.u32 %v4572, 4294967168
        %v4603 = vand.u32 %v4574, 4294967168
        %v4604 = vand.u32 %v4576, 4294967168
        %v4605 = vand.u32 %v4578, 4294967168
        %v4606 = vand.u32 %v4580, 4294967168
        %v4607 = vand.u32 %v4582, 4294967168
        %v4608 = vand.u32 %v4584, 4294967168
        %v4617 = vmul.f32 %v4601, -0.5
        %v4618 = vmul.f32 %v4602, -0.5
        %v4619 = vmul.f32 %v4603, -0.5
        %v4620 = vmul.f32 %v4604, -0.5
        %v4621 = vmul.f32 %v4605, -0.5
        %v4622 = vmul.f32 %v4606, -0.5
        %v4623 = vmul.f32 %v4607, -0.5
        %v4624 = vmul.f32 %v4608, -0.5
        %v4625 = vmul.f32 %v4617, 1.442695
        %v4626 = vpow.pop %v4625
        %v4627 = vmul.f32 %v4618, 1.442695
        %v4628 = vpow.pop %v4627
        %v4629 = vmul.f32 %v4619, 1.442695
        %v4630 = vpow.pop %v4629
        %v4631 = vmul.f32 %v4620, 1.442695
        %v4632 = vpow.pop %v4631
        %v4633 = vmul.f32 %v4621, 1.442695
        %v4634 = vpow.pop %v4633
        %v4635 = vmul.f32 %v4622, 1.442695
        %v4636 = vpow.pop %v4635
        %v4637 = vmul.f32 %v4623, 1.442695
        %v4638 = vpow.pop %v4637
        %v4639 = vmul.f32 %v4624, 1.442695
        %v4640 = vpow.pop %v4639
        %vm4641 = vcmp.eq.s32.totalorder %v179, %v4593
        %vm4642 = vcmp.eq.s32.totalorder %v179, %v4594
        %vm4643 = vcmp.eq.s32.totalorder %v179, %v4595
        %vm4644 = vcmp.eq.s32.totalorder %v179, %v4596
        %vm4645 = vcmp.eq.s32.totalorder %v179, %v4597
        %vm4646 = vcmp.eq.s32.totalorder %v179, %v4598
        %vm4647 = vcmp.eq.s32.totalorder %v179, %v4599
        %vm4648 = vcmp.eq.s32.totalorder %v179, %v4600
        %v4649 = vsel %vm4641, %v4626, 0.0
        %v4650 = vsel %vm4642, %v4628, 0.0
        %v4651 = vsel %vm4643, %v4630, 0.0
        %v4652 = vsel %vm4644, %v4632, 0.0
        %v4653 = vsel %vm4645, %v4634, 0.0
        %v4654 = vsel %vm4646, %v4636, 0.0
        %v4655 = vsel %vm4647, %v4638, 0.0
        %v4656 = vsel %vm4648, %v4640, 0.0
        %v4657 = vsel %vm4641, inf, %v4553
        %v4658 = vsel %vm4642, inf, %v4554
        %v4659 = vsel %vm4643, inf, %v4555
        %v4660 = vsel %vm4644, inf, %v4556
        %v4661 = vsel %vm4645, inf, %v4557
        %v4662 = vsel %vm4646, inf, %v4558
        %v4663 = vsel %vm4647, inf, %v4559
        %v4664 = vsel %vm4648, inf, %v4560
        %4665 = vmin.xlane.f32.xlu0 %v4657
        %v4666 = vpop.xlane.xlu0 %4665
        %4667 = vmin.xlane.f32.xlu0 %v4658
        %v4668 = vpop.xlane.xlu0 %4667
        %4669 = vmin.xlane.f32.xlu0 %v4659
        %v4670 = vpop.xlane.xlu0 %4669
        %4671 = vmin.xlane.f32.xlu0 %v4660
        %v4672 = vpop.xlane.xlu0 %4671
        %4673 = vmin.xlane.f32.xlu0 %v4661
        %v4674 = vpop.xlane.xlu0 %4673
        %4675 = vmin.xlane.f32.xlu0 %v4662
        %v4676 = vpop.xlane.xlu0 %4675
        %4677 = vmin.xlane.f32.xlu0 %v4663
        %v4678 = vpop.xlane.xlu0 %4677
        %4679 = vmin.xlane.f32.xlu0 %v4664
        %v4680 = vpop.xlane.xlu0 %4679
        %v4689 = vand.u32 %v4666, 127
        %v4690 = vand.u32 %v4668, 127
        %v4691 = vand.u32 %v4670, 127
        %v4692 = vand.u32 %v4672, 127
        %v4693 = vand.u32 %v4674, 127
        %v4694 = vand.u32 %v4676, 127
        %v4695 = vand.u32 %v4678, 127
        %v4696 = vand.u32 %v4680, 127
        %v4697 = vand.u32 %v4666, 4294967168
        %v4698 = vand.u32 %v4668, 4294967168
        %v4699 = vand.u32 %v4670, 4294967168
        %v4700 = vand.u32 %v4672, 4294967168
        %v4701 = vand.u32 %v4674, 4294967168
        %v4702 = vand.u32 %v4676, 4294967168
        %v4703 = vand.u32 %v4678, 4294967168
        %v4704 = vand.u32 %v4680, 4294967168
        %v4713 = vmul.f32 %v4697, -0.5
        %v4714 = vmul.f32 %v4698, -0.5
        %v4715 = vmul.f32 %v4699, -0.5
        %v4716 = vmul.f32 %v4700, -0.5
        %v4717 = vmul.f32 %v4701, -0.5
        %v4718 = vmul.f32 %v4702, -0.5
        %v4719 = vmul.f32 %v4703, -0.5
        %v4720 = vmul.f32 %v4704, -0.5
        %v4721 = vmul.f32 %v4713, 1.442695
        %v4722 = vpow.pop %v4721
        %v4723 = vmul.f32 %v4714, 1.442695
        %v4724 = vpow.pop %v4723
        %v4725 = vmul.f32 %v4715, 1.442695
        %v4726 = vpow.pop %v4725
        %v4727 = vmul.f32 %v4716, 1.442695
        %v4728 = vpow.pop %v4727
        %v4729 = vmul.f32 %v4717, 1.442695
        %v4730 = vpow.pop %v4729
        %v4731 = vmul.f32 %v4718, 1.442695
        %v4732 = vpow.pop %v4731
        %v4733 = vmul.f32 %v4719, 1.442695
        %v4734 = vpow.pop %v4733
        %v4735 = vmul.f32 %v4720, 1.442695
        %v4736 = vpow.pop %v4735
        %vm4737 = vcmp.eq.s32.totalorder %v179, %v4689
        %vm4738 = vcmp.eq.s32.totalorder %v179, %v4690
        %vm4739 = vcmp.eq.s32.totalorder %v179, %v4691
        %vm4740 = vcmp.eq.s32.totalorder %v179, %v4692
        %vm4741 = vcmp.eq.s32.totalorder %v179, %v4693
        %vm4742 = vcmp.eq.s32.totalorder %v179, %v4694
        %vm4743 = vcmp.eq.s32.totalorder %v179, %v4695
        %vm4744 = vcmp.eq.s32.totalorder %v179, %v4696
        %v4745 = vsel %vm4737, %v4722, %v4649
        %v4746 = vsel %vm4738, %v4724, %v4650
        %v4747 = vsel %vm4739, %v4726, %v4651
        %v4748 = vsel %vm4740, %v4728, %v4652
        %v4749 = vsel %vm4741, %v4730, %v4653
        %v4750 = vsel %vm4742, %v4732, %v4654
        %v4751 = vsel %vm4743, %v4734, %v4655
        %v4752 = vsel %vm4744, %v4736, %v4656
        %v4753 = vsel %vm4737, inf, %v4657
        %v4754 = vsel %vm4738, inf, %v4658
        %v4755 = vsel %vm4739, inf, %v4659
        %v4756 = vsel %vm4740, inf, %v4660
        %v4757 = vsel %vm4741, inf, %v4661
        %v4758 = vsel %vm4742, inf, %v4662
        %v4759 = vsel %vm4743, inf, %v4663
        %v4760 = vsel %vm4744, inf, %v4664
        %4761 = vmin.xlane.f32.xlu0 %v4753
        %v4762 = vpop.xlane.xlu0 %4761
        %4763 = vmin.xlane.f32.xlu0 %v4754
        %v4764 = vpop.xlane.xlu0 %4763
        %4765 = vmin.xlane.f32.xlu0 %v4755
        %v4766 = vpop.xlane.xlu0 %4765
        %4767 = vmin.xlane.f32.xlu0 %v4756
        %v4768 = vpop.xlane.xlu0 %4767
        %4769 = vmin.xlane.f32.xlu0 %v4757
        %v4770 = vpop.xlane.xlu0 %4769
        %4771 = vmin.xlane.f32.xlu0 %v4758
        %v4772 = vpop.xlane.xlu0 %4771
        %4773 = vmin.xlane.f32.xlu0 %v4759
        %v4774 = vpop.xlane.xlu0 %4773
        %4775 = vmin.xlane.f32.xlu0 %v4760
        %v4776 = vpop.xlane.xlu0 %4775
        %v4785 = vand.u32 %v4762, 127
        %v4786 = vand.u32 %v4764, 127
        %v4787 = vand.u32 %v4766, 127
        %v4788 = vand.u32 %v4768, 127
        %v4789 = vand.u32 %v4770, 127
        %v4790 = vand.u32 %v4772, 127
        %v4791 = vand.u32 %v4774, 127
        %v4792 = vand.u32 %v4776, 127
        %v4793 = vand.u32 %v4762, 4294967168
        %v4794 = vand.u32 %v4764, 4294967168
        %v4795 = vand.u32 %v4766, 4294967168
        %v4796 = vand.u32 %v4768, 4294967168
        %v4797 = vand.u32 %v4770, 4294967168
        %v4798 = vand.u32 %v4772, 4294967168
        %v4799 = vand.u32 %v4774, 4294967168
        %v4800 = vand.u32 %v4776, 4294967168
        %v4809 = vmul.f32 %v4793, -0.5
        %v4810 = vmul.f32 %v4794, -0.5
        %v4811 = vmul.f32 %v4795, -0.5
        %v4812 = vmul.f32 %v4796, -0.5
        %v4813 = vmul.f32 %v4797, -0.5
        %v4814 = vmul.f32 %v4798, -0.5
        %v4815 = vmul.f32 %v4799, -0.5
        %v4816 = vmul.f32 %v4800, -0.5
        %v4817 = vmul.f32 %v4809, 1.442695
        %v4818 = vpow.pop %v4817
        %v4819 = vmul.f32 %v4810, 1.442695
        %v4820 = vpow.pop %v4819
        %v4821 = vmul.f32 %v4811, 1.442695
        %v4822 = vpow.pop %v4821
        %v4823 = vmul.f32 %v4812, 1.442695
        %v4824 = vpow.pop %v4823
        %v4825 = vmul.f32 %v4813, 1.442695
        %v4826 = vpow.pop %v4825
        %v4827 = vmul.f32 %v4814, 1.442695
        %v4828 = vpow.pop %v4827
        %v4829 = vmul.f32 %v4815, 1.442695
        %v4830 = vpow.pop %v4829
        %v4831 = vmul.f32 %v4816, 1.442695
        %v4832 = vpow.pop %v4831
        %vm4833 = vcmp.eq.s32.totalorder %v179, %v4785
        %vm4834 = vcmp.eq.s32.totalorder %v179, %v4786
        %vm4835 = vcmp.eq.s32.totalorder %v179, %v4787
        %vm4836 = vcmp.eq.s32.totalorder %v179, %v4788
        %vm4837 = vcmp.eq.s32.totalorder %v179, %v4789
        %vm4838 = vcmp.eq.s32.totalorder %v179, %v4790
        %vm4839 = vcmp.eq.s32.totalorder %v179, %v4791
        %vm4840 = vcmp.eq.s32.totalorder %v179, %v4792
        %v4841 = vsel %vm4833, %v4818, %v4745
        %v4842 = vsel %vm4834, %v4820, %v4746
        %v4843 = vsel %vm4835, %v4822, %v4747
        %v4844 = vsel %vm4836, %v4824, %v4748
        %v4845 = vsel %vm4837, %v4826, %v4749
        %v4846 = vsel %vm4838, %v4828, %v4750
        %v4847 = vsel %vm4839, %v4830, %v4751
        %v4848 = vsel %vm4840, %v4832, %v4752
        %v4849 = vsel %vm4833, inf, %v4753
        %v4850 = vsel %vm4834, inf, %v4754
        %v4851 = vsel %vm4835, inf, %v4755
        %v4852 = vsel %vm4836, inf, %v4756
        %v4853 = vsel %vm4837, inf, %v4757
        %v4854 = vsel %vm4838, inf, %v4758
        %v4855 = vsel %vm4839, inf, %v4759
        %v4856 = vsel %vm4840, inf, %v4760
        %4857 = vmin.xlane.f32.xlu0 %v4849
        %v4858 = vpop.xlane.xlu0 %4857
        %4859 = vmin.xlane.f32.xlu0 %v4850
        %v4860 = vpop.xlane.xlu0 %4859
        %4861 = vmin.xlane.f32.xlu0 %v4851
        %v4862 = vpop.xlane.xlu0 %4861
        %4863 = vmin.xlane.f32.xlu0 %v4852
        %v4864 = vpop.xlane.xlu0 %4863
        %4865 = vmin.xlane.f32.xlu0 %v4853
        %v4866 = vpop.xlane.xlu0 %4865
        %4867 = vmin.xlane.f32.xlu0 %v4854
        %v4868 = vpop.xlane.xlu0 %4867
        %4869 = vmin.xlane.f32.xlu0 %v4855
        %v4870 = vpop.xlane.xlu0 %4869
        %4871 = vmin.xlane.f32.xlu0 %v4856
        %v4872 = vpop.xlane.xlu0 %4871
        %v4881 = vand.u32 %v4858, 127
        %v4882 = vand.u32 %v4860, 127
        %v4883 = vand.u32 %v4862, 127
        %v4884 = vand.u32 %v4864, 127
        %v4885 = vand.u32 %v4866, 127
        %v4886 = vand.u32 %v4868, 127
        %v4887 = vand.u32 %v4870, 127
        %v4888 = vand.u32 %v4872, 127
        %v4889 = vand.u32 %v4858, 4294967168
        %v4890 = vand.u32 %v4860, 4294967168
        %v4891 = vand.u32 %v4862, 4294967168
        %v4892 = vand.u32 %v4864, 4294967168
        %v4893 = vand.u32 %v4866, 4294967168
        %v4894 = vand.u32 %v4868, 4294967168
        %v4895 = vand.u32 %v4870, 4294967168
        %v4896 = vand.u32 %v4872, 4294967168
        %v4905 = vmul.f32 %v4889, -0.5
        %v4906 = vmul.f32 %v4890, -0.5
        %v4907 = vmul.f32 %v4891, -0.5
        %v4908 = vmul.f32 %v4892, -0.5
        %v4909 = vmul.f32 %v4893, -0.5
        %v4910 = vmul.f32 %v4894, -0.5
        %v4911 = vmul.f32 %v4895, -0.5
        %v4912 = vmul.f32 %v4896, -0.5
        %v4913 = vmul.f32 %v4905, 1.442695
        %v4914 = vpow.pop %v4913
        %v4915 = vmul.f32 %v4906, 1.442695
        %v4916 = vpow.pop %v4915
        %v4917 = vmul.f32 %v4907, 1.442695
        %v4918 = vpow.pop %v4917
        %v4919 = vmul.f32 %v4908, 1.442695
        %v4920 = vpow.pop %v4919
        %v4921 = vmul.f32 %v4909, 1.442695
        %v4922 = vpow.pop %v4921
        %v4923 = vmul.f32 %v4910, 1.442695
        %v4924 = vpow.pop %v4923
        %v4925 = vmul.f32 %v4911, 1.442695
        %v4926 = vpow.pop %v4925
        %v4927 = vmul.f32 %v4912, 1.442695
        %v4928 = vpow.pop %v4927
        %vm4929 = vcmp.eq.s32.totalorder %v179, %v4881
        %vm4930 = vcmp.eq.s32.totalorder %v179, %v4882
        %vm4931 = vcmp.eq.s32.totalorder %v179, %v4883
        %vm4932 = vcmp.eq.s32.totalorder %v179, %v4884
        %vm4933 = vcmp.eq.s32.totalorder %v179, %v4885
        %vm4934 = vcmp.eq.s32.totalorder %v179, %v4886
        %vm4935 = vcmp.eq.s32.totalorder %v179, %v4887
        %vm4936 = vcmp.eq.s32.totalorder %v179, %v4888
        %v4937 = vsel %vm4929, %v4914, %v4841
        %v4938 = vsel %vm4930, %v4916, %v4842
        %v4939 = vsel %vm4931, %v4918, %v4843
        %v4940 = vsel %vm4932, %v4920, %v4844
        %v4941 = vsel %vm4933, %v4922, %v4845
        %v4942 = vsel %vm4934, %v4924, %v4846
        %v4943 = vsel %vm4935, %v4926, %v4847
        %v4944 = vsel %vm4936, %v4928, %v4848
        %s4945 = scalar_lea.vmem [#allocation2], 448
        %4946 = vst [vmem:[%s4945] sm:$0xff] %v4937
        %4947 = vst [vmem:[%s4945 + $0x8] sm:$0xff] %v4938
        %4948 = vst [vmem:[%s4945 + $0x10] sm:$0xff] %v4939
        %4949 = vst [vmem:[%s4945 + $0x18] sm:$0xff] %v4940
        %4950 = vst [vmem:[%s4945 + $0x20] sm:$0xff] %v4941
        %4951 = vst [vmem:[%s4945 + $0x28] sm:$0xff] %v4942
        %4952 = vst [vmem:[%s4945 + $0x30] sm:$0xff] %v4943
        %4953 = vst [vmem:[%s4945 + $0x38] sm:$0xff] %v4944
        %v4954 = vld [vmem:[%s2] sm:$0xff]
        %v4955 = vld [vmem:[#allocation2] sm:$0xff]
        %v4956 = vld [vmem:[#allocation2 + $0x8] sm:$0xff]
        %v4957 = vld [vmem:[#allocation2 + $0x10] sm:$0xff]
        %v4958 = vld [vmem:[#allocation2 + $0x18] sm:$0xff]
        %v4959 = vld [vmem:[#allocation2 + $0x20] sm:$0xff]
        %v4960 = vld [vmem:[#allocation2 + $0x28] sm:$0xff]
        %v4961 = vld [vmem:[#allocation2 + $0x30] sm:$0xff]
        %v4962 = vld [vmem:[#allocation2 + $0x38] sm:$0xff]
        %v4963 = vld [vmem:[#allocation2 + $0x40] sm:$0xff]
        %v4964 = vld [vmem:[#allocation2 + $0x48] sm:$0xff]
        %v4965 = vld [vmem:[#allocation2 + $0x50] sm:$0xff]
        %v4966 = vld [vmem:[#allocation2 + $0x58] sm:$0xff]
        %v4967 = vld [vmem:[#allocation2 + $0x60] sm:$0xff]
        %v4968 = vld [vmem:[#allocation2 + $0x68] sm:$0xff]
        %v4969 = vld [vmem:[#allocation2 + $0x70] sm:$0xff]
        %v4970 = vld [vmem:[#allocation2 + $0x78] sm:$0xff]
        %v4971 = vld [vmem:[#allocation2 + $0x80] sm:$0xff]
        %v4972 = vld [vmem:[#allocation2 + $0x88] sm:$0xff]
        %v4973 = vld [vmem:[#allocation2 + $0x90] sm:$0xff]
        %v4974 = vld [vmem:[#allocation2 + $0x98] sm:$0xff]
        %v4975 = vld [vmem:[#allocation2 + $0xa0] sm:$0xff]
        %v4976 = vld [vmem:[#allocation2 + $0xa8] sm:$0xff]
        %v4977 = vld [vmem:[#allocation2 + $0xb0] sm:$0xff]
        %v4978 = vld [vmem:[#allocation2 + $0xb8] sm:$0xff]
        %v4979 = vld [vmem:[#allocation2 + $0xc0] sm:$0xff]
        %v4980 = vld [vmem:[#allocation2 + $0xc8] sm:$0xff]
        %v4981 = vld [vmem:[#allocation2 + $0xd0] sm:$0xff]
        %v4982 = vld [vmem:[#allocation2 + $0xd8] sm:$0xff]
        %v4983 = vld [vmem:[#allocation2 + $0xe0] sm:$0xff]
        %v4984 = vld [vmem:[#allocation2 + $0xe8] sm:$0xff]
        %v4985 = vld [vmem:[#allocation2 + $0xf0] sm:$0xff]
        %v4986 = vld [vmem:[#allocation2 + $0xf8] sm:$0xff]
        %v4987 = vld [vmem:[#allocation2 + $0x100] sm:$0xff]
        %v4988 = vld [vmem:[#allocation2 + $0x108] sm:$0xff]
        %v4989 = vld [vmem:[#allocation2 + $0x110] sm:$0xff]
        %v4990 = vld [vmem:[#allocation2 + $0x118] sm:$0xff]
        %v4991 = vld [vmem:[#allocation2 + $0x120] sm:$0xff]
        %v4992 = vld [vmem:[#allocation2 + $0x128] sm:$0xff]
        %v4993 = vld [vmem:[#allocation2 + $0x130] sm:$0xff]
        %v4994 = vld [vmem:[#allocation2 + $0x138] sm:$0xff]
        %v4995 = vld [vmem:[#allocation2 + $0x140] sm:$0xff]
        %v4996 = vld [vmem:[#allocation2 + $0x148] sm:$0xff]
        %v4997 = vld [vmem:[#allocation2 + $0x150] sm:$0xff]
        %v4998 = vld [vmem:[#allocation2 + $0x158] sm:$0xff]
        %v4999 = vld [vmem:[#allocation2 + $0x160] sm:$0xff]
        %v5000 = vld [vmem:[#allocation2 + $0x168] sm:$0xff]
        %v5001 = vld [vmem:[#allocation2 + $0x170] sm:$0xff]
        %v5002 = vld [vmem:[#allocation2 + $0x178] sm:$0xff]
        %v5003 = vld [vmem:[#allocation2 + $0x180] sm:$0xff]
        %v5004 = vld [vmem:[#allocation2 + $0x188] sm:$0xff]
        %v5005 = vld [vmem:[#allocation2 + $0x190] sm:$0xff]
        %v5006 = vld [vmem:[#allocation2 + $0x198] sm:$0xff]
        %v5007 = vld [vmem:[#allocation2 + $0x1a0] sm:$0xff]
        %v5008 = vld [vmem:[#allocation2 + $0x1a8] sm:$0xff]
        %v5009 = vld [vmem:[#allocation2 + $0x1b0] sm:$0xff]
        %v5010 = vld [vmem:[#allocation2 + $0x1b8] sm:$0xff]
        %v5011 = vld [vmem:[#allocation2 + $0x1c0] sm:$0xff]
        %v5012 = vld [vmem:[#allocation2 + $0x1c8] sm:$0xff]
        %v5013 = vld [vmem:[#allocation2 + $0x1d0] sm:$0xff]
        %v5014 = vld [vmem:[#allocation2 + $0x1d8] sm:$0xff]
        %v5015 = vld [vmem:[#allocation2 + $0x1e0] sm:$0xff]
        %v5016 = vld [vmem:[#allocation2 + $0x1e8] sm:$0xff]
        %v5017 = vld [vmem:[#allocation2 + $0x1f0] sm:$0xff]
        %v5018 = vld [vmem:[#allocation2 + $0x1f8] sm:$0xff]
        %5019 = vmatprep.subr.mxu0 0.0
        %5020 = vmatpush1.xpose.msra.mxu0 %v4955
        %5021 = vmatprep.subr.mxu0 0.0
        %5022 = vmatpush1.xpose.msra.mxu0 %v4956
        %5023 = vmatprep.subr.mxu0 0.0
        %5024 = vmatpush1.xpose.msra.mxu0 %v4957
        %5025 = vmatprep.subr.mxu0 0.0
        %5026 = vmatpush1.xpose.msra.mxu0 %v4958
        %5027 = vmatprep.subr.mxu0 0.0
        %5028 = vmatpush1.xpose.msra.mxu0 %v4959
        %5029 = vmatprep.subr.mxu0 0.0
        %5030 = vmatpush1.xpose.msra.mxu0 %v4960
        %5031 = vmatprep.subr.mxu0 0.0
        %5032 = vmatpush1.xpose.msra.mxu0 %v4961
        %5033 = vmatprep.subr.mxu0 0.0
        %5034 = vmatpush1.xpose.msra.mxu0 %v4962
        %5035 = vmatprep.subr.mxu0 0.0
        %5036 = vmatpush1.xpose.msra.mxu0 %v4963
        %5037 = vmatprep.subr.mxu0 0.0
        %5038 = vmatpush1.xpose.msra.mxu0 %v4964
        %5039 = vmatprep.subr.mxu0 0.0
        %5040 = vmatpush1.xpose.msra.mxu0 %v4965
        %5041 = vmatprep.subr.mxu0 0.0
        %5042 = vmatpush1.xpose.msra.mxu0 %v4966
        %5043 = vmatprep.subr.mxu0 0.0
        %5044 = vmatpush1.xpose.msra.mxu0 %v4967
        %5045 = vmatprep.subr.mxu0 0.0
        %5046 = vmatpush1.xpose.msra.mxu0 %v4968
        %5047 = vmatprep.subr.mxu0 0.0
        %5048 = vmatpush1.xpose.msra.mxu0 %v4969
        %5049 = vmatprep.subr.mxu0 0.0
        %5050 = vmatpush1.xpose.msra.mxu0 %v4970
        %5051 = vmatprep.subr.mxu0 0.0
        %5052 = vmatpush1.xpose.msra.mxu0 %v4971
        %5053 = vmatprep.subr.mxu0 0.0
        %5054 = vmatpush1.xpose.msra.mxu0 %v4972
        %5055 = vmatprep.subr.mxu0 0.0
        %5056 = vmatpush1.xpose.msra.mxu0 %v4973
        %5057 = vmatprep.subr.mxu0 0.0
        %5058 = vmatpush1.xpose.msra.mxu0 %v4974
        %5059 = vmatprep.subr.mxu0 0.0
        %5060 = vmatpush1.xpose.msra.mxu0 %v4975
        %5061 = vmatprep.subr.mxu0 0.0
        %5062 = vmatpush1.xpose.msra.mxu0 %v4976
        %5063 = vmatprep.subr.mxu0 0.0
        %5064 = vmatpush1.xpose.msra.mxu0 %v4977
        %5065 = vmatprep.subr.mxu0 0.0
        %5066 = vmatpush1.xpose.msra.mxu0 %v4978
        %5067 = vmatprep.subr.mxu0 0.0
        %5068 = vmatpush1.xpose.msra.mxu0 %v4979
        %5069 = vmatprep.subr.mxu0 0.0
        %5070 = vmatpush1.xpose.msra.mxu0 %v4980
        %5071 = vmatprep.subr.mxu0 0.0
        %5072 = vmatpush1.xpose.msra.mxu0 %v4981
        %5073 = vmatprep.subr.mxu0 0.0
        %5074 = vmatpush1.xpose.msra.mxu0 %v4982
        %5075 = vmatprep.subr.mxu0 0.0
        %5076 = vmatpush1.xpose.msra.mxu0 %v4983
        %5077 = vmatprep.subr.mxu0 0.0
        %5078 = vmatpush1.xpose.msra.mxu0 %v4984
        %5079 = vmatprep.subr.mxu0 0.0
        %5080 = vmatpush1.xpose.msra.mxu0 %v4985
        %5081 = vmatprep.subr.mxu0 0.0
        %5082 = vmatpush1.xpose.msra.mxu0 %v4986
        %5083 = vmatprep.mubr.f32.mxu0 0.0
        %5084 = vmatmul.mubr.f32.gmra.mrb[0].mxu0 %v4954
        %v5085 = vpop.f32.mrb[0].mxu0
        %v5086 = vadd.f32 0.0, %v5085
        %v5087 = vpop.f32.mrb[0].mxu0
        %v5088 = vadd.f32 0.0, %v5087
        %5089 = vdwg.mxu0
        %5090 = vmatprep.subr.mxu0 0.0
        %5091 = vmatpush1.xpose.msra.mxu0 %v4987
        %5092 = vmatprep.subr.mxu0 0.0
        %5093 = vmatpush1.xpose.msra.mxu0 %v4988
        %5094 = vmatprep.subr.mxu0 0.0
        %5095 = vmatpush1.xpose.msra.mxu0 %v4989
        %5096 = vmatprep.subr.mxu0 0.0
        %5097 = vmatpush1.xpose.msra.mxu0 %v4990
        %5098 = vmatprep.subr.mxu0 0.0
        %5099 = vmatpush1.xpose.msra.mxu0 %v4991
        %5100 = vmatprep.subr.mxu0 0.0
        %5101 = vmatpush1.xpose.msra.mxu0 %v4992
        %5102 = vmatprep.subr.mxu0 0.0
        %5103 = vmatpush1.xpose.msra.mxu0 %v4993
        %5104 = vmatprep.subr.mxu0 0.0
        %5105 = vmatpush1.xpose.msra.mxu0 %v4994
        %5106 = vmatprep.subr.mxu0 0.0
        %5107 = vmatpush1.xpose.msra.mxu0 %v4995
        %5108 = vmatprep.subr.mxu0 0.0
        %5109 = vmatpush1.xpose.msra.mxu0 %v4996
        %5110 = vmatprep.subr.mxu0 0.0
        %5111 = vmatpush1.xpose.msra.mxu0 %v4997
        %5112 = vmatprep.subr.mxu0 0.0
        %5113 = vmatpush1.xpose.msra.mxu0 %v4998
        %5114 = vmatprep.subr.mxu0 0.0
        %5115 = vmatpush1.xpose.msra.mxu0 %v4999
        %5116 = vmatprep.subr.mxu0 0.0
        %5117 = vmatpush1.xpose.msra.mxu0 %v5000
        %5118 = vmatprep.subr.mxu0 0.0
        %5119 = vmatpush1.xpose.msra.mxu0 %v5001
        %5120 = vmatprep.subr.mxu0 0.0
        %5121 = vmatpush1.xpose.msra.mxu0 %v5002
        %5122 = vmatprep.subr.mxu0 0.0
        %5123 = vmatpush1.xpose.msra.mxu0 %v5003
        %5124 = vmatprep.subr.mxu0 0.0
        %5125 = vmatpush1.xpose.msra.mxu0 %v5004
        %5126 = vmatprep.subr.mxu0 0.0
        %5127 = vmatpush1.xpose.msra.mxu0 %v5005
        %5128 = vmatprep.subr.mxu0 0.0
        %5129 = vmatpush1.xpose.msra.mxu0 %v5006
        %5130 = vmatprep.subr.mxu0 0.0
        %5131 = vmatpush1.xpose.msra.mxu0 %v5007
        %5132 = vmatprep.subr.mxu0 0.0
        %5133 = vmatpush1.xpose.msra.mxu0 %v5008
        %5134 = vmatprep.subr.mxu0 0.0
        %5135 = vmatpush1.xpose.msra.mxu0 %v5009
        %5136 = vmatprep.subr.mxu0 0.0
        %5137 = vmatpush1.xpose.msra.mxu0 %v5010
        %5138 = vmatprep.subr.mxu0 0.0
        %5139 = vmatpush1.xpose.msra.mxu0 %v5011
        %5140 = vmatprep.subr.mxu0 0.0
        %5141 = vmatpush1.xpose.msra.mxu0 %v5012
        %5142 = vmatprep.subr.mxu0 0.0
        %5143 = vmatpush1.xpose.msra.mxu0 %v5013
        %5144 = vmatprep.subr.mxu0 0.0
        %5145 = vmatpush1.xpose.msra.mxu0 %v5014
        %5146 = vmatprep.subr.mxu0 0.0
        %5147 = vmatpush1.xpose.msra.mxu0 %v5015
        %5148 = vmatprep.subr.mxu0 0.0
        %5149 = vmatpush1.xpose.msra.mxu0 %v5016
        %5150 = vmatprep.subr.mxu0 0.0
        %5151 = vmatpush1.xpose.msra.mxu0 %v5017
        %5152 = vmatprep.subr.mxu0 0.0
        %5153 = vmatpush1.xpose.msra.mxu0 %v5018
        %5154 = vmatprep.mubr.f32.mxu0 0.0
        %5155 = vmatmul.mubr.f32.gmra.mrb[0].mxu0 %v4954
        %v5156 = vpop.f32.mrb[0].mxu0
        %v5157 = vadd.f32 0.0, %v5156
        %v5158 = vpop.f32.mrb[0].mxu0
        %v5159 = vadd.f32 0.0, %v5158
        %5160 = vdwg.mxu0
        %v5161 = vadd.f32 %v5086, 1e-08
        %v5162 = vadd.f32 %v5088, 1e-08
        %v5163 = vadd.f32 %v5157, 1e-08
        %v5164 = vadd.f32 %v5159, 1e-08
        %v5165 = vlaneseq
        %v5166 = vshrl.u32 %v5165, 7
        %v5167 = vsub.s32 3, %v5166
        %v5168 = vrot.slane %v5161, %v5167
        %v5169 = vlaneseq
        %v5170 = vshrl.u32 %v5169, 7
        %v5171 = vsub.s32 3, %v5170
        %v5172 = vrot.slane %v5162, %v5171
        %v5173 = vlaneseq
        %v5174 = vshrl.u32 %v5173, 7
        %v5175 = vsub.s32 3, %v5174
        %v5176 = vrot.slane %v5163, %v5175
        %v5177 = vlaneseq
        %v5178 = vshrl.u32 %v5177, 7
        %v5179 = vsub.s32 3, %v5178
        %v5180 = vrot.slane %v5164, %v5179
        %v5181 = vrcp.pop %v5168
        %v5182 = vmul.f32 %v5086, %v5181
        %v5183 = vrcp.pop %v5172
        %v5184 = vmul.f32 %v5088, %v5183
        %v5185 = vrcp.pop %v5176
        %v5186 = vmul.f32 %v5157, %v5185
        %v5187 = vrcp.pop %v5180
        %v5188 = vmul.f32 %v5159, %v5187
        %v5193 = vcombine.low %v5182, %v5184
        %v5194 = vcombine.low %v5186, %v5188
        %5197 = vst [vmem:[%s164] sm:$0x77] %v5193
        %5198 = vst [vmem:[%s164 + $0x8] sm:$0x77] %v5194
        %s5199 = sand.u32 %s93, 1
        %s5200 = scalar_lea.sflag [#allocation4], %s5199
        %s5201 = sand.u32 %s93, 1
        %s5202 = smul.addr %s5201, 16
        %s5203 = scalar_lea.vmem [#allocation3], %s5202
        // Predicated region
        $region33: #{tpu_custom_call.1} parent=31 // pred_check
          %p5204 = pneg %p103
        $region34: #{tpu_custom_call.1} parent=31 // pred_check_branch
          %5206 = sbr.rel (%p5204) target = $region36
        $region35: #{tpu_custom_call.1} parent=31 // pred_region
          %s5207 = smul.u32 4, %s17
          %s5209 = ssub.s32 256, 256
          %5210 = vsyncadd %s5200, %s5209
          %s5211 = smul.addr %s5207, 64
          %s5212 = scalar_lea.hbm %s3, %s5211
          %s5214 = sshll.u32 %s5203, 4
          %s5215 = int_to_ptr.vmem [resolvable:$true] %s5214
          %5217 = dma.vmem_to_hbm [thread:$0]  %s5215, 256, %s5212, %s5200
        $region36: #{tpu_custom_call.1} parent=31 // pred_fallthru
          _
      $region32: #{tpu_custom_call.1} parent=5 // pred_fallthru
        _
      %p5218 = scmp.le.s32.totalorder 2, %s12
      // Predicated region
      $region37: #{tpu_custom_call.1} parent=5 // pred_check
        %p5219 = pneg %p5218
      $region38: #{tpu_custom_call.1} parent=5 // pred_check_branch
        %5221 = sbr.rel (%p5219) target = $region40
      $region39: #{tpu_custom_call.1} parent=5 // pred_region
        %s5222 = ssub.s32 %s12, 2
        // Predicated region
        $region41: #{tpu_custom_call.1} parent=39 // pred_check
          %p5223 = pneg %p109
        $region42: #{tpu_custom_call.1} parent=39 // pred_check_branch
          %5225 = sbr.rel (%p5223) target = $region44
        $region43: #{tpu_custom_call.1} parent=39 // pred_region
          %s5226 = sand.u32 %s94, 1
          %s5227 = scalar_lea.sflag [#allocation4], %s5226
          %s5228 = sand.u32 %s94, 1
          %s5229 = smul.addr %s5228, 16
          %s5230 = scalar_lea.vmem [#allocation3], %s5229
          %5231 = dma.done %s5227, 256
        $region44: #{tpu_custom_call.1} parent=39 // pred_fallthru
          _
      $region40: #{tpu_custom_call.1} parent=5 // pred_fallthru
        _
    $region6: #{tpu_custom_call.1} parent=1 // loop_footer
      %s16 = sadd.s32 1, %s12
    $region7: #{tpu_custom_call.1} parent=1 // loop_footer_branch
      %11 = sbr.rel target = $region3
    $region8: #{tpu_custom_call.1} parent=1 // loop_exit
      _
    %5232 = vsyncpa [#allocation4], 1
    %s5233 = scalar_lea.sflag [#allocation4], 1
    %5234 = vsyncpa %s5233, 1

</llo_original>
